<compile_context>
chip_gen: v6e
topology: v6e:2x2x1
jax: 0.10.0
libtpu: 0.0.40
codegen_flags: <defaults>
</compile_context>

<pallas_src>
import functools

import jax
import jax.numpy as jnp
from jax import lax
from jax.experimental import pallas as pl
from jax.experimental.pallas import tpu as pltpu


# ----------------------------------------------------------------------------
# Small static helpers (shape planning, all Python ints)
# ----------------------------------------------------------------------------
def _round_up(x, m):
    return (x + m - 1) // m * m


def _pick_time_chunk(T, target=16):
    """Largest divisor of T that is <= target (so no time padding is needed)."""
    for c in range(min(T, target), 0, -1):
        if T % c == 0:
            return c
    return T


def _pick_batch_tile(B_p):
    """Split the (padded) batch in two when possible so v7x's two TensorCores
    each run an independent slice of the recurrence."""
    if B_p >= 16 and (B_p // 2) % 8 == 0:
        return B_p // 2
    return B_p


# ----------------------------------------------------------------------------
# Pallas kernels
# ----------------------------------------------------------------------------
def _recurrent_chunk(x_ref, wih_ref, whh_ref, b_ref, h_scr, c_scr, gx_scr,
                     emit_h):
    """Run the LSTM recurrence over one (Tc, Bt, D) chunk.

    Grid layout of the callers: axis 0 = batch tiles ("parallel"),
    axis 1 = time chunks ("arbitrary", carries h/c in scratch).
    """
    Tc, Bt, D = x_ref.shape
    H = whh_ref.shape[0]
    G = 4 * H

    # (Re)initialize the carried state at the start of every sequence
    # (i.e. whenever a new batch tile begins).
    @pl.when(pl.program_id(1) == 0)
    def _():
        h_scr[...] = jnp.zeros_like(h_scr)
        c_scr[...] = jnp.zeros_like(c_scr)

    # Hoisted input projection + bias: one sublane/lane-dense GEMM for the
    # whole chunk instead of Tc tiny matmuls on the serial critical path.
    x2 = x_ref[...].reshape(Tc * Bt, D)
    gx = jnp.dot(x2, wih_ref[...], preferred_element_type=jnp.float32) + b_ref[...]
    gx_scr[...] = gx.reshape(Tc, Bt, G)

    whh = whh_ref[...]

    def step(t, carry):
        h, c = carry
        gates = gx_scr[t] + jnp.dot(h, whh, preferred_element_type=jnp.float32)
        # H is padded to a multiple of 128, so these are lane-aligned slices.
        i = jax.nn.sigmoid(gates[:, 0 * H:1 * H])
        f = jax.nn.sigmoid(gates[:, 1 * H:2 * H])
        g = jnp.tanh(gates[:, 2 * H:3 * H])
        o = jax.nn.sigmoid(gates[:, 3 * H:4 * H])
        c_new = f * c + i * g
        h_new = o * jnp.tanh(c_new)
        emit_h(t, h_new)
        return h_new, c_new

    h_fin, c_fin = lax.fori_loop(0, Tc, step, (h_scr[...], c_scr[...]),
                                 unroll=True)
    h_scr[...] = h_fin
    c_scr[...] = c_fin


def _lstm_seq_kernel(x_ref, wih_ref, whh_ref, b_ref, out_ref,
                     h_scr, c_scr, gx_scr):
    """LSTM layer that emits the full hidden sequence (feeds the next layer)."""
    def emit(t, h_new):
        out_ref[t] = h_new

    _recurrent_chunk(x_ref, wih_ref, whh_ref, b_ref, h_scr, c_scr, gx_scr, emit)


def _lstm_top_fc_kernel(x_ref, wih_ref, whh_ref, b_ref, fcw_ref, fcb_ref,
                        out_ref, h_scr, c_scr, gx_scr):
    """Top LSTM layer fused with the fc head: never materializes (T,B,H) in HBM,
    writes logits = h_{T-1} @ W_fc + b_fc only at the last time chunk."""
    _recurrent_chunk(x_ref, wih_ref, whh_ref, b_ref, h_scr, c_scr, gx_scr,
                     lambda t, h_new: None)

    @pl.when(pl.program_id(1) == pl.num_programs(1) - 1)
    def _():
        out_ref[...] = (
            jnp.dot(h_scr[...], fcw_ref[...], preferred_element_type=jnp.float32)
            + fcb_ref[...]
        )


# ----------------------------------------------------------------------------
# pallas_call wrappers
# ----------------------------------------------------------------------------
def _run_lstm_seq_layer(x, wih, whh, bias, *, t_chunk, b_tile):
    T, B_p, D_p = x.shape
    H_p = whh.shape[0]
    G = 4 * H_p
    grid = (B_p // b_tile, T // t_chunk)
    return pl.pallas_call(
        _lstm_seq_kernel,
        out_shape=jax.ShapeDtypeStruct((T, B_p, H_p), jnp.float32),
        grid_spec=pltpu.PrefetchScalarGridSpec(
            num_scalar_prefetch=0,
            grid=grid,
            in_specs=[
                pl.BlockSpec((t_chunk, b_tile, D_p), lambda b, t: (t, b, 0)),
                pl.BlockSpec((D_p, G), lambda b, t: (0, 0)),   # resident weights
                pl.BlockSpec((H_p, G), lambda b, t: (0, 0)),
                pl.BlockSpec((1, G), lambda b, t: (0, 0)),
            ],
            out_specs=pl.BlockSpec((t_chunk, b_tile, H_p), lambda b, t: (t, b, 0)),
            scratch_shapes=[
                pltpu.VMEM((b_tile, H_p), jnp.float32),          # h carry
                pltpu.VMEM((b_tile, H_p), jnp.float32),          # c carry
                pltpu.VMEM((t_chunk, b_tile, G), jnp.float32),   # gates_x chunk
            ],
        ),
        compiler_params=pltpu.CompilerParams(
            dimension_semantics=("parallel", "arbitrary")),
    )(x, wih, whh, bias)


def _run_lstm_top_fc_layer(x, wih, whh, bias, fcw, fcb, *, t_chunk, b_tile):
    T, B_p, D_p = x.shape
    H_p = whh.shape[0]
    G = 4 * H_p
    L_p = fcw.shape[1]
    grid = (B_p // b_tile, T // t_chunk)
    return pl.pallas_call(
        _lstm_top_fc_kernel,
        out_shape=jax.ShapeDtypeStruct((B_p, L_p), jnp.float32),
        grid_spec=pltpu.PrefetchScalarGridSpec(
            num_scalar_prefetch=0,
            grid=grid,
            in_specs=[
                pl.BlockSpec((t_chunk, b_tile, D_p), lambda b, t: (t, b, 0)),
                pl.BlockSpec((D_p, G), lambda b, t: (0, 0)),
                pl.BlockSpec((H_p, G), lambda b, t: (0, 0)),
                pl.BlockSpec((1, G), lambda b, t: (0, 0)),
                pl.BlockSpec((H_p, L_p), lambda b, t: (0, 0)),
                pl.BlockSpec((1, L_p), lambda b, t: (0, 0)),
            ],
            out_specs=pl.BlockSpec((b_tile, L_p), lambda b, t: (b, 0)),
            scratch_shapes=[
                pltpu.VMEM((b_tile, H_p), jnp.float32),
                pltpu.VMEM((b_tile, H_p), jnp.float32),
                pltpu.VMEM((t_chunk, b_tile, G), jnp.float32),
            ],
        ),
        compiler_params=pltpu.CompilerParams(
            dimension_semantics=("parallel", "arbitrary")),
    )(x, wih, whh, bias, fcw, fcb)


# ----------------------------------------------------------------------------
# Parameters: PyTorch-style init, then pack into padded kernel layout
# ----------------------------------------------------------------------------
def init_params(key, vocab_num, word_dim, num_hiddens, num_layers, labels_num):
    params = {}
    k_emb, key = jax.random.split(key)
    # nn.Embedding default init: N(0, 1)
    params["embedding"] = jax.random.normal(
        k_emb, (vocab_num, word_dim), jnp.float32)

    # nn.LSTM default init: U(-1/sqrt(H), 1/sqrt(H)) for all weights/biases.
    bound = 1.0 / jnp.sqrt(jnp.float32(num_hiddens))
    layers = []
    for layer in range(num_layers):
        in_dim = word_dim if layer == 0 else num_hiddens
        k1, k2, k3, k4, key = jax.random.split(key, 5)
        layers.append({
            "w_ih": jax.random.uniform(
                k1, (4 * num_hiddens, in_dim), jnp.float32, -bound, bound),
            "w_hh": jax.random.uniform(
                k2, (4 * num_hiddens, num_hiddens), jnp.float32, -bound, bound),
            "b_ih": jax.random.uniform(
                k3, (4 * num_hiddens,), jnp.float32, -bound, bound),
            "b_hh": jax.random.uniform(
                k4, (4 * num_hiddens,), jnp.float32, -bound, bound),
        })
    params["lstm"] = layers

    # nn.Linear default init: U(-1/sqrt(fan_in), 1/sqrt(fan_in))
    k_w, k_b, key = jax.random.split(key, 3)
    fc_bound = 1.0 / jnp.sqrt(jnp.float32(num_hiddens))
    params["fc_w"] = jax.random.uniform(
        k_w, (labels_num, num_hiddens), jnp.float32, -fc_bound, fc_bound)
    params["fc_b"] = jax.random.uniform(
        k_b, (labels_num,), jnp.float32, -fc_bound, fc_bound)
    return params


def _pad_gate_cols(w_t, H, H_p):
    """(rows, 4H) in (i,f,g,o) order -> (rows, 4*H_p); each gate padded to H_p
    columns so gate slices inside the kernel are lane-aligned."""
    rows = w_t.shape[0]
    out = jnp.zeros((rows, 4 * H_p), jnp.float32)
    for k in range(4):
        out = out.at[:, k * H_p:k * H_p + H].set(w_t[:, k * H:(k + 1) * H])
    return out


def pack_params(params, word_dim, num_hiddens, labels_num):
    """Transpose + zero-pad all weights into the lane/sublane-aligned layout the
    kernels expect.  Zero padding is inert: padded hidden units stay exactly 0."""
    H = num_hiddens
    H_p = _round_up(H, 128)
    D_p = _round_up(word_dim, 128)
    L_p = _round_up(labels_num, 128)

    packed = {}
    emb = params["embedding"]
    packed["embedding"] = (
        jnp.zeros((emb.shape[0], D_p), jnp.float32).at[:, :word_dim].set(emb))

    layers = []
    for li, lp in enumerate(params["lstm"]):
        in_dim = word_dim if li == 0 else H
        in_dim_p = D_p if li == 0 else H_p
        wih_g = _pad_gate_cols(lp["w_ih"].T, H, H_p)          # (in_dim, 4H_p)
        whh_g = _pad_gate_cols(lp["w_hh"].T, H, H_p)          # (H, 4H_p)
        bias_g = _pad_gate_cols(
            (lp["b_ih"] + lp["b_hh"]).reshape(1, -1), H, H_p)  # (1, 4H_p)
        layers.append({
            "w_ih": jnp.zeros((in_dim_p, 4 * H_p), jnp.float32)
                    .at[:in_dim, :].set(wih_g),
            "w_hh": jnp.zeros((H_p, 4 * H_p), jnp.float32)
                    .at[:H, :].set(whh_g),
            "bias": bias_g,
        })
    packed["lstm"] = layers

    packed["fc_w"] = (jnp.zeros((H_p, L_p), jnp.float32)
                      .at[:H, :labels_num].set(params["fc_w"].T))
    packed["fc_b"] = (jnp.zeros((1, L_p), jnp.float32)
                      .at[0, :labels_num].set(params["fc_b"]))
    return packed


# ----------------------------------------------------------------------------
# Forward pass
# ----------------------------------------------------------------------------
@functools.partial(jax.jit, static_argnames=("labels_num",))
def baseline_lstm_forward(packed, token_ids, *, labels_num):
    """token_ids: int32 [batch, seq]  ->  logits [batch, labels_num]."""
    # X.permute(1, 0): [batch, seq] -> [seq, batch]
    ids_tb = token_ids.T
    T, B = ids_tb.shape

    # Embedding lookup (gather) -- plain JAX glue; embedding table is
    # pre-padded to D_p columns.  Dropout(0.5) is identity in eval mode.
    x = packed["embedding"][ids_tb]                    # (T, B, D_p)

    # Pad batch to a sublane multiple; padded rows are zeros and never mix
    # with real rows (batch is independent), we slice them off at the end.
    B_p = max(8, _round_up(B, 8))
    if B_p != B:
        x = jnp.pad(x, ((0, 0), (0, B_p - B), (0, 0)))

    t_chunk = _pick_time_chunk(T)
    b_tile = _pick_batch_tile(B_p)

    layers = packed["lstm"]
    # All but the top layer emit the full hidden sequence (input to next layer).
    for lp in layers[:-1]:
        x = _run_lstm_seq_layer(x, lp["w_ih"], lp["w_hh"], lp["bias"],
                                t_chunk=t_chunk, b_tile=b_tile)
        # inter-layer dropout (p=0.3): identity in eval mode.

    # Top layer fused with the fc head (head_tail=False, bid=False => outputs[-1]).
    top = layers[-1]
    logits_p = _run_lstm_top_fc_layer(
        x, top["w_ih"], top["w_hh"], top["bias"],
        packed["fc_w"], packed["fc_b"],
        t_chunk=t_chunk, b_tile=b_tile)

    return logits_p[:B, :labels_num]


# ----------------------------------------------------------------------------
# Demo
# ----------------------------------------------------------------------------
if __name__ == "__main__":
    BATCH = 2
    SEQ = 8
    WORD_DIM = 32
    NUM_HIDDENS = 32
    NUM_LAYERS = 2
    VOCAB_NUM = 100
    LABELS_NUM = 4

    key = jax.random.PRNGKey(0)
    k_params, k_ids = jax.random.split(key)

    params = init_params(
        k_params, VOCAB_NUM, WORD_DIM, NUM_HIDDENS, NUM_LAYERS, LABELS_NUM)
    packed = pack_params(params, WORD_DIM, NUM_HIDDENS, LABELS_NUM)

    token_ids = jax.random.randint(
        k_ids, (BATCH, SEQ), minval=0, maxval=VOCAB_NUM, dtype=jnp.int32)

    logits = baseline_lstm_forward(packed, token_ids, labels_num=LABELS_NUM)
    jax.block_until_ready(logits)

    assert logits.shape == (BATCH, LABELS_NUM)
    assert logits.dtype == jnp.float32
    assert bool(jnp.all(jnp.isfinite(logits)))
    print("KERNEL_OK")
</pallas_src>

<mosaic_0001>
module attributes {stable_mosaic.version = 11 : i64} {
  func.func @_lstm_top_fc_kernel(%arg0: i32, %arg1: i32, %arg2: memref<8x8x128xf32, #tpu.memory_space<vmem>>, %arg3: memref<128x512xf32, #tpu.memory_space<vmem>>, %arg4: memref<128x512xf32, #tpu.memory_space<vmem>>, %arg5: memref<1x512xf32, #tpu.memory_space<vmem>>, %arg6: memref<128x128xf32, #tpu.memory_space<vmem>>, %arg7: memref<1x128xf32, #tpu.memory_space<vmem>>, %arg8: memref<8x128xf32, #tpu.memory_space<vmem>>, %arg9: memref<8x128xf32, #tpu.memory_space<vmem>>, %arg10: memref<8x128xf32, #tpu.memory_space<vmem>>, %arg11: memref<8x8x512xf32, #tpu.memory_space<vmem>>) attributes {dimension_semantics = [#tpu.dimension_semantics<parallel>, #tpu.dimension_semantics<arbitrary>], iteration_bounds = array<i64: 1, 1>, scalar_prefetch = 0 : i64, scratch_operands = 3 : i64, tpu.core_type = #tpu.core_type<tc>, window_params = [{transform_indices = @transform_0, window_bounds = array<i64: 8, 8, 128>}, {pipeline_mode = #tpu.pipeline_mode<synchronous>, transform_indices = @transform_1, window_bounds = array<i64: 128, 512>}, {pipeline_mode = #tpu.pipeline_mode<synchronous>, transform_indices = @transform_2, window_bounds = array<i64: 128, 512>}, {pipeline_mode = #tpu.pipeline_mode<synchronous>, transform_indices = @transform_3, window_bounds = array<i64: 1, 512>}, {pipeline_mode = #tpu.pipeline_mode<synchronous>, transform_indices = @transform_4, window_bounds = array<i64: 128, 128>}, {pipeline_mode = #tpu.pipeline_mode<synchronous>, transform_indices = @transform_5, window_bounds = array<i64: 1, 128>}, {transform_indices = @transform_6, window_bounds = array<i64: 8, 128>}]} {
    %c0_i32 = arith.constant 0 : i32
    %0 = arith.cmpi eq, %arg1, %c0_i32 : i32
    %1 = arith.extui %0 : i1 to i32
    %c0_i32_0 = arith.constant 0 : i32
    %2 = arith.cmpi ne, %1, %c0_i32_0 : i32
    scf.if %2 {
      %cst_71 = arith.constant 0.000000e+00 : f32
      %260 = vector.broadcast %cst_71 : f32 to vector<8x128xf32>
      %c0_72 = arith.constant 0 : index
      %c0_73 = arith.constant 0 : index
      %261 = vector.load %arg9[%c0_72, %c0_73] : memref<8x128xf32, #tpu.memory_space<vmem>>, vector<8x128xf32>
      tpu.vector_store %arg9[%c0_72, %c0_73], %260 {strides = array<i32>} : memref<8x128xf32, #tpu.memory_space<vmem>>, vector<8x128xf32>,
      %cst_74 = arith.constant 0.000000e+00 : f32
      %262 = vector.broadcast %cst_74 : f32 to vector<8x128xf32>
      %c0_75 = arith.constant 0 : index
      %c0_76 = arith.constant 0 : index
      %263 = vector.load %arg10[%c0_75, %c0_76] : memref<8x128xf32, #tpu.memory_space<vmem>>, vector<8x128xf32>
      tpu.vector_store %arg10[%c0_75, %c0_76], %262 {strides = array<i32>} : memref<8x128xf32, #tpu.memory_space<vmem>>, vector<8x128xf32>,
    } else {
    }
    %c0 = arith.constant 0 : index
    %c0_1 = arith.constant 0 : index
    %c0_2 = arith.constant 0 : index
    %3 = vector.load %arg2[%c0, %c0_1, %c0_2] : memref<8x8x128xf32, #tpu.memory_space<vmem>>, vector<8x8x128xf32>
    %4 = vector.shape_cast %3 : vector<8x8x128xf32> to vector<64x128xf32>
    %c0_3 = arith.constant 0 : index
    %c0_4 = arith.constant 0 : index
    %5 = vector.load %arg3[%c0_3, %c0_4] : memref<128x512xf32, #tpu.memory_space<vmem>>, vector<128x512xf32>
    %cst = arith.constant dense<0.000000e+00> : vector<64x512xf32>
    %6 = tpu.matmul %4, %5, %cst {dimension_numbers = #tpu.dot_dimension_numbers<[1], [0], [0], [1], [0, 0, 1, 1], [], []>} : vector<64x128xf32>, vector<128x512xf32>, vector<64x512xf32> -> vector<64x512xf32>
    %c0_5 = arith.constant 0 : index
    %c0_6 = arith.constant 0 : index
    %7 = vector.load %arg5[%c0_5, %c0_6] : memref<1x512xf32, #tpu.memory_space<vmem>>, vector<1x512xf32>
    %8 = vector.broadcast %7 : vector<1x512xf32> to vector<64x512xf32>
    %9 = arith.addf %6, %8 : vector<64x512xf32>
    %10 = vector.shape_cast %9 : vector<64x512xf32> to vector<8x8x512xf32>
    %c0_7 = arith.constant 0 : index
    %c0_8 = arith.constant 0 : index
    %c0_9 = arith.constant 0 : index
    %11 = vector.load %arg11[%c0_7, %c0_8, %c0_9] : memref<8x8x512xf32, #tpu.memory_space<vmem>>, vector<8x8x512xf32>
    tpu.vector_store %arg11[%c0_7, %c0_8, %c0_9], %10 {strides = array<i32>} : memref<8x8x512xf32, #tpu.memory_space<vmem>>, vector<8x8x512xf32>,
    %c0_10 = arith.constant 0 : index
    %c0_11 = arith.constant 0 : index
    %12 = vector.load %arg4[%c0_10, %c0_11] : memref<128x512xf32, #tpu.memory_space<vmem>>, vector<128x512xf32>
    %c0_12 = arith.constant 0 : index
    %c0_13 = arith.constant 0 : index
    %13 = vector.load %arg9[%c0_12, %c0_13] : memref<8x128xf32, #tpu.memory_space<vmem>>, vector<8x128xf32>
    %c0_14 = arith.constant 0 : index
    %c0_15 = arith.constant 0 : index
    %14 = vector.load %arg10[%c0_14, %c0_15] : memref<8x128xf32, #tpu.memory_space<vmem>>, vector<8x128xf32>
    %c0_i32_16 = arith.constant 0 : i32
    %15 = arith.index_cast %c0_i32_16 : i32 to index
    %c0_17 = arith.constant 0 : index
    %c0_18 = arith.constant 0 : index
    %16 = vector.load %arg11[%15, %c0_17, %c0_18] : memref<8x8x512xf32, #tpu.memory_space<vmem>>, vector<1x8x512xf32>
    %17 = vector.shape_cast %16 : vector<1x8x512xf32> to vector<8x512xf32>
    %cst_19 = arith.constant dense<0.000000e+00> : vector<8x512xf32>
    %18 = tpu.matmul %13, %12, %cst_19 {dimension_numbers = #tpu.dot_dimension_numbers<[1], [0], [0], [1], [0, 0, 1, 1], [], []>} : vector<8x128xf32>, vector<128x512xf32>, vector<8x512xf32> -> vector<8x512xf32>
    %19 = arith.addf %17, %18 : vector<8x512xf32>
    %20 = vector.extract_strided_slice %19 {offsets = [0, 0], sizes = [8, 128], strides = [1, 1]} : vector<8x512xf32> to vector<8x128xf32>
    %21 = arith.negf %20 : vector<8x128xf32>
    %22 = math.exp %21 : vector<8x128xf32>
    %cst_20 = arith.constant 1.000000e+00 : f32
    %23 = vector.broadcast %cst_20 : f32 to vector<8x128xf32>
    %24 = arith.addf %23, %22 : vector<8x128xf32>
    %25 = arith.divf %23, %24 : vector<8x128xf32>
    %26 = vector.extract_strided_slice %19 {offsets = [0, 128], sizes = [8, 128], strides = [1, 1]} : vector<8x512xf32> to vector<8x128xf32>
    %27 = arith.negf %26 : vector<8x128xf32>
    %28 = math.exp %27 : vector<8x128xf32>
    %cst_21 = arith.constant 1.000000e+00 : f32
    %29 = vector.broadcast %cst_21 : f32 to vector<8x128xf32>
    %30 = arith.addf %29, %28 : vector<8x128xf32>
    %31 = arith.divf %29, %30 : vector<8x128xf32>
    %32 = vector.extract_strided_slice %19 {offsets = [0, 256], sizes = [8, 128], strides = [1, 1]} : vector<8x512xf32> to vector<8x128xf32>
    %33 = math.tanh %32 : vector<8x128xf32>
    %34 = vector.extract_strided_slice %19 {offsets = [0, 384], sizes = [8, 128], strides = [1, 1]} : vector<8x512xf32> to vector<8x128xf32>
    %35 = arith.negf %34 : vector<8x128xf32>
    %36 = math.exp %35 : vector<8x128xf32>
    %cst_22 = arith.constant 1.000000e+00 : f32
    %37 = vector.broadcast %cst_22 : f32 to vector<8x128xf32>
    %38 = arith.addf %37, %36 : vector<8x128xf32>
    %39 = arith.divf %37, %38 : vector<8x128xf32>
    %40 = arith.mulf %31, %14 : vector<8x128xf32>
    %41 = arith.mulf %25, %33 : vector<8x128xf32>
    %42 = arith.addf %40, %41 : vector<8x128xf32>
    %43 = math.tanh %42 : vector<8x128xf32>
    %44 = arith.mulf %39, %43 : vector<8x128xf32>
    %c1_i32 = arith.constant 1 : i32
    %45 = arith.index_cast %c1_i32 : i32 to index
    %c0_23 = arith.constant 0 : index
    %c0_24 = arith.constant 0 : index
    %46 = vector.load %arg11[%45, %c0_23, %c0_24] : memref<8x8x512xf32, #tpu.memory_space<vmem>>, vector<1x8x512xf32>
    %47 = vector.shape_cast %46 : vector<1x8x512xf32> to vector<8x512xf32>
    %cst_25 = arith.constant dense<0.000000e+00> : vector<8x512xf32>
    %48 = tpu.matmul %44, %12, %cst_25 {dimension_numbers = #tpu.dot_dimension_numbers<[1], [0], [0], [1], [0, 0, 1, 1], [], []>} : vector<8x128xf32>, vector<128x512xf32>, vector<8x512xf32> -> vector<8x512xf32>
    %49 = arith.addf %47, %48 : vector<8x512xf32>
    %50 = vector.extract_strided_slice %49 {offsets = [0, 0], sizes = [8, 128], strides = [1, 1]} : vector<8x512xf32> to vector<8x128xf32>
    %51 = arith.negf %50 : vector<8x128xf32>
    %52 = math.exp %51 : vector<8x128xf32>
    %cst_26 = arith.constant 1.000000e+00 : f32
    %53 = vector.broadcast %cst_26 : f32 to vector<8x128xf32>
    %54 = arith.addf %53, %52 : vector<8x128xf32>
    %55 = arith.divf %53, %54 : vector<8x128xf32>
    %56 = vector.extract_strided_slice %49 {offsets = [0, 128], sizes = [8, 128], strides = [1, 1]} : vector<8x512xf32> to vector<8x128xf32>
    %57 = arith.negf %56 : vector<8x128xf32>
    %58 = math.exp %57 : vector<8x128xf32>
    %cst_27 = arith.constant 1.000000e+00 : f32
    %59 = vector.broadcast %cst_27 : f32 to vector<8x128xf32>
    %60 = arith.addf %59, %58 : vector<8x128xf32>
    %61 = arith.divf %59, %60 : vector<8x128xf32>
    %62 = vector.extract_strided_slice %49 {offsets = [0, 256], sizes = [8, 128], strides = [1, 1]} : vector<8x512xf32> to vector<8x128xf32>
    %63 = math.tanh %62 : vector<8x128xf32>
    %64 = vector.extract_strided_slice %49 {offsets = [0, 384], sizes = [8, 128], strides = [1, 1]} : vector<8x512xf32> to vector<8x128xf32>
    %65 = arith.negf %64 : vector<8x128xf32>
    %66 = math.exp %65 : vector<8x128xf32>
    %cst_28 = arith.constant 1.000000e+00 : f32
    %67 = vector.broadcast %cst_28 : f32 to vector<8x128xf32>
    %68 = arith.addf %67, %66 : vector<8x128xf32>
    %69 = arith.divf %67, %68 : vector<8x128xf32>
    %70 = arith.mulf %61, %42 : vector<8x128xf32>
    %71 = arith.mulf %55, %63 : vector<8x128xf32>
    %72 = arith.addf %70, %71 : vector<8x128xf32>
    %73 = math.tanh %72 : vector<8x128xf32>
    %74 = arith.mulf %69, %73 : vector<8x128xf32>
    %c2_i32 = arith.constant 2 : i32
    %75 = arith.index_cast %c2_i32 : i32 to index
    %c0_29 = arith.constant 0 : index
    %c0_30 = arith.constant 0 : index
    %76 = vector.load %arg11[%75, %c0_29, %c0_30] : memref<8x8x512xf32, #tpu.memory_space<vmem>>, vector<1x8x512xf32>
    %77 = vector.shape_cast %76 : vector<1x8x512xf32> to vector<8x512xf32>
    %cst_31 = arith.constant dense<0.000000e+00> : vector<8x512xf32>
    %78 = tpu.matmul %74, %12, %cst_31 {dimension_numbers = #tpu.dot_dimension_numbers<[1], [0], [0], [1], [0, 0, 1, 1], [], []>} : vector<8x128xf32>, vector<128x512xf32>, vector<8x512xf32> -> vector<8x512xf32>
    %79 = arith.addf %77, %78 : vector<8x512xf32>
    %80 = vector.extract_strided_slice %79 {offsets = [0, 0], sizes = [8, 128], strides = [1, 1]} : vector<8x512xf32> to vector<8x128xf32>
    %81 = arith.negf %80 : vector<8x128xf32>
    %82 = math.exp %81 : vector<8x128xf32>
    %cst_32 = arith.constant 1.000000e+00 : f32
    %83 = vector.broadcast %cst_32 : f32 to vector<8x128xf32>
    %84 = arith.addf %83, %82 : vector<8x128xf32>
    %85 = arith.divf %83, %84 : vector<8x128xf32>
    %86 = vector.extract_strided_slice %79 {offsets = [0, 128], sizes = [8, 128], strides = [1, 1]} : vector<8x512xf32> to vector<8x128xf32>
    %87 = arith.negf %86 : vector<8x128xf32>
    %88 = math.exp %87 : vector<8x128xf32>
    %cst_33 = arith.constant 1.000000e+00 : f32
    %89 = vector.broadcast %cst_33 : f32 to vector<8x128xf32>
    %90 = arith.addf %89, %88 : vector<8x128xf32>
    %91 = arith.divf %89, %90 : vector<8x128xf32>
    %92 = vector.extract_strided_slice %79 {offsets = [0, 256], sizes = [8, 128], strides = [1, 1]} : vector<8x512xf32> to vector<8x128xf32>
    %93 = math.tanh %92 : vector<8x128xf32>
    %94 = vector.extract_strided_slice %79 {offsets = [0, 384], sizes = [8, 128], strides = [1, 1]} : vector<8x512xf32> to vector<8x128xf32>
    %95 = arith.negf %94 : vector<8x128xf32>
    %96 = math.exp %95 : vector<8x128xf32>
    %cst_34 = arith.constant 1.000000e+00 : f32
    %97 = vector.broadcast %cst_34 : f32 to vector<8x128xf32>
    %98 = arith.addf %97, %96 : vector<8x128xf32>
    %99 = arith.divf %97, %98 : vector<8x128xf32>
    %100 = arith.mulf %91, %72 : vector<8x128xf32>
    %101 = arith.mulf %85, %93 : vector<8x128xf32>
    %102 = arith.addf %100, %101 : vector<8x128xf32>
    %103 = math.tanh %102 : vector<8x128xf32>
    %104 = arith.mulf %99, %103 : vector<8x128xf32>
    %c3_i32 = arith.constant 3 : i32
    %105 = arith.index_cast %c3_i32 : i32 to index
    %c0_35 = arith.constant 0 : index
    %c0_36 = arith.constant 0 : index
    %106 = vector.load %arg11[%105, %c0_35, %c0_36] : memref<8x8x512xf32, #tpu.memory_space<vmem>>, vector<1x8x512xf32>
    %107 = vector.shape_cast %106 : vector<1x8x512xf32> to vector<8x512xf32>
    %cst_37 = arith.constant dense<0.000000e+00> : vector<8x512xf32>
    %108 = tpu.matmul %104, %12, %cst_37 {dimension_numbers = #tpu.dot_dimension_numbers<[1], [0], [0], [1], [0, 0, 1, 1], [], []>} : vector<8x128xf32>, vector<128x512xf32>, vector<8x512xf32> -> vector<8x512xf32>
    %109 = arith.addf %107, %108 : vector<8x512xf32>
    %110 = vector.extract_strided_slice %109 {offsets = [0, 0], sizes = [8, 128], strides = [1, 1]} : vector<8x512xf32> to vector<8x128xf32>
    %111 = arith.negf %110 : vector<8x128xf32>
    %112 = math.exp %111 : vector<8x128xf32>
    %cst_38 = arith.constant 1.000000e+00 : f32
    %113 = vector.broadcast %cst_38 : f32 to vector<8x128xf32>
    %114 = arith.addf %113, %112 : vector<8x128xf32>
    %115 = arith.divf %113, %114 : vector<8x128xf32>
    %116 = vector.extract_strided_slice %109 {offsets = [0, 128], sizes = [8, 128], strides = [1, 1]} : vector<8x512xf32> to vector<8x128xf32>
    %117 = arith.negf %116 : vector<8x128xf32>
    %118 = math.exp %117 : vector<8x128xf32>
    %cst_39 = arith.constant 1.000000e+00 : f32
    %119 = vector.broadcast %cst_39 : f32 to vector<8x128xf32>
    %120 = arith.addf %119, %118 : vector<8x128xf32>
    %121 = arith.divf %119, %120 : vector<8x128xf32>
    %122 = vector.extract_strided_slice %109 {offsets = [0, 256], sizes = [8, 128], strides = [1, 1]} : vector<8x512xf32> to vector<8x128xf32>
    %123 = math.tanh %122 : vector<8x128xf32>
    %124 = vector.extract_strided_slice %109 {offsets = [0, 384], sizes = [8, 128], strides = [1, 1]} : vector<8x512xf32> to vector<8x128xf32>
    %125 = arith.negf %124 : vector<8x128xf32>
    %126 = math.exp %125 : vector<8x128xf32>
    %cst_40 = arith.constant 1.000000e+00 : f32
    %127 = vector.broadcast %cst_40 : f32 to vector<8x128xf32>
    %128 = arith.addf %127, %126 : vector<8x128xf32>
    %129 = arith.divf %127, %128 : vector<8x128xf32>
    %130 = arith.mulf %121, %102 : vector<8x128xf32>
    %131 = arith.mulf %115, %123 : vector<8x128xf32>
    %132 = arith.addf %130, %131 : vector<8x128xf32>
    %133 = math.tanh %132 : vector<8x128xf32>
    %134 = arith.mulf %129, %133 : vector<8x128xf32>
    %c4_i32 = arith.constant 4 : i32
    %135 = arith.index_cast %c4_i32 : i32 to index
    %c0_41 = arith.constant 0 : index
    %c0_42 = arith.constant 0 : index
    %136 = vector.load %arg11[%135, %c0_41, %c0_42] : memref<8x8x512xf32, #tpu.memory_space<vmem>>, vector<1x8x512xf32>
    %137 = vector.shape_cast %136 : vector<1x8x512xf32> to vector<8x512xf32>
    %cst_43 = arith.constant dense<0.000000e+00> : vector<8x512xf32>
    %138 = tpu.matmul %134, %12, %cst_43 {dimension_numbers = #tpu.dot_dimension_numbers<[1], [0], [0], [1], [0, 0, 1, 1], [], []>} : vector<8x128xf32>, vector<128x512xf32>, vector<8x512xf32> -> vector<8x512xf32>
    %139 = arith.addf %137, %138 : vector<8x512xf32>
    %140 = vector.extract_strided_slice %139 {offsets = [0, 0], sizes = [8, 128], strides = [1, 1]} : vector<8x512xf32> to vector<8x128xf32>
    %141 = arith.negf %140 : vector<8x128xf32>
    %142 = math.exp %141 : vector<8x128xf32>
    %cst_44 = arith.constant 1.000000e+00 : f32
    %143 = vector.broadcast %cst_44 : f32 to vector<8x128xf32>
    %144 = arith.addf %143, %142 : vector<8x128xf32>
    %145 = arith.divf %143, %144 : vector<8x128xf32>
    %146 = vector.extract_strided_slice %139 {offsets = [0, 128], sizes = [8, 128], strides = [1, 1]} : vector<8x512xf32> to vector<8x128xf32>
    %147 = arith.negf %146 : vector<8x128xf32>
    %148 = math.exp %147 : vector<8x128xf32>
    %cst_45 = arith.constant 1.000000e+00 : f32
    %149 = vector.broadcast %cst_45 : f32 to vector<8x128xf32>
    %150 = arith.addf %149, %148 : vector<8x128xf32>
    %151 = arith.divf %149, %150 : vector<8x128xf32>
    %152 = vector.extract_strided_slice %139 {offsets = [0, 256], sizes = [8, 128], strides = [1, 1]} : vector<8x512xf32> to vector<8x128xf32>
    %153 = math.tanh %152 : vector<8x128xf32>
    %154 = vector.extract_strided_slice %139 {offsets = [0, 384], sizes = [8, 128], strides = [1, 1]} : vector<8x512xf32> to vector<8x128xf32>
    %155 = arith.negf %154 : vector<8x128xf32>
    %156 = math.exp %155 : vector<8x128xf32>
    %cst_46 = arith.constant 1.000000e+00 : f32
    %157 = vector.broadcast %cst_46 : f32 to vector<8x128xf32>
    %158 = arith.addf %157, %156 : vector<8x128xf32>
    %159 = arith.divf %157, %158 : vector<8x128xf32>
    %160 = arith.mulf %151, %132 : vector<8x128xf32>
    %161 = arith.mulf %145, %153 : vector<8x128xf32>
    %162 = arith.addf %160, %161 : vector<8x128xf32>
    %163 = math.tanh %162 : vector<8x128xf32>
    %164 = arith.mulf %159, %163 : vector<8x128xf32>
    %c5_i32 = arith.constant 5 : i32
    %165 = arith.index_cast %c5_i32 : i32 to index
    %c0_47 = arith.constant 0 : index
    %c0_48 = arith.constant 0 : index
    %166 = vector.load %arg11[%165, %c0_47, %c0_48] : memref<8x8x512xf32, #tpu.memory_space<vmem>>, vector<1x8x512xf32>
    %167 = vector.shape_cast %166 : vector<1x8x512xf32> to vector<8x512xf32>
    %cst_49 = arith.constant dense<0.000000e+00> : vector<8x512xf32>
    %168 = tpu.matmul %164, %12, %cst_49 {dimension_numbers = #tpu.dot_dimension_numbers<[1], [0], [0], [1], [0, 0, 1, 1], [], []>} : vector<8x128xf32>, vector<128x512xf32>, vector<8x512xf32> -> vector<8x512xf32>
    %169 = arith.addf %167, %168 : vector<8x512xf32>
    %170 = vector.extract_strided_slice %169 {offsets = [0, 0], sizes = [8, 128], strides = [1, 1]} : vector<8x512xf32> to vector<8x128xf32>
    %171 = arith.negf %170 : vector<8x128xf32>
    %172 = math.exp %171 : vector<8x128xf32>
    %cst_50 = arith.constant 1.000000e+00 : f32
    %173 = vector.broadcast %cst_50 : f32 to vector<8x128xf32>
    %174 = arith.addf %173, %172 : vector<8x128xf32>
    %175 = arith.divf %173, %174 : vector<8x128xf32>
    %176 = vector.extract_strided_slice %169 {offsets = [0, 128], sizes = [8, 128], strides = [1, 1]} : vector<8x512xf32> to vector<8x128xf32>
    %177 = arith.negf %176 : vector<8x128xf32>
    %178 = math.exp %177 : vector<8x128xf32>
    %cst_51 = arith.constant 1.000000e+00 : f32
    %179 = vector.broadcast %cst_51 : f32 to vector<8x128xf32>
    %180 = arith.addf %179, %178 : vector<8x128xf32>
    %181 = arith.divf %179, %180 : vector<8x128xf32>
    %182 = vector.extract_strided_slice %169 {offsets = [0, 256], sizes = [8, 128], strides = [1, 1]} : vector<8x512xf32> to vector<8x128xf32>
    %183 = math.tanh %182 : vector<8x128xf32>
    %184 = vector.extract_strided_slice %169 {offsets = [0, 384], sizes = [8, 128], strides = [1, 1]} : vector<8x512xf32> to vector<8x128xf32>
    %185 = arith.negf %184 : vector<8x128xf32>
    %186 = math.exp %185 : vector<8x128xf32>
    %cst_52 = arith.constant 1.000000e+00 : f32
    %187 = vector.broadcast %cst_52 : f32 to vector<8x128xf32>
    %188 = arith.addf %187, %186 : vector<8x128xf32>
    %189 = arith.divf %187, %188 : vector<8x128xf32>
    %190 = arith.mulf %181, %162 : vector<8x128xf32>
    %191 = arith.mulf %175, %183 : vector<8x128xf32>
    %192 = arith.addf %190, %191 : vector<8x128xf32>
    %193 = math.tanh %192 : vector<8x128xf32>
    %194 = arith.mulf %189, %193 : vector<8x128xf32>
    %c6_i32 = arith.constant 6 : i32
    %195 = arith.index_cast %c6_i32 : i32 to index
    %c0_53 = arith.constant 0 : index
    %c0_54 = arith.constant 0 : index
    %196 = vector.load %arg11[%195, %c0_53, %c0_54] : memref<8x8x512xf32, #tpu.memory_space<vmem>>, vector<1x8x512xf32>
    %197 = vector.shape_cast %196 : vector<1x8x512xf32> to vector<8x512xf32>
    %cst_55 = arith.constant dense<0.000000e+00> : vector<8x512xf32>
    %198 = tpu.matmul %194, %12, %cst_55 {dimension_numbers = #tpu.dot_dimension_numbers<[1], [0], [0], [1], [0, 0, 1, 1], [], []>} : vector<8x128xf32>, vector<128x512xf32>, vector<8x512xf32> -> vector<8x512xf32>
    %199 = arith.addf %197, %198 : vector<8x512xf32>
    %200 = vector.extract_strided_slice %199 {offsets = [0, 0], sizes = [8, 128], strides = [1, 1]} : vector<8x512xf32> to vector<8x128xf32>
    %201 = arith.negf %200 : vector<8x128xf32>
    %202 = math.exp %201 : vector<8x128xf32>
    %cst_56 = arith.constant 1.000000e+00 : f32
    %203 = vector.broadcast %cst_56 : f32 to vector<8x128xf32>
    %204 = arith.addf %203, %202 : vector<8x128xf32>
    %205 = arith.divf %203, %204 : vector<8x128xf32>
    %206 = vector.extract_strided_slice %199 {offsets = [0, 128], sizes = [8, 128], strides = [1, 1]} : vector<8x512xf32> to vector<8x128xf32>
    %207 = arith.negf %206 : vector<8x128xf32>
    %208 = math.exp %207 : vector<8x128xf32>
    %cst_57 = arith.constant 1.000000e+00 : f32
    %209 = vector.broadcast %cst_57 : f32 to vector<8x128xf32>
    %210 = arith.addf %209, %208 : vector<8x128xf32>
    %211 = arith.divf %209, %210 : vector<8x128xf32>
    %212 = vector.extract_strided_slice %199 {offsets = [0, 256], sizes = [8, 128], strides = [1, 1]} : vector<8x512xf32> to vector<8x128xf32>
    %213 = math.tanh %212 : vector<8x128xf32>
    %214 = vector.extract_strided_slice %199 {offsets = [0, 384], sizes = [8, 128], strides = [1, 1]} : vector<8x512xf32> to vector<8x128xf32>
    %215 = arith.negf %214 : vector<8x128xf32>
    %216 = math.exp %215 : vector<8x128xf32>
    %cst_58 = arith.constant 1.000000e+00 : f32
    %217 = vector.broadcast %cst_58 : f32 to vector<8x128xf32>
    %218 = arith.addf %217, %216 : vector<8x128xf32>
    %219 = arith.divf %217, %218 : vector<8x128xf32>
    %220 = arith.mulf %211, %192 : vector<8x128xf32>
    %221 = arith.mulf %205, %213 : vector<8x128xf32>
    %222 = arith.addf %220, %221 : vector<8x128xf32>
    %223 = math.tanh %222 : vector<8x128xf32>
    %224 = arith.mulf %219, %223 : vector<8x128xf32>
    %c7_i32 = arith.constant 7 : i32
    %225 = arith.index_cast %c7_i32 : i32 to index
    %c0_59 = arith.constant 0 : index
    %c0_60 = arith.constant 0 : index
    %226 = vector.load %arg11[%225, %c0_59, %c0_60] : memref<8x8x512xf32, #tpu.memory_space<vmem>>, vector<1x8x512xf32>
    %227 = vector.shape_cast %226 : vector<1x8x512xf32> to vector<8x512xf32>
    %cst_61 = arith.constant dense<0.000000e+00> : vector<8x512xf32>
    %228 = tpu.matmul %224, %12, %cst_61 {dimension_numbers = #tpu.dot_dimension_numbers<[1], [0], [0], [1], [0, 0, 1, 1], [], []>} : vector<8x128xf32>, vector<128x512xf32>, vector<8x512xf32> -> vector<8x512xf32>
    %229 = arith.addf %227, %228 : vector<8x512xf32>
    %230 = vector.extract_strided_slice %229 {offsets = [0, 0], sizes = [8, 128], strides = [1, 1]} : vector<8x512xf32> to vector<8x128xf32>
    %231 = arith.negf %230 : vector<8x128xf32>
    %232 = math.exp %231 : vector<8x128xf32>
    %cst_62 = arith.constant 1.000000e+00 : f32
    %233 = vector.broadcast %cst_62 : f32 to vector<8x128xf32>
    %234 = arith.addf %233, %232 : vector<8x128xf32>
    %235 = arith.divf %233, %234 : vector<8x128xf32>
    %236 = vector.extract_strided_slice %229 {offsets = [0, 128], sizes = [8, 128], strides = [1, 1]} : vector<8x512xf32> to vector<8x128xf32>
    %237 = arith.negf %236 : vector<8x128xf32>
    %238 = math.exp %237 : vector<8x128xf32>
    %cst_63 = arith.constant 1.000000e+00 : f32
    %239 = vector.broadcast %cst_63 : f32 to vector<8x128xf32>
    %240 = arith.addf %239, %238 : vector<8x128xf32>
    %241 = arith.divf %239, %240 : vector<8x128xf32>
    %242 = vector.extract_strided_slice %229 {offsets = [0, 256], sizes = [8, 128], strides = [1, 1]} : vector<8x512xf32> to vector<8x128xf32>
    %243 = math.tanh %242 : vector<8x128xf32>
    %244 = vector.extract_strided_slice %229 {offsets = [0, 384], sizes = [8, 128], strides = [1, 1]} : vector<8x512xf32> to vector<8x128xf32>
    %245 = arith.negf %244 : vector<8x128xf32>
    %246 = math.exp %245 : vector<8x128xf32>
    %cst_64 = arith.constant 1.000000e+00 : f32
    %247 = vector.broadcast %cst_64 : f32 to vector<8x128xf32>
    %248 = arith.addf %247, %246 : vector<8x128xf32>
    %249 = arith.divf %247, %248 : vector<8x128xf32>
    %250 = arith.mulf %241, %222 : vector<8x128xf32>
    %251 = arith.mulf %235, %243 : vector<8x128xf32>
    %252 = arith.addf %250, %251 : vector<8x128xf32>
    %253 = math.tanh %252 : vector<8x128xf32>
    %254 = arith.mulf %249, %253 : vector<8x128xf32>
    %c8_i32 = arith.constant 8 : i32
    %c0_65 = arith.constant 0 : index
    %c0_66 = arith.constant 0 : index
    %255 = vector.load %arg9[%c0_65, %c0_66] : memref<8x128xf32, #tpu.memory_space<vmem>>, vector<8x128xf32>
    tpu.vector_store %arg9[%c0_65, %c0_66], %254 {strides = array<i32>} : memref<8x128xf32, #tpu.memory_space<vmem>>, vector<8x128xf32>,
    %c0_67 = arith.constant 0 : index
    %c0_68 = arith.constant 0 : index
    %256 = vector.load %arg10[%c0_67, %c0_68] : memref<8x128xf32, #tpu.memory_space<vmem>>, vector<8x128xf32>
    tpu.vector_store %arg10[%c0_67, %c0_68], %252 {strides = array<i32>} : memref<8x128xf32, #tpu.memory_space<vmem>>, vector<8x128xf32>,
    %c0_i32_69 = arith.constant 0 : i32
    %257 = arith.cmpi eq, %arg1, %c0_i32_69 : i32
    %258 = arith.extui %257 : i1 to i32
    %c0_i32_70 = arith.constant 0 : i32
    %259 = arith.cmpi ne, %258, %c0_i32_70 : i32
    scf.if %259 {
      %c0_71 = arith.constant 0 : index
      %c0_72 = arith.constant 0 : index
      %260 = vector.load %arg9[%c0_71, %c0_72] : memref<8x128xf32, #tpu.memory_space<vmem>>, vector<8x128xf32>
      %c0_73 = arith.constant 0 : index
      %c0_74 = arith.constant 0 : index
      %261 = vector.load %arg6[%c0_73, %c0_74] : memref<128x128xf32, #tpu.memory_space<vmem>>, vector<128x128xf32>
      %cst_75 = arith.constant dense<0.000000e+00> : vector<8x128xf32>
      %262 = tpu.matmul %260, %261, %cst_75 {dimension_numbers = #tpu.dot_dimension_numbers<[1], [0], [0], [1], [0, 0, 1, 1], [], []>} : vector<8x128xf32>, vector<128x128xf32>, vector<8x128xf32> -> vector<8x128xf32>
      %c0_76 = arith.constant 0 : index
      %c0_77 = arith.constant 0 : index
      %263 = vector.load %arg7[%c0_76, %c0_77] : memref<1x128xf32, #tpu.memory_space<vmem>>, vector<1x128xf32>
      %264 = vector.broadcast %263 : vector<1x128xf32> to vector<8x128xf32>
      %265 = arith.addf %262, %264 : vector<8x128xf32>
      %c0_78 = arith.constant 0 : index
      %c0_79 = arith.constant 0 : index
      %266 = vector.load %arg8[%c0_78, %c0_79] : memref<8x128xf32, #tpu.memory_space<vmem>>, vector<8x128xf32>
      tpu.vector_store %arg8[%c0_78, %c0_79], %265 {strides = array<i32>} : memref<8x128xf32, #tpu.memory_space<vmem>>, vector<8x128xf32>,
    } else {
    }
    return
  }
  func.func @transform_0(%arg0: i32, %arg1: i32) -> (i32, i32, i32) {
    %c0_i32 = arith.constant 0 : i32
    %c0_i32_0 = arith.constant 0 : i32
    return %arg1, %arg0, %c0_i32 : i32, i32, i32
  }
  func.func @transform_1(%arg0: i32, %arg1: i32) -> (i32, i32) {
    %c0_i32 = arith.constant 0 : i32
    %c0_i32_0 = arith.constant 0 : i32
    %c0_i32_1 = arith.constant 0 : i32
    return %c0_i32, %c0_i32_0 : i32, i32
  }
  func.func @transform_2(%arg0: i32, %arg1: i32) -> (i32, i32) {
    %c0_i32 = arith.constant 0 : i32
    %c0_i32_0 = arith.constant 0 : i32
    %c0_i32_1 = arith.constant 0 : i32
    return %c0_i32, %c0_i32_0 : i32, i32
  }
  func.func @transform_3(%arg0: i32, %arg1: i32) -> (i32, i32) {
    %c0_i32 = arith.constant 0 : i32
    %c0_i32_0 = arith.constant 0 : i32
    %c0_i32_1 = arith.constant 0 : i32
    return %c0_i32, %c0_i32_0 : i32, i32
  }
  func.func @transform_4(%arg0: i32, %arg1: i32) -> (i32, i32) {
    %c0_i32 = arith.constant 0 : i32
    %c0_i32_0 = arith.constant 0 : i32
    %c0_i32_1 = arith.constant 0 : i32
    return %c0_i32, %c0_i32_0 : i32, i32
  }
  func.func @transform_5(%arg0: i32, %arg1: i32) -> (i32, i32) {
    %c0_i32 = arith.constant 0 : i32
    %c0_i32_0 = arith.constant 0 : i32
    %c0_i32_1 = arith.constant 0 : i32
    return %c0_i32, %c0_i32_0 : i32, i32
  }
  func.func @transform_6(%arg0: i32, %arg1: i32) -> (i32, i32) {
    %c0_i32 = arith.constant 0 : i32
    %c0_i32_0 = arith.constant 0 : i32
    return %arg0, %c0_i32 : i32, i32
  }
}

module attributes {stable_mosaic.version = 11 : i64} {
  func.func @_lstm_seq_kernel(%arg0: i32, %arg1: i32, %arg2: memref<8x8x128xf32, #tpu.memory_space<vmem>>, %arg3: memref<128x512xf32, #tpu.memory_space<vmem>>, %arg4: memref<128x512xf32, #tpu.memory_space<vmem>>, %arg5: memref<1x512xf32, #tpu.memory_space<vmem>>, %arg6: memref<8x8x128xf32, #tpu.memory_space<vmem>>, %arg7: memref<8x128xf32, #tpu.memory_space<vmem>>, %arg8: memref<8x128xf32, #tpu.memory_space<vmem>>, %arg9: memref<8x8x512xf32, #tpu.memory_space<vmem>>) attributes {dimension_semantics = [#tpu.dimension_semantics<parallel>, #tpu.dimension_semantics<arbitrary>], iteration_bounds = array<i64: 1, 1>, scalar_prefetch = 0 : i64, scratch_operands = 3 : i64, tpu.core_type = #tpu.core_type<tc>, window_params = [{transform_indices = @transform_0, window_bounds = array<i64: 8, 8, 128>}, {pipeline_mode = #tpu.pipeline_mode<synchronous>, transform_indices = @transform_1, window_bounds = array<i64: 128, 512>}, {pipeline_mode = #tpu.pipeline_mode<synchronous>, transform_indices = @transform_2, window_bounds = array<i64: 128, 512>}, {pipeline_mode = #tpu.pipeline_mode<synchronous>, transform_indices = @transform_3, window_bounds = array<i64: 1, 512>}, {transform_indices = @transform_4, window_bounds = array<i64: 8, 8, 128>}]} {
    %c0_i32 = arith.constant 0 : i32
    %0 = arith.cmpi eq, %arg1, %c0_i32 : i32
    %1 = arith.extui %0 : i1 to i32
    %c0_i32_0 = arith.constant 0 : i32
    %2 = arith.cmpi ne, %1, %c0_i32_0 : i32
    scf.if %2 {
      %cst_85 = arith.constant 0.000000e+00 : f32
      %289 = vector.broadcast %cst_85 : f32 to vector<8x128xf32>
      %c0_86 = arith.constant 0 : index
      %c0_87 = arith.constant 0 : index
      %290 = vector.load %arg7[%c0_86, %c0_87] : memref<8x128xf32, #tpu.memory_space<vmem>>, vector<8x128xf32>
      tpu.vector_store %arg7[%c0_86, %c0_87], %289 {strides = array<i32>} : memref<8x128xf32, #tpu.memory_space<vmem>>, vector<8x128xf32>,
      %cst_88 = arith.constant 0.000000e+00 : f32
      %291 = vector.broadcast %cst_88 : f32 to vector<8x128xf32>
      %c0_89 = arith.constant 0 : index
      %c0_90 = arith.constant 0 : index
      %292 = vector.load %arg8[%c0_89, %c0_90] : memref<8x128xf32, #tpu.memory_space<vmem>>, vector<8x128xf32>
      tpu.vector_store %arg8[%c0_89, %c0_90], %291 {strides = array<i32>} : memref<8x128xf32, #tpu.memory_space<vmem>>, vector<8x128xf32>,
    } else {
    }
    %c0 = arith.constant 0 : index
    %c0_1 = arith.constant 0 : index
    %c0_2 = arith.constant 0 : index
    %3 = vector.load %arg2[%c0, %c0_1, %c0_2] : memref<8x8x128xf32, #tpu.memory_space<vmem>>, vector<8x8x128xf32>
    %4 = vector.shape_cast %3 : vector<8x8x128xf32> to vector<64x128xf32>
    %c0_3 = arith.constant 0 : index
    %c0_4 = arith.constant 0 : index
    %5 = vector.load %arg3[%c0_3, %c0_4] : memref<128x512xf32, #tpu.memory_space<vmem>>, vector<128x512xf32>
    %cst = arith.constant dense<0.000000e+00> : vector<64x512xf32>
    %6 = tpu.matmul %4, %5, %cst {dimension_numbers = #tpu.dot_dimension_numbers<[1], [0], [0], [1], [0, 0, 1, 1], [], []>} : vector<64x128xf32>, vector<128x512xf32>, vector<64x512xf32> -> vector<64x512xf32>
    %c0_5 = arith.constant 0 : index
    %c0_6 = arith.constant 0 : index
    %7 = vector.load %arg5[%c0_5, %c0_6] : memref<1x512xf32, #tpu.memory_space<vmem>>, vector<1x512xf32>
    %8 = vector.broadcast %7 : vector<1x512xf32> to vector<64x512xf32>
    %9 = arith.addf %6, %8 : vector<64x512xf32>
    %10 = vector.shape_cast %9 : vector<64x512xf32> to vector<8x8x512xf32>
    %c0_7 = arith.constant 0 : index
    %c0_8 = arith.constant 0 : index
    %c0_9 = arith.constant 0 : index
    %11 = vector.load %arg9[%c0_7, %c0_8, %c0_9] : memref<8x8x512xf32, #tpu.memory_space<vmem>>, vector<8x8x512xf32>
    tpu.vector_store %arg9[%c0_7, %c0_8, %c0_9], %10 {strides = array<i32>} : memref<8x8x512xf32, #tpu.memory_space<vmem>>, vector<8x8x512xf32>,
    %c0_10 = arith.constant 0 : index
    %c0_11 = arith.constant 0 : index
    %12 = vector.load %arg4[%c0_10, %c0_11] : memref<128x512xf32, #tpu.memory_space<vmem>>, vector<128x512xf32>
    %c0_12 = arith.constant 0 : index
    %c0_13 = arith.constant 0 : index
    %13 = vector.load %arg7[%c0_12, %c0_13] : memref<8x128xf32, #tpu.memory_space<vmem>>, vector<8x128xf32>
    %c0_14 = arith.constant 0 : index
    %c0_15 = arith.constant 0 : index
    %14 = vector.load %arg8[%c0_14, %c0_15] : memref<8x128xf32, #tpu.memory_space<vmem>>, vector<8x128xf32>
    %c0_i32_16 = arith.constant 0 : i32
    %15 = arith.index_cast %c0_i32_16 : i32 to index
    %c0_17 = arith.constant 0 : index
    %c0_18 = arith.constant 0 : index
    %16 = vector.load %arg9[%15, %c0_17, %c0_18] : memref<8x8x512xf32, #tpu.memory_space<vmem>>, vector<1x8x512xf32>
    %17 = vector.shape_cast %16 : vector<1x8x512xf32> to vector<8x512xf32>
    %cst_19 = arith.constant dense<0.000000e+00> : vector<8x512xf32>
    %18 = tpu.matmul %13, %12, %cst_19 {dimension_numbers = #tpu.dot_dimension_numbers<[1], [0], [0], [1], [0, 0, 1, 1], [], []>} : vector<8x128xf32>, vector<128x512xf32>, vector<8x512xf32> -> vector<8x512xf32>
    %19 = arith.addf %17, %18 : vector<8x512xf32>
    %20 = vector.extract_strided_slice %19 {offsets = [0, 0], sizes = [8, 128], strides = [1, 1]} : vector<8x512xf32> to vector<8x128xf32>
    %21 = arith.negf %20 : vector<8x128xf32>
    %22 = math.exp %21 : vector<8x128xf32>
    %cst_20 = arith.constant 1.000000e+00 : f32
    %23 = vector.broadcast %cst_20 : f32 to vector<8x128xf32>
    %24 = arith.addf %23, %22 : vector<8x128xf32>
    %25 = arith.divf %23, %24 : vector<8x128xf32>
    %26 = vector.extract_strided_slice %19 {offsets = [0, 128], sizes = [8, 128], strides = [1, 1]} : vector<8x512xf32> to vector<8x128xf32>
    %27 = arith.negf %26 : vector<8x128xf32>
    %28 = math.exp %27 : vector<8x128xf32>
    %cst_21 = arith.constant 1.000000e+00 : f32
    %29 = vector.broadcast %cst_21 : f32 to vector<8x128xf32>
    %30 = arith.addf %29, %28 : vector<8x128xf32>
    %31 = arith.divf %29, %30 : vector<8x128xf32>
    %32 = vector.extract_strided_slice %19 {offsets = [0, 256], sizes = [8, 128], strides = [1, 1]} : vector<8x512xf32> to vector<8x128xf32>
    %33 = math.tanh %32 : vector<8x128xf32>
    %34 = vector.extract_strided_slice %19 {offsets = [0, 384], sizes = [8, 128], strides = [1, 1]} : vector<8x512xf32> to vector<8x128xf32>
    %35 = arith.negf %34 : vector<8x128xf32>
    %36 = math.exp %35 : vector<8x128xf32>
    %cst_22 = arith.constant 1.000000e+00 : f32
    %37 = vector.broadcast %cst_22 : f32 to vector<8x128xf32>
    %38 = arith.addf %37, %36 : vector<8x128xf32>
    %39 = arith.divf %37, %38 : vector<8x128xf32>
    %40 = arith.mulf %31, %14 : vector<8x128xf32>
    %41 = arith.mulf %25, %33 : vector<8x128xf32>
    %42 = arith.addf %40, %41 : vector<8x128xf32>
    %43 = math.tanh %42 : vector<8x128xf32>
    %44 = arith.mulf %39, %43 : vector<8x128xf32>
    %45 = arith.index_cast %c0_i32_16 : i32 to index
    %c0_23 = arith.constant 0 : index
    %c0_24 = arith.constant 0 : index
    %46 = vector.load %arg6[%45, %c0_23, %c0_24] : memref<8x8x128xf32, #tpu.memory_space<vmem>>, vector<1x8x128xf32>
    %47 = vector.shape_cast %46 : vector<1x8x128xf32> to vector<8x128xf32>
    %48 = vector.shape_cast %44 : vector<8x128xf32> to vector<1x8x128xf32>
    tpu.vector_store %arg6[%45, %c0_23, %c0_24], %48 {strides = array<i32>} : memref<8x8x128xf32, #tpu.memory_space<vmem>>, vector<1x8x128xf32>,
    %c1_i32 = arith.constant 1 : i32
    %49 = arith.index_cast %c1_i32 : i32 to index
    %c0_25 = arith.constant 0 : index
    %c0_26 = arith.constant 0 : index
    %50 = vector.load %arg9[%49, %c0_25, %c0_26] : memref<8x8x512xf32, #tpu.memory_space<vmem>>, vector<1x8x512xf32>
    %51 = vector.shape_cast %50 : vector<1x8x512xf32> to vector<8x512xf32>
    %cst_27 = arith.constant dense<0.000000e+00> : vector<8x512xf32>
    %52 = tpu.matmul %44, %12, %cst_27 {dimension_numbers = #tpu.dot_dimension_numbers<[1], [0], [0], [1], [0, 0, 1, 1], [], []>} : vector<8x128xf32>, vector<128x512xf32>, vector<8x512xf32> -> vector<8x512xf32>
    %53 = arith.addf %51, %52 : vector<8x512xf32>
    %54 = vector.extract_strided_slice %53 {offsets = [0, 0], sizes = [8, 128], strides = [1, 1]} : vector<8x512xf32> to vector<8x128xf32>
    %55 = arith.negf %54 : vector<8x128xf32>
    %56 = math.exp %55 : vector<8x128xf32>
    %cst_28 = arith.constant 1.000000e+00 : f32
    %57 = vector.broadcast %cst_28 : f32 to vector<8x128xf32>
    %58 = arith.addf %57, %56 : vector<8x128xf32>
    %59 = arith.divf %57, %58 : vector<8x128xf32>
    %60 = vector.extract_strided_slice %53 {offsets = [0, 128], sizes = [8, 128], strides = [1, 1]} : vector<8x512xf32> to vector<8x128xf32>
    %61 = arith.negf %60 : vector<8x128xf32>
    %62 = math.exp %61 : vector<8x128xf32>
    %cst_29 = arith.constant 1.000000e+00 : f32
    %63 = vector.broadcast %cst_29 : f32 to vector<8x128xf32>
    %64 = arith.addf %63, %62 : vector<8x128xf32>
    %65 = arith.divf %63, %64 : vector<8x128xf32>
    %66 = vector.extract_strided_slice %53 {offsets = [0, 256], sizes = [8, 128], strides = [1, 1]} : vector<8x512xf32> to vector<8x128xf32>
    %67 = math.tanh %66 : vector<8x128xf32>
    %68 = vector.extract_strided_slice %53 {offsets = [0, 384], sizes = [8, 128], strides = [1, 1]} : vector<8x512xf32> to vector<8x128xf32>
    %69 = arith.negf %68 : vector<8x128xf32>
    %70 = math.exp %69 : vector<8x128xf32>
    %cst_30 = arith.constant 1.000000e+00 : f32
    %71 = vector.broadcast %cst_30 : f32 to vector<8x128xf32>
    %72 = arith.addf %71, %70 : vector<8x128xf32>
    %73 = arith.divf %71, %72 : vector<8x128xf32>
    %74 = arith.mulf %65, %42 : vector<8x128xf32>
    %75 = arith.mulf %59, %67 : vector<8x128xf32>
    %76 = arith.addf %74, %75 : vector<8x128xf32>
    %77 = math.tanh %76 : vector<8x128xf32>
    %78 = arith.mulf %73, %77 : vector<8x128xf32>
    %79 = arith.index_cast %c1_i32 : i32 to index
    %c0_31 = arith.constant 0 : index
    %c0_32 = arith.constant 0 : index
    %80 = vector.load %arg6[%79, %c0_31, %c0_32] : memref<8x8x128xf32, #tpu.memory_space<vmem>>, vector<1x8x128xf32>
    %81 = vector.shape_cast %80 : vector<1x8x128xf32> to vector<8x128xf32>
    %82 = vector.shape_cast %78 : vector<8x128xf32> to vector<1x8x128xf32>
    tpu.vector_store %arg6[%79, %c0_31, %c0_32], %82 {strides = array<i32>} : memref<8x8x128xf32, #tpu.memory_space<vmem>>, vector<1x8x128xf32>,
    %c2_i32 = arith.constant 2 : i32
    %83 = arith.index_cast %c2_i32 : i32 to index
    %c0_33 = arith.constant 0 : index
    %c0_34 = arith.constant 0 : index
    %84 = vector.load %arg9[%83, %c0_33, %c0_34] : memref<8x8x512xf32, #tpu.memory_space<vmem>>, vector<1x8x512xf32>
    %85 = vector.shape_cast %84 : vector<1x8x512xf32> to vector<8x512xf32>
    %cst_35 = arith.constant dense<0.000000e+00> : vector<8x512xf32>
    %86 = tpu.matmul %78, %12, %cst_35 {dimension_numbers = #tpu.dot_dimension_numbers<[1], [0], [0], [1], [0, 0, 1, 1], [], []>} : vector<8x128xf32>, vector<128x512xf32>, vector<8x512xf32> -> vector<8x512xf32>
    %87 = arith.addf %85, %86 : vector<8x512xf32>
    %88 = vector.extract_strided_slice %87 {offsets = [0, 0], sizes = [8, 128], strides = [1, 1]} : vector<8x512xf32> to vector<8x128xf32>
    %89 = arith.negf %88 : vector<8x128xf32>
    %90 = math.exp %89 : vector<8x128xf32>
    %cst_36 = arith.constant 1.000000e+00 : f32
    %91 = vector.broadcast %cst_36 : f32 to vector<8x128xf32>
    %92 = arith.addf %91, %90 : vector<8x128xf32>
    %93 = arith.divf %91, %92 : vector<8x128xf32>
    %94 = vector.extract_strided_slice %87 {offsets = [0, 128], sizes = [8, 128], strides = [1, 1]} : vector<8x512xf32> to vector<8x128xf32>
    %95 = arith.negf %94 : vector<8x128xf32>
    %96 = math.exp %95 : vector<8x128xf32>
    %cst_37 = arith.constant 1.000000e+00 : f32
    %97 = vector.broadcast %cst_37 : f32 to vector<8x128xf32>
    %98 = arith.addf %97, %96 : vector<8x128xf32>
    %99 = arith.divf %97, %98 : vector<8x128xf32>
    %100 = vector.extract_strided_slice %87 {offsets = [0, 256], sizes = [8, 128], strides = [1, 1]} : vector<8x512xf32> to vector<8x128xf32>
    %101 = math.tanh %100 : vector<8x128xf32>
    %102 = vector.extract_strided_slice %87 {offsets = [0, 384], sizes = [8, 128], strides = [1, 1]} : vector<8x512xf32> to vector<8x128xf32>
    %103 = arith.negf %102 : vector<8x128xf32>
    %104 = math.exp %103 : vector<8x128xf32>
    %cst_38 = arith.constant 1.000000e+00 : f32
    %105 = vector.broadcast %cst_38 : f32 to vector<8x128xf32>
    %106 = arith.addf %105, %104 : vector<8x128xf32>
    %107 = arith.divf %105, %106 : vector<8x128xf32>
    %108 = arith.mulf %99, %76 : vector<8x128xf32>
    %109 = arith.mulf %93, %101 : vector<8x128xf32>
    %110 = arith.addf %108, %109 : vector<8x128xf32>
    %111 = math.tanh %110 : vector<8x128xf32>
    %112 = arith.mulf %107, %111 : vector<8x128xf32>
    %113 = arith.index_cast %c2_i32 : i32 to index
    %c0_39 = arith.constant 0 : index
    %c0_40 = arith.constant 0 : index
    %114 = vector.load %arg6[%113, %c0_39, %c0_40] : memref<8x8x128xf32, #tpu.memory_space<vmem>>, vector<1x8x128xf32>
    %115 = vector.shape_cast %114 : vector<1x8x128xf32> to vector<8x128xf32>
    %116 = vector.shape_cast %112 : vector<8x128xf32> to vector<1x8x128xf32>
    tpu.vector_store %arg6[%113, %c0_39, %c0_40], %116 {strides = array<i32>} : memref<8x8x128xf32, #tpu.memory_space<vmem>>, vector<1x8x128xf32>,
    %c3_i32 = arith.constant 3 : i32
    %117 = arith.index_cast %c3_i32 : i32 to index
    %c0_41 = arith.constant 0 : index
    %c0_42 = arith.constant 0 : index
    %118 = vector.load %arg9[%117, %c0_41, %c0_42] : memref<8x8x512xf32, #tpu.memory_space<vmem>>, vector<1x8x512xf32>
    %119 = vector.shape_cast %118 : vector<1x8x512xf32> to vector<8x512xf32>
    %cst_43 = arith.constant dense<0.000000e+00> : vector<8x512xf32>
    %120 = tpu.matmul %112, %12, %cst_43 {dimension_numbers = #tpu.dot_dimension_numbers<[1], [0], [0], [1], [0, 0, 1, 1], [], []>} : vector<8x128xf32>, vector<128x512xf32>, vector<8x512xf32> -> vector<8x512xf32>
    %121 = arith.addf %119, %120 : vector<8x512xf32>
    %122 = vector.extract_strided_slice %121 {offsets = [0, 0], sizes = [8, 128], strides = [1, 1]} : vector<8x512xf32> to vector<8x128xf32>
    %123 = arith.negf %122 : vector<8x128xf32>
    %124 = math.exp %123 : vector<8x128xf32>
    %cst_44 = arith.constant 1.000000e+00 : f32
    %125 = vector.broadcast %cst_44 : f32 to vector<8x128xf32>
    %126 = arith.addf %125, %124 : vector<8x128xf32>
    %127 = arith.divf %125, %126 : vector<8x128xf32>
    %128 = vector.extract_strided_slice %121 {offsets = [0, 128], sizes = [8, 128], strides = [1, 1]} : vector<8x512xf32> to vector<8x128xf32>
    %129 = arith.negf %128 : vector<8x128xf32>
    %130 = math.exp %129 : vector<8x128xf32>
    %cst_45 = arith.constant 1.000000e+00 : f32
    %131 = vector.broadcast %cst_45 : f32 to vector<8x128xf32>
    %132 = arith.addf %131, %130 : vector<8x128xf32>
    %133 = arith.divf %131, %132 : vector<8x128xf32>
    %134 = vector.extract_strided_slice %121 {offsets = [0, 256], sizes = [8, 128], strides = [1, 1]} : vector<8x512xf32> to vector<8x128xf32>
    %135 = math.tanh %134 : vector<8x128xf32>
    %136 = vector.extract_strided_slice %121 {offsets = [0, 384], sizes = [8, 128], strides = [1, 1]} : vector<8x512xf32> to vector<8x128xf32>
    %137 = arith.negf %136 : vector<8x128xf32>
    %138 = math.exp %137 : vector<8x128xf32>
    %cst_46 = arith.constant 1.000000e+00 : f32
    %139 = vector.broadcast %cst_46 : f32 to vector<8x128xf32>
    %140 = arith.addf %139, %138 : vector<8x128xf32>
    %141 = arith.divf %139, %140 : vector<8x128xf32>
    %142 = arith.mulf %133, %110 : vector<8x128xf32>
    %143 = arith.mulf %127, %135 : vector<8x128xf32>
    %144 = arith.addf %142, %143 : vector<8x128xf32>
    %145 = math.tanh %144 : vector<8x128xf32>
    %146 = arith.mulf %141, %145 : vector<8x128xf32>
    %147 = arith.index_cast %c3_i32 : i32 to index
    %c0_47 = arith.constant 0 : index
    %c0_48 = arith.constant 0 : index
    %148 = vector.load %arg6[%147, %c0_47, %c0_48] : memref<8x8x128xf32, #tpu.memory_space<vmem>>, vector<1x8x128xf32>
    %149 = vector.shape_cast %148 : vector<1x8x128xf32> to vector<8x128xf32>
    %150 = vector.shape_cast %146 : vector<8x128xf32> to vector<1x8x128xf32>
    tpu.vector_store %arg6[%147, %c0_47, %c0_48], %150 {strides = array<i32>} : memref<8x8x128xf32, #tpu.memory_space<vmem>>, vector<1x8x128xf32>,
    %c4_i32 = arith.constant 4 : i32
    %151 = arith.index_cast %c4_i32 : i32 to index
    %c0_49 = arith.constant 0 : index
    %c0_50 = arith.constant 0 : index
    %152 = vector.load %arg9[%151, %c0_49, %c0_50] : memref<8x8x512xf32, #tpu.memory_space<vmem>>, vector<1x8x512xf32>
    %153 = vector.shape_cast %152 : vector<1x8x512xf32> to vector<8x512xf32>
    %cst_51 = arith.constant dense<0.000000e+00> : vector<8x512xf32>
    %154 = tpu.matmul %146, %12, %cst_51 {dimension_numbers = #tpu.dot_dimension_numbers<[1], [0], [0], [1], [0, 0, 1, 1], [], []>} : vector<8x128xf32>, vector<128x512xf32>, vector<8x512xf32> -> vector<8x512xf32>
    %155 = arith.addf %153, %154 : vector<8x512xf32>
    %156 = vector.extract_strided_slice %155 {offsets = [0, 0], sizes = [8, 128], strides = [1, 1]} : vector<8x512xf32> to vector<8x128xf32>
    %157 = arith.negf %156 : vector<8x128xf32>
    %158 = math.exp %157 : vector<8x128xf32>
    %cst_52 = arith.constant 1.000000e+00 : f32
    %159 = vector.broadcast %cst_52 : f32 to vector<8x128xf32>
    %160 = arith.addf %159, %158 : vector<8x128xf32>
    %161 = arith.divf %159, %160 : vector<8x128xf32>
    %162 = vector.extract_strided_slice %155 {offsets = [0, 128], sizes = [8, 128], strides = [1, 1]} : vector<8x512xf32> to vector<8x128xf32>
    %163 = arith.negf %162 : vector<8x128xf32>
    %164 = math.exp %163 : vector<8x128xf32>
    %cst_53 = arith.constant 1.000000e+00 : f32
    %165 = vector.broadcast %cst_53 : f32 to vector<8x128xf32>
    %166 = arith.addf %165, %164 : vector<8x128xf32>
    %167 = arith.divf %165, %166 : vector<8x128xf32>
    %168 = vector.extract_strided_slice %155 {offsets = [0, 256], sizes = [8, 128], strides = [1, 1]} : vector<8x512xf32> to vector<8x128xf32>
    %169 = math.tanh %168 : vector<8x128xf32>
    %170 = vector.extract_strided_slice %155 {offsets = [0, 384], sizes = [8, 128], strides = [1, 1]} : vector<8x512xf32> to vector<8x128xf32>
    %171 = arith.negf %170 : vector<8x128xf32>
    %172 = math.exp %171 : vector<8x128xf32>
    %cst_54 = arith.constant 1.000000e+00 : f32
    %173 = vector.broadcast %cst_54 : f32 to vector<8x128xf32>
    %174 = arith.addf %173, %172 : vector<8x128xf32>
    %175 = arith.divf %173, %174 : vector<8x128xf32>
    %176 = arith.mulf %167, %144 : vector<8x128xf32>
    %177 = arith.mulf %161, %169 : vector<8x128xf32>
    %178 = arith.addf %176, %177 : vector<8x128xf32>
    %179 = math.tanh %178 : vector<8x128xf32>
    %180 = arith.mulf %175, %179 : vector<8x128xf32>
    %181 = arith.index_cast %c4_i32 : i32 to index
    %c0_55 = arith.constant 0 : index
    %c0_56 = arith.constant 0 : index
    %182 = vector.load %arg6[%181, %c0_55, %c0_56] : memref<8x8x128xf32, #tpu.memory_space<vmem>>, vector<1x8x128xf32>
    %183 = vector.shape_cast %182 : vector<1x8x128xf32> to vector<8x128xf32>
    %184 = vector.shape_cast %180 : vector<8x128xf32> to vector<1x8x128xf32>
    tpu.vector_store %arg6[%181, %c0_55, %c0_56], %184 {strides = array<i32>} : memref<8x8x128xf32, #tpu.memory_space<vmem>>, vector<1x8x128xf32>,
    %c5_i32 = arith.constant 5 : i32
    %185 = arith.index_cast %c5_i32 : i32 to index
    %c0_57 = arith.constant 0 : index
    %c0_58 = arith.constant 0 : index
    %186 = vector.load %arg9[%185, %c0_57, %c0_58] : memref<8x8x512xf32, #tpu.memory_space<vmem>>, vector<1x8x512xf32>
    %187 = vector.shape_cast %186 : vector<1x8x512xf32> to vector<8x512xf32>
    %cst_59 = arith.constant dense<0.000000e+00> : vector<8x512xf32>
    %188 = tpu.matmul %180, %12, %cst_59 {dimension_numbers = #tpu.dot_dimension_numbers<[1], [0], [0], [1], [0, 0, 1, 1], [], []>} : vector<8x128xf32>, vector<128x512xf32>, vector<8x512xf32> -> vector<8x512xf32>
    %189 = arith.addf %187, %188 : vector<8x512xf32>
    %190 = vector.extract_strided_slice %189 {offsets = [0, 0], sizes = [8, 128], strides = [1, 1]} : vector<8x512xf32> to vector<8x128xf32>
    %191 = arith.negf %190 : vector<8x128xf32>
    %192 = math.exp %191 : vector<8x128xf32>
    %cst_60 = arith.constant 1.000000e+00 : f32
    %193 = vector.broadcast %cst_60 : f32 to vector<8x128xf32>
    %194 = arith.addf %193, %192 : vector<8x128xf32>
    %195 = arith.divf %193, %194 : vector<8x128xf32>
    %196 = vector.extract_strided_slice %189 {offsets = [0, 128], sizes = [8, 128], strides = [1, 1]} : vector<8x512xf32> to vector<8x128xf32>
    %197 = arith.negf %196 : vector<8x128xf32>
    %198 = math.exp %197 : vector<8x128xf32>
    %cst_61 = arith.constant 1.000000e+00 : f32
    %199 = vector.broadcast %cst_61 : f32 to vector<8x128xf32>
    %200 = arith.addf %199, %198 : vector<8x128xf32>
    %201 = arith.divf %199, %200 : vector<8x128xf32>
    %202 = vector.extract_strided_slice %189 {offsets = [0, 256], sizes = [8, 128], strides = [1, 1]} : vector<8x512xf32> to vector<8x128xf32>
    %203 = math.tanh %202 : vector<8x128xf32>
    %204 = vector.extract_strided_slice %189 {offsets = [0, 384], sizes = [8, 128], strides = [1, 1]} : vector<8x512xf32> to vector<8x128xf32>
    %205 = arith.negf %204 : vector<8x128xf32>
    %206 = math.exp %205 : vector<8x128xf32>
    %cst_62 = arith.constant 1.000000e+00 : f32
    %207 = vector.broadcast %cst_62 : f32 to vector<8x128xf32>
    %208 = arith.addf %207, %206 : vector<8x128xf32>
    %209 = arith.divf %207, %208 : vector<8x128xf32>
    %210 = arith.mulf %201, %178 : vector<8x128xf32>
    %211 = arith.mulf %195, %203 : vector<8x128xf32>
    %212 = arith.addf %210, %211 : vector<8x128xf32>
    %213 = math.tanh %212 : vector<8x128xf32>
    %214 = arith.mulf %209, %213 : vector<8x128xf32>
    %215 = arith.index_cast %c5_i32 : i32 to index
    %c0_63 = arith.constant 0 : index
    %c0_64 = arith.constant 0 : index
    %216 = vector.load %arg6[%215, %c0_63, %c0_64] : memref<8x8x128xf32, #tpu.memory_space<vmem>>, vector<1x8x128xf32>
    %217 = vector.shape_cast %216 : vector<1x8x128xf32> to vector<8x128xf32>
    %218 = vector.shape_cast %214 : vector<8x128xf32> to vector<1x8x128xf32>
    tpu.vector_store %arg6[%215, %c0_63, %c0_64], %218 {strides = array<i32>} : memref<8x8x128xf32, #tpu.memory_space<vmem>>, vector<1x8x128xf32>,
    %c6_i32 = arith.constant 6 : i32
    %219 = arith.index_cast %c6_i32 : i32 to index
    %c0_65 = arith.constant 0 : index
    %c0_66 = arith.constant 0 : index
    %220 = vector.load %arg9[%219, %c0_65, %c0_66] : memref<8x8x512xf32, #tpu.memory_space<vmem>>, vector<1x8x512xf32>
    %221 = vector.shape_cast %220 : vector<1x8x512xf32> to vector<8x512xf32>
    %cst_67 = arith.constant dense<0.000000e+00> : vector<8x512xf32>
    %222 = tpu.matmul %214, %12, %cst_67 {dimension_numbers = #tpu.dot_dimension_numbers<[1], [0], [0], [1], [0, 0, 1, 1], [], []>} : vector<8x128xf32>, vector<128x512xf32>, vector<8x512xf32> -> vector<8x512xf32>
    %223 = arith.addf %221, %222 : vector<8x512xf32>
    %224 = vector.extract_strided_slice %223 {offsets = [0, 0], sizes = [8, 128], strides = [1, 1]} : vector<8x512xf32> to vector<8x128xf32>
    %225 = arith.negf %224 : vector<8x128xf32>
    %226 = math.exp %225 : vector<8x128xf32>
    %cst_68 = arith.constant 1.000000e+00 : f32
    %227 = vector.broadcast %cst_68 : f32 to vector<8x128xf32>
    %228 = arith.addf %227, %226 : vector<8x128xf32>
    %229 = arith.divf %227, %228 : vector<8x128xf32>
    %230 = vector.extract_strided_slice %223 {offsets = [0, 128], sizes = [8, 128], strides = [1, 1]} : vector<8x512xf32> to vector<8x128xf32>
    %231 = arith.negf %230 : vector<8x128xf32>
    %232 = math.exp %231 : vector<8x128xf32>
    %cst_69 = arith.constant 1.000000e+00 : f32
    %233 = vector.broadcast %cst_69 : f32 to vector<8x128xf32>
    %234 = arith.addf %233, %232 : vector<8x128xf32>
    %235 = arith.divf %233, %234 : vector<8x128xf32>
    %236 = vector.extract_strided_slice %223 {offsets = [0, 256], sizes = [8, 128], strides = [1, 1]} : vector<8x512xf32> to vector<8x128xf32>
    %237 = math.tanh %236 : vector<8x128xf32>
    %238 = vector.extract_strided_slice %223 {offsets = [0, 384], sizes = [8, 128], strides = [1, 1]} : vector<8x512xf32> to vector<8x128xf32>
    %239 = arith.negf %238 : vector<8x128xf32>
    %240 = math.exp %239 : vector<8x128xf32>
    %cst_70 = arith.constant 1.000000e+00 : f32
    %241 = vector.broadcast %cst_70 : f32 to vector<8x128xf32>
    %242 = arith.addf %241, %240 : vector<8x128xf32>
    %243 = arith.divf %241, %242 : vector<8x128xf32>
    %244 = arith.mulf %235, %212 : vector<8x128xf32>
    %245 = arith.mulf %229, %237 : vector<8x128xf32>
    %246 = arith.addf %244, %245 : vector<8x128xf32>
    %247 = math.tanh %246 : vector<8x128xf32>
    %248 = arith.mulf %243, %247 : vector<8x128xf32>
    %249 = arith.index_cast %c6_i32 : i32 to index
    %c0_71 = arith.constant 0 : index
    %c0_72 = arith.constant 0 : index
    %250 = vector.load %arg6[%249, %c0_71, %c0_72] : memref<8x8x128xf32, #tpu.memory_space<vmem>>, vector<1x8x128xf32>
    %251 = vector.shape_cast %250 : vector<1x8x128xf32> to vector<8x128xf32>
    %252 = vector.shape_cast %248 : vector<8x128xf32> to vector<1x8x128xf32>
    tpu.vector_store %arg6[%249, %c0_71, %c0_72], %252 {strides = array<i32>} : memref<8x8x128xf32, #tpu.memory_space<vmem>>, vector<1x8x128xf32>,
    %c7_i32 = arith.constant 7 : i32
    %253 = arith.index_cast %c7_i32 : i32 to index
    %c0_73 = arith.constant 0 : index
    %c0_74 = arith.constant 0 : index
    %254 = vector.load %arg9[%253, %c0_73, %c0_74] : memref<8x8x512xf32, #tpu.memory_space<vmem>>, vector<1x8x512xf32>
    %255 = vector.shape_cast %254 : vector<1x8x512xf32> to vector<8x512xf32>
    %cst_75 = arith.constant dense<0.000000e+00> : vector<8x512xf32>
    %256 = tpu.matmul %248, %12, %cst_75 {dimension_numbers = #tpu.dot_dimension_numbers<[1], [0], [0], [1], [0, 0, 1, 1], [], []>} : vector<8x128xf32>, vector<128x512xf32>, vector<8x512xf32> -> vector<8x512xf32>
    %257 = arith.addf %255, %256 : vector<8x512xf32>
    %258 = vector.extract_strided_slice %257 {offsets = [0, 0], sizes = [8, 128], strides = [1, 1]} : vector<8x512xf32> to vector<8x128xf32>
    %259 = arith.negf %258 : vector<8x128xf32>
    %260 = math.exp %259 : vector<8x128xf32>
    %cst_76 = arith.constant 1.000000e+00 : f32
    %261 = vector.broadcast %cst_76 : f32 to vector<8x128xf32>
    %262 = arith.addf %261, %260 : vector<8x128xf32>
    %263 = arith.divf %261, %262 : vector<8x128xf32>
    %264 = vector.extract_strided_slice %257 {offsets = [0, 128], sizes = [8, 128], strides = [1, 1]} : vector<8x512xf32> to vector<8x128xf32>
    %265 = arith.negf %264 : vector<8x128xf32>
    %266 = math.exp %265 : vector<8x128xf32>
    %cst_77 = arith.constant 1.000000e+00 : f32
    %267 = vector.broadcast %cst_77 : f32 to vector<8x128xf32>
    %268 = arith.addf %267, %266 : vector<8x128xf32>
    %269 = arith.divf %267, %268 : vector<8x128xf32>
    %270 = vector.extract_strided_slice %257 {offsets = [0, 256], sizes = [8, 128], strides = [1, 1]} : vector<8x512xf32> to vector<8x128xf32>
    %271 = math.tanh %270 : vector<8x128xf32>
    %272 = vector.extract_strided_slice %257 {offsets = [0, 384], sizes = [8, 128], strides = [1, 1]} : vector<8x512xf32> to vector<8x128xf32>
    %273 = arith.negf %272 : vector<8x128xf32>
    %274 = math.exp %273 : vector<8x128xf32>
    %cst_78 = arith.constant 1.000000e+00 : f32
    %275 = vector.broadcast %cst_78 : f32 to vector<8x128xf32>
    %276 = arith.addf %275, %274 : vector<8x128xf32>
    %277 = arith.divf %275, %276 : vector<8x128xf32>
    %278 = arith.mulf %269, %246 : vector<8x128xf32>
    %279 = arith.mulf %263, %271 : vector<8x128xf32>
    %280 = arith.addf %278, %279 : vector<8x128xf32>
    %281 = math.tanh %280 : vector<8x128xf32>
    %282 = arith.mulf %277, %281 : vector<8x128xf32>
    %283 = arith.index_cast %c7_i32 : i32 to index
    %c0_79 = arith.constant 0 : index
    %c0_80 = arith.constant 0 : index
    %284 = vector.load %arg6[%283, %c0_79, %c0_80] : memref<8x8x128xf32, #tpu.memory_space<vmem>>, vector<1x8x128xf32>
    %285 = vector.shape_cast %284 : vector<1x8x128xf32> to vector<8x128xf32>
    %286 = vector.shape_cast %282 : vector<8x128xf32> to vector<1x8x128xf32>
    tpu.vector_store %arg6[%283, %c0_79, %c0_80], %286 {strides = array<i32>} : memref<8x8x128xf32, #tpu.memory_space<vmem>>, vector<1x8x128xf32>,
    %c8_i32 = arith.constant 8 : i32
    %c0_81 = arith.constant 0 : index
    %c0_82 = arith.constant 0 : index
    %287 = vector.load %arg7[%c0_81, %c0_82] : memref<8x128xf32, #tpu.memory_space<vmem>>, vector<8x128xf32>
    tpu.vector_store %arg7[%c0_81, %c0_82], %282 {strides = array<i32>} : memref<8x128xf32, #tpu.memory_space<vmem>>, vector<8x128xf32>,
    %c0_83 = arith.constant 0 : index
    %c0_84 = arith.constant 0 : index
    %288 = vector.load %arg8[%c0_83, %c0_84] : memref<8x128xf32, #tpu.memory_space<vmem>>, vector<8x128xf32>
    tpu.vector_store %arg8[%c0_83, %c0_84], %280 {strides = array<i32>} : memref<8x128xf32, #tpu.memory_space<vmem>>, vector<8x128xf32>,
    return
  }
  func.func @transform_0(%arg0: i32, %arg1: i32) -> (i32, i32, i32) {
    %c0_i32 = arith.constant 0 : i32
    %c0_i32_0 = arith.constant 0 : i32
    return %arg1, %arg0, %c0_i32 : i32, i32, i32
  }
  func.func @transform_1(%arg0: i32, %arg1: i32) -> (i32, i32) {
    %c0_i32 = arith.constant 0 : i32
    %c0_i32_0 = arith.constant 0 : i32
    %c0_i32_1 = arith.constant 0 : i32
    return %c0_i32, %c0_i32_0 : i32, i32
  }
  func.func @transform_2(%arg0: i32, %arg1: i32) -> (i32, i32) {
    %c0_i32 = arith.constant 0 : i32
    %c0_i32_0 = arith.constant 0 : i32
    %c0_i32_1 = arith.constant 0 : i32
    return %c0_i32, %c0_i32_0 : i32, i32
  }
  func.func @transform_3(%arg0: i32, %arg1: i32) -> (i32, i32) {
    %c0_i32 = arith.constant 0 : i32
    %c0_i32_0 = arith.constant 0 : i32
    %c0_i32_1 = arith.constant 0 : i32
    return %c0_i32, %c0_i32_0 : i32, i32
  }
  func.func @transform_4(%arg0: i32, %arg1: i32) -> (i32, i32, i32) {
    %c0_i32 = arith.constant 0 : i32
    %c0_i32_0 = arith.constant 0 : i32
    return %arg1, %arg0, %c0_i32 : i32, i32, i32
  }
}

</mosaic_0001>

<llo_original>
// kernel: baseline_lstm_forward.3
$region0: #{baseline_lstm_forward.3}
  #allocation0 [shape = 'u32[]', space=smem, size = 0x4, offset = 0x4, fixed_abs, tag = 'smem constant byte address 0x4 - core index']
  #allocation1 [shape = 'u32[144,128]{1,0:T(1,128)}', space=vmem, size = 0x12000, scoped, tag = 'internal scratch']
  #allocation2 [shape = 'f32[8,128]{1,0:T(8,128)}', space=vmem, size = 0x1000, scoped, tag = 'scratch operand']
  #allocation3 [shape = 'f32[8,128]{1,0:T(8,128)}', space=vmem, size = 0x1000, scoped, tag = 'scratch operand']
  #allocation4 [shape = 'f32[8,8,512]{2,1,0:T(8,128)}', space=vmem, size = 0x20000, scoped, tag = 'scratch operand']
  %s0 = inlined_call_operand.vmem [shape: f32[8,8,128], index: 0, kind: input, shape index: {}]
  %s1 = inlined_call_operand.vmem [shape: f32[128,512], index: 1, kind: input, shape index: {}]
  %s2 = inlined_call_operand.vmem [shape: f32[128,512], index: 2, kind: input, shape index: {}]
  %s3 = inlined_call_operand.vmem [shape: f32[1,512], index: 3, kind: input, shape index: {}]
  %s4 = inlined_call_operand.vmem [shape: f32[128,128], index: 4, kind: input, shape index: {}]
  %s5 = inlined_call_operand.vmem [shape: f32[1,128], index: 5, kind: input, shape index: {}]
  %s6 = inlined_call_operand.vmem [shape: f32[8,128], index: 6, kind: output, shape index: {}]
  %s7 = sld [smem:[#allocation0]]
  $region42: #{baseline_lstm_forward.3} parent=0
    _
  %s9 = ssub.s32 1, %s7
  %s10 = scalar_select 0, %s9, %s7
  // Predicated region
  $region2: #{baseline_lstm_forward.3} parent=0 // pred_check
    _
  $region3: #{baseline_lstm_forward.3} parent=0 // pred_check_branch
    %12 = sbr.rel (0) target = $region5
  $region4: #{baseline_lstm_forward.3} parent=0 // pred_region
    _
  $region5: #{baseline_lstm_forward.3} parent=0 // pred_fallthru
    _
  // Predicated region
  $region6: #{baseline_lstm_forward.3} parent=0 // pred_check
    _
  $region7: #{baseline_lstm_forward.3} parent=0 // pred_check_branch
    %14 = sbr.rel (0) target = $region9
  $region8: #{baseline_lstm_forward.3} parent=0 // pred_region
    _
  $region9: #{baseline_lstm_forward.3} parent=0 // pred_fallthru
    _
  // Predicated region
  $region10: #{baseline_lstm_forward.3} parent=0 // pred_check
    _
  $region11: #{baseline_lstm_forward.3} parent=0 // pred_check_branch
    %16 = sbr.rel (0) target = $region13
  $region12: #{baseline_lstm_forward.3} parent=0 // pred_region
    _
  $region13: #{baseline_lstm_forward.3} parent=0 // pred_fallthru
    _
  // Predicated region
  $region14: #{baseline_lstm_forward.3} parent=0 // pred_check
    _
  $region15: #{baseline_lstm_forward.3} parent=0 // pred_check_branch
    %18 = sbr.rel (0) target = $region17
  $region16: #{baseline_lstm_forward.3} parent=0 // pred_region
    _
  $region17: #{baseline_lstm_forward.3} parent=0 // pred_fallthru
    _
  // Predicated region
  $region18: #{baseline_lstm_forward.3} parent=0 // pred_check
    _
  $region19: #{baseline_lstm_forward.3} parent=0 // pred_check_branch
    %20 = sbr.rel (0) target = $region21
  $region20: #{baseline_lstm_forward.3} parent=0 // pred_region
    _
  $region21: #{baseline_lstm_forward.3} parent=0 // pred_fallthru
    _
  // Predicated region
  $region22: #{baseline_lstm_forward.3} parent=0 // pred_check
    _
  $region23: #{baseline_lstm_forward.3} parent=0 // pred_check_branch
    %22 = sbr.rel (0) target = $region25
  $region24: #{baseline_lstm_forward.3} parent=0 // pred_region
    _
  $region25: #{baseline_lstm_forward.3} parent=0 // pred_fallthru
    _
  %p23 = scmp.eq.s32.totalorder 0, 0
  // Predicated region
  $region26: #{baseline_lstm_forward.3} parent=0 // pred_check
    %p24 = pneg %p23
  $region27: #{baseline_lstm_forward.3} parent=0 // pred_check_branch
    %26 = sbr.rel (%p24) target = $region29
  $region28: #{baseline_lstm_forward.3} parent=0 // pred_region
    %27 = vst [vmem:[#allocation2] sm:$0xff] 0.0
    %28 = vst [vmem:[#allocation3] sm:$0xff] 0.0
  $region29: #{baseline_lstm_forward.3} parent=0 // pred_fallthru
    _
  %v29 = vld [vmem:[%s0] sm:$0xff]
  %v30 = vld [vmem:[%s0 + $0x8] sm:$0xff]
  %v31 = vld [vmem:[%s0 + $0x10] sm:$0xff]
  %v32 = vld [vmem:[%s0 + $0x18] sm:$0xff]
  %v33 = vld [vmem:[%s0 + $0x20] sm:$0xff]
  %v34 = vld [vmem:[%s0 + $0x28] sm:$0xff]
  %v35 = vld [vmem:[%s0 + $0x30] sm:$0xff]
  %v36 = vld [vmem:[%s0 + $0x38] sm:$0xff]
  %v37 = vld [vmem:[%s1] sm:$0xff]
  %v38 = vld [vmem:[%s1 + $0x8] sm:$0xff]
  %v39 = vld [vmem:[%s1 + $0x10] sm:$0xff]
  %v40 = vld [vmem:[%s1 + $0x18] sm:$0xff]
  %v41 = vld [vmem:[%s1 + $0x20] sm:$0xff]
  %v42 = vld [vmem:[%s1 + $0x28] sm:$0xff]
  %v43 = vld [vmem:[%s1 + $0x30] sm:$0xff]
  %v44 = vld [vmem:[%s1 + $0x38] sm:$0xff]
  %v45 = vld [vmem:[%s1 + $0x40] sm:$0xff]
  %v46 = vld [vmem:[%s1 + $0x48] sm:$0xff]
  %v47 = vld [vmem:[%s1 + $0x50] sm:$0xff]
  %v48 = vld [vmem:[%s1 + $0x58] sm:$0xff]
  %v49 = vld [vmem:[%s1 + $0x60] sm:$0xff]
  %v50 = vld [vmem:[%s1 + $0x68] sm:$0xff]
  %v51 = vld [vmem:[%s1 + $0x70] sm:$0xff]
  %v52 = vld [vmem:[%s1 + $0x78] sm:$0xff]
  %v53 = vld [vmem:[%s1 + $0x80] sm:$0xff]
  %v54 = vld [vmem:[%s1 + $0x88] sm:$0xff]
  %v55 = vld [vmem:[%s1 + $0x90] sm:$0xff]
  %v56 = vld [vmem:[%s1 + $0x98] sm:$0xff]
  %v57 = vld [vmem:[%s1 + $0xa0] sm:$0xff]
  %v58 = vld [vmem:[%s1 + $0xa8] sm:$0xff]
  %v59 = vld [vmem:[%s1 + $0xb0] sm:$0xff]
  %v60 = vld [vmem:[%s1 + $0xb8] sm:$0xff]
  %v61 = vld [vmem:[%s1 + $0xc0] sm:$0xff]
  %v62 = vld [vmem:[%s1 + $0xc8] sm:$0xff]
  %v63 = vld [vmem:[%s1 + $0xd0] sm:$0xff]
  %v64 = vld [vmem:[%s1 + $0xd8] sm:$0xff]
  %v65 = vld [vmem:[%s1 + $0xe0] sm:$0xff]
  %v66 = vld [vmem:[%s1 + $0xe8] sm:$0xff]
  %v67 = vld [vmem:[%s1 + $0xf0] sm:$0xff]
  %v68 = vld [vmem:[%s1 + $0xf8] sm:$0xff]
  %v69 = vld [vmem:[%s1 + $0x100] sm:$0xff]
  %v70 = vld [vmem:[%s1 + $0x108] sm:$0xff]
  %v71 = vld [vmem:[%s1 + $0x110] sm:$0xff]
  %v72 = vld [vmem:[%s1 + $0x118] sm:$0xff]
  %v73 = vld [vmem:[%s1 + $0x120] sm:$0xff]
  %v74 = vld [vmem:[%s1 + $0x128] sm:$0xff]
  %v75 = vld [vmem:[%s1 + $0x130] sm:$0xff]
  %v76 = vld [vmem:[%s1 + $0x138] sm:$0xff]
  %v77 = vld [vmem:[%s1 + $0x140] sm:$0xff]
  %v78 = vld [vmem:[%s1 + $0x148] sm:$0xff]
  %v79 = vld [vmem:[%s1 + $0x150] sm:$0xff]
  %v80 = vld [vmem:[%s1 + $0x158] sm:$0xff]
  %v81 = vld [vmem:[%s1 + $0x160] sm:$0xff]
  %v82 = vld [vmem:[%s1 + $0x168] sm:$0xff]
  %v83 = vld [vmem:[%s1 + $0x170] sm:$0xff]
  %v84 = vld [vmem:[%s1 + $0x178] sm:$0xff]
  %v85 = vld [vmem:[%s1 + $0x180] sm:$0xff]
  %v86 = vld [vmem:[%s1 + $0x188] sm:$0xff]
  %v87 = vld [vmem:[%s1 + $0x190] sm:$0xff]
  %v88 = vld [vmem:[%s1 + $0x198] sm:$0xff]
  %v89 = vld [vmem:[%s1 + $0x1a0] sm:$0xff]
  %v90 = vld [vmem:[%s1 + $0x1a8] sm:$0xff]
  %v91 = vld [vmem:[%s1 + $0x1b0] sm:$0xff]
  %v92 = vld [vmem:[%s1 + $0x1b8] sm:$0xff]
  %v93 = vld [vmem:[%s1 + $0x1c0] sm:$0xff]
  %v94 = vld [vmem:[%s1 + $0x1c8] sm:$0xff]
  %v95 = vld [vmem:[%s1 + $0x1d0] sm:$0xff]
  %v96 = vld [vmem:[%s1 + $0x1d8] sm:$0xff]
  %v97 = vld [vmem:[%s1 + $0x1e0] sm:$0xff]
  %v98 = vld [vmem:[%s1 + $0x1e8] sm:$0xff]
  %v99 = vld [vmem:[%s1 + $0x1f0] sm:$0xff]
  %v100 = vld [vmem:[%s1 + $0x1f8] sm:$0xff]
  %v101 = vld [vmem:[%s3] sm:$0xf]
  %v103 = vlaneseq
  %v104 = vshrl.u32 %v103, 7
  %v105 = vsub.s32 0, %v104
  %v106 = vrot.slane %v101, %v105
  %v107 = vlaneseq
  %v108 = vshrl.u32 %v107, 7
  %v109 = vsub.s32 1, %v108
  %v110 = vrot.slane %v101, %v109
  %v111 = vlaneseq
  %v112 = vshrl.u32 %v111, 7
  %v113 = vsub.s32 2, %v112
  %v114 = vrot.slane %v101, %v113
  %v115 = vlaneseq
  %v116 = vshrl.u32 %v115, 7
  %v117 = vsub.s32 3, %v116
  %v118 = vrot.slane %v101, %v117
  %123 = vmatprep.subr.mxu0 %v98
  %124 = vmatpush1.msra.mxu0 %v97
  %125 = vmatprep.subr.mxu0 %v94
  %126 = vmatpush1.msra.mxu0 %v93
  %127 = vmatprep.subr.mxu0 %v90
  %128 = vmatpush1.msra.mxu0 %v89
  %129 = vmatprep.subr.mxu0 %v86
  %130 = vmatpush1.msra.mxu0 %v85
  %131 = vmatprep.subr.mxu0 %v82
  %132 = vmatpush1.msra.mxu0 %v81
  %133 = vmatprep.subr.mxu0 %v78
  %134 = vmatpush1.msra.mxu0 %v77
  %135 = vmatprep.subr.mxu0 %v74
  %136 = vmatpush1.msra.mxu0 %v73
  %137 = vmatprep.subr.mxu0 %v70
  %138 = vmatpush1.msra.mxu0 %v69
  %139 = vmatprep.subr.mxu0 %v66
  %140 = vmatpush1.msra.mxu0 %v65
  %141 = vmatprep.subr.mxu0 %v62
  %142 = vmatpush1.msra.mxu0 %v61
  %143 = vmatprep.subr.mxu0 %v58
  %144 = vmatpush1.msra.mxu0 %v57
  %145 = vmatprep.subr.mxu0 %v54
  %146 = vmatpush1.msra.mxu0 %v53
  %147 = vmatprep.subr.mxu0 %v50
  %148 = vmatpush1.msra.mxu0 %v49
  %149 = vmatprep.subr.mxu0 %v46
  %150 = vmatpush1.msra.mxu0 %v45
  %151 = vmatprep.subr.mxu0 %v42
  %152 = vmatpush1.msra.mxu0 %v41
  %153 = vmatprep.subr.mxu0 %v38
  %154 = vmatpush1.msra.mxu0 %v37
  %155 = vmatprep.subr.mxu0 0.0
  %156 = vmatpush2.msra.mxu0 0.0
  %157 = vmatprep.subr.mxu0 0.0
  %158 = vmatpush2.msra.mxu0 0.0
  %159 = vmatprep.subr.mxu0 0.0
  %160 = vmatpush2.msra.mxu0 0.0
  %161 = vmatprep.subr.mxu0 0.0
  %162 = vmatpush2.msra.mxu0 0.0
  %163 = vmatprep.subr.mxu0 0.0
  %164 = vmatpush2.msra.mxu0 0.0
  %165 = vmatprep.subr.mxu0 0.0
  %166 = vmatpush2.msra.mxu0 0.0
  %167 = vmatprep.subr.mxu0 0.0
  %168 = vmatpush2.msra.mxu0 0.0
  %169 = vmatprep.subr.mxu0 0.0
  %170 = vmatpush2.msra.mxu0 0.0
  %171 = vmatprep.subr.mxu0 0.0
  %172 = vmatpush2.msra.mxu0 0.0
  %173 = vmatprep.subr.mxu0 0.0
  %174 = vmatpush2.msra.mxu0 0.0
  %175 = vmatprep.subr.mxu0 0.0
  %176 = vmatpush2.msra.mxu0 0.0
  %177 = vmatprep.subr.mxu0 0.0
  %178 = vmatpush2.msra.mxu0 0.0
  %179 = vmatprep.subr.mxu0 0.0
  %180 = vmatpush2.msra.mxu0 0.0
  %181 = vmatprep.subr.mxu0 0.0
  %182 = vmatpush2.msra.mxu0 0.0
  %183 = vmatprep.subr.mxu0 0.0
  %184 = vmatpush2.msra.mxu0 0.0
  %185 = vmatprep.subr.mxu0 0.0
  %186 = vmatpush2.msra.mxu0 0.0
  %187 = vmatprep.mubr.f32.mxu0 0.0
  %188 = vmatmul.mubr.f32.gmra.mxu0 %v29
  %v189 = vpop.f32.mrf.mxu0
  %v190 = vadd.f32 %v106, %v189
  %v191 = vpop.f32.mrf.mxu0
  %v192 = vadd.f32 %v110, %v191
  %193 = vmatprep.mubr.f32.mxu0 0.0
  %194 = vmatmul.mubr.f32.gmra.mxu0 %v30
  %v195 = vpop.f32.mrf.mxu0
  %v196 = vadd.f32 %v106, %v195
  %v197 = vpop.f32.mrf.mxu0
  %v198 = vadd.f32 %v110, %v197
  %199 = vmatprep.mubr.f32.mxu0 0.0
  %200 = vmatmul.mubr.f32.gmra.mxu0 %v31
  %v201 = vpop.f32.mrf.mxu0
  %v202 = vadd.f32 %v106, %v201
  %v203 = vpop.f32.mrf.mxu0
  %v204 = vadd.f32 %v110, %v203
  %205 = vmatprep.mubr.f32.mxu0 0.0
  %206 = vmatmul.mubr.f32.gmra.mxu0 %v32
  %v207 = vpop.f32.mrf.mxu0
  %v208 = vadd.f32 %v106, %v207
  %v209 = vpop.f32.mrf.mxu0
  %v210 = vadd.f32 %v110, %v209
  %211 = vmatprep.mubr.f32.mxu0 0.0
  %212 = vmatmul.mubr.f32.gmra.mxu0 %v33
  %v213 = vpop.f32.mrf.mxu0
  %v214 = vadd.f32 %v106, %v213
  %v215 = vpop.f32.mrf.mxu0
  %v216 = vadd.f32 %v110, %v215
  %217 = vmatprep.mubr.f32.mxu0 0.0
  %218 = vmatmul.mubr.f32.gmra.mxu0 %v34
  %v219 = vpop.f32.mrf.mxu0
  %v220 = vadd.f32 %v106, %v219
  %v221 = vpop.f32.mrf.mxu0
  %v222 = vadd.f32 %v110, %v221
  %223 = vmatprep.mubr.f32.mxu0 0.0
  %224 = vmatmul.mubr.f32.gmra.mxu0 %v35
  %v225 = vpop.f32.mrf.mxu0
  %v226 = vadd.f32 %v106, %v225
  %v227 = vpop.f32.mrf.mxu0
  %v228 = vadd.f32 %v110, %v227
  %229 = vmatprep.mubr.f32.mxu0 0.0
  %230 = vmatmul.mubr.f32.gmra.mxu0 %v36
  %v231 = vpop.f32.mrf.mxu0
  %v232 = vadd.f32 %v106, %v231
  %v233 = vpop.f32.mrf.mxu0
  %v234 = vadd.f32 %v110, %v233
  %235 = vdwg.mxu0
  %236 = vmatprep.subr.mxu0 %v100
  %237 = vmatpush1.msra.mxu0 %v99
  %238 = vmatprep.subr.mxu0 %v96
  %239 = vmatpush1.msra.mxu0 %v95
  %240 = vmatprep.subr.mxu0 %v92
  %241 = vmatpush1.msra.mxu0 %v91
  %242 = vmatprep.subr.mxu0 %v88
  %243 = vmatpush1.msra.mxu0 %v87
  %244 = vmatprep.subr.mxu0 %v84
  %245 = vmatpush1.msra.mxu0 %v83
  %246 = vmatprep.subr.mxu0 %v80
  %247 = vmatpush1.msra.mxu0 %v79
  %248 = vmatprep.subr.mxu0 %v76
  %249 = vmatpush1.msra.mxu0 %v75
  %250 = vmatprep.subr.mxu0 %v72
  %251 = vmatpush1.msra.mxu0 %v71
  %252 = vmatprep.subr.mxu0 %v68
  %253 = vmatpush1.msra.mxu0 %v67
  %254 = vmatprep.subr.mxu0 %v64
  %255 = vmatpush1.msra.mxu0 %v63
  %256 = vmatprep.subr.mxu0 %v60
  %257 = vmatpush1.msra.mxu0 %v59
  %258 = vmatprep.subr.mxu0 %v56
  %259 = vmatpush1.msra.mxu0 %v55
  %260 = vmatprep.subr.mxu0 %v52
  %261 = vmatpush1.msra.mxu0 %v51
  %262 = vmatprep.subr.mxu0 %v48
  %263 = vmatpush1.msra.mxu0 %v47
  %264 = vmatprep.subr.mxu0 %v44
  %265 = vmatpush1.msra.mxu0 %v43
  %266 = vmatprep.subr.mxu0 %v40
  %267 = vmatpush1.msra.mxu0 %v39
  %268 = vmatprep.subr.mxu0 0.0
  %269 = vmatpush2.msra.mxu0 0.0
  %270 = vmatprep.subr.mxu0 0.0
  %271 = vmatpush2.msra.mxu0 0.0
  %272 = vmatprep.subr.mxu0 0.0
  %273 = vmatpush2.msra.mxu0 0.0
  %274 = vmatprep.subr.mxu0 0.0
  %275 = vmatpush2.msra.mxu0 0.0
  %276 = vmatprep.subr.mxu0 0.0
  %277 = vmatpush2.msra.mxu0 0.0
  %278 = vmatprep.subr.mxu0 0.0
  %279 = vmatpush2.msra.mxu0 0.0
  %280 = vmatprep.subr.mxu0 0.0
  %281 = vmatpush2.msra.mxu0 0.0
  %282 = vmatprep.subr.mxu0 0.0
  %283 = vmatpush2.msra.mxu0 0.0
  %284 = vmatprep.subr.mxu0 0.0
  %285 = vmatpush2.msra.mxu0 0.0
  %286 = vmatprep.subr.mxu0 0.0
  %287 = vmatpush2.msra.mxu0 0.0
  %288 = vmatprep.subr.mxu0 0.0
  %289 = vmatpush2.msra.mxu0 0.0
  %290 = vmatprep.subr.mxu0 0.0
  %291 = vmatpush2.msra.mxu0 0.0
  %292 = vmatprep.subr.mxu0 0.0
  %293 = vmatpush2.msra.mxu0 0.0
  %294 = vmatprep.subr.mxu0 0.0
  %295 = vmatpush2.msra.mxu0 0.0
  %296 = vmatprep.subr.mxu0 0.0
  %297 = vmatpush2.msra.mxu0 0.0
  %298 = vmatprep.subr.mxu0 0.0
  %299 = vmatpush2.msra.mxu0 0.0
  %300 = vmatprep.mubr.f32.mxu0 0.0
  %301 = vmatmul.mubr.f32.gmra.mxu0 %v29
  %v302 = vpop.f32.mrf.mxu0
  %v303 = vadd.f32 %v114, %v302
  %v304 = vpop.f32.mrf.mxu0
  %v305 = vadd.f32 %v118, %v304
  %306 = vmatprep.mubr.f32.mxu0 0.0
  %307 = vmatmul.mubr.f32.gmra.mxu0 %v30
  %v308 = vpop.f32.mrf.mxu0
  %v309 = vadd.f32 %v114, %v308
  %v310 = vpop.f32.mrf.mxu0
  %v311 = vadd.f32 %v118, %v310
  %312 = vmatprep.mubr.f32.mxu0 0.0
  %313 = vmatmul.mubr.f32.gmra.mxu0 %v31
  %v314 = vpop.f32.mrf.mxu0
  %v315 = vadd.f32 %v114, %v314
  %v316 = vpop.f32.mrf.mxu0
  %v317 = vadd.f32 %v118, %v316
  %318 = vmatprep.mubr.f32.mxu0 0.0
  %319 = vmatmul.mubr.f32.gmra.mxu0 %v32
  %v320 = vpop.f32.mrf.mxu0
  %v321 = vadd.f32 %v114, %v320
  %v322 = vpop.f32.mrf.mxu0
  %v323 = vadd.f32 %v118, %v322
  %324 = vmatprep.mubr.f32.mxu0 0.0
  %325 = vmatmul.mubr.f32.gmra.mxu0 %v33
  %v326 = vpop.f32.mrf.mxu0
  %v327 = vadd.f32 %v114, %v326
  %v328 = vpop.f32.mrf.mxu0
  %v329 = vadd.f32 %v118, %v328
  %330 = vmatprep.mubr.f32.mxu0 0.0
  %331 = vmatmul.mubr.f32.gmra.mxu0 %v34
  %v332 = vpop.f32.mrf.mxu0
  %v333 = vadd.f32 %v114, %v332
  %v334 = vpop.f32.mrf.mxu0
  %v335 = vadd.f32 %v118, %v334
  %336 = vmatprep.mubr.f32.mxu0 0.0
  %337 = vmatmul.mubr.f32.gmra.mxu0 %v35
  %v338 = vpop.f32.mrf.mxu0
  %v339 = vadd.f32 %v114, %v338
  %v340 = vpop.f32.mrf.mxu0
  %v341 = vadd.f32 %v118, %v340
  %342 = vmatprep.mubr.f32.mxu0 0.0
  %343 = vmatmul.mubr.f32.gmra.mxu0 %v36
  %v344 = vpop.f32.mrf.mxu0
  %v345 = vadd.f32 %v114, %v344
  %v346 = vpop.f32.mrf.mxu0
  %v347 = vadd.f32 %v118, %v346
  %348 = vdwg.mxu0
  %349 = vst [vmem:[#allocation4] sm:$0xff] %v190
  %350 = vst [vmem:[#allocation4 + $0x8] sm:$0xff] %v192
  %351 = vst [vmem:[#allocation4 + $0x10] sm:$0xff] %v303
  %352 = vst [vmem:[#allocation4 + $0x18] sm:$0xff] %v305
  %353 = vst [vmem:[#allocation4 + $0x20] sm:$0xff] %v196
  %354 = vst [vmem:[#allocation4 + $0x28] sm:$0xff] %v198
  %355 = vst [vmem:[#allocation4 + $0x30] sm:$0xff] %v309
  %356 = vst [vmem:[#allocation4 + $0x38] sm:$0xff] %v311
  %357 = vst [vmem:[#allocation4 + $0x40] sm:$0xff] %v202
  %358 = vst [vmem:[#allocation4 + $0x48] sm:$0xff] %v204
  %359 = vst [vmem:[#allocation4 + $0x50] sm:$0xff] %v315
  %360 = vst [vmem:[#allocation4 + $0x58] sm:$0xff] %v317
  %361 = vst [vmem:[#allocation4 + $0x60] sm:$0xff] %v208
  %362 = vst [vmem:[#allocation4 + $0x68] sm:$0xff] %v210
  %363 = vst [vmem:[#allocation4 + $0x70] sm:$0xff] %v321
  %364 = vst [vmem:[#allocation4 + $0x78] sm:$0xff] %v323
  %365 = vst [vmem:[#allocation4 + $0x80] sm:$0xff] %v214
  %366 = vst [vmem:[#allocation4 + $0x88] sm:$0xff] %v216
  %367 = vst [vmem:[#allocation4 + $0x90] sm:$0xff] %v327
  %368 = vst [vmem:[#allocation4 + $0x98] sm:$0xff] %v329
  %369 = vst [vmem:[#allocation4 + $0xa0] sm:$0xff] %v220
  %370 = vst [vmem:[#allocation4 + $0xa8] sm:$0xff] %v222
  %371 = vst [vmem:[#allocation4 + $0xb0] sm:$0xff] %v333
  %372 = vst [vmem:[#allocation4 + $0xb8] sm:$0xff] %v335
  %373 = vst [vmem:[#allocation4 + $0xc0] sm:$0xff] %v226
  %374 = vst [vmem:[#allocation4 + $0xc8] sm:$0xff] %v228
  %375 = vst [vmem:[#allocation4 + $0xd0] sm:$0xff] %v339
  %376 = vst [vmem:[#allocation4 + $0xd8] sm:$0xff] %v341
  %377 = vst [vmem:[#allocation4 + $0xe0] sm:$0xff] %v232
  %378 = vst [vmem:[#allocation4 + $0xe8] sm:$0xff] %v234
  %379 = vst [vmem:[#allocation4 + $0xf0] sm:$0xff] %v345
  %380 = vst [vmem:[#allocation4 + $0xf8] sm:$0xff] %v347
  %v381 = vld [vmem:[%s2] sm:$0xff]
  %v382 = vld [vmem:[%s2 + $0x8] sm:$0xff]
  %v383 = vld [vmem:[%s2 + $0x10] sm:$0xff]
  %v384 = vld [vmem:[%s2 + $0x18] sm:$0xff]
  %v385 = vld [vmem:[%s2 + $0x20] sm:$0xff]
  %v386 = vld [vmem:[%s2 + $0x28] sm:$0xff]
  %v387 = vld [vmem:[%s2 + $0x30] sm:$0xff]
  %v388 = vld [vmem:[%s2 + $0x38] sm:$0xff]
  %v389 = vld [vmem:[%s2 + $0x40] sm:$0xff]
  %v390 = vld [vmem:[%s2 + $0x48] sm:$0xff]
  %v391 = vld [vmem:[%s2 + $0x50] sm:$0xff]
  %v392 = vld [vmem:[%s2 + $0x58] sm:$0xff]
  %v393 = vld [vmem:[%s2 + $0x60] sm:$0xff]
  %v394 = vld [vmem:[%s2 + $0x68] sm:$0xff]
  %v395 = vld [vmem:[%s2 + $0x70] sm:$0xff]
  %v396 = vld [vmem:[%s2 + $0x78] sm:$0xff]
  %v397 = vld [vmem:[%s2 + $0x80] sm:$0xff]
  %v398 = vld [vmem:[%s2 + $0x88] sm:$0xff]
  %v399 = vld [vmem:[%s2 + $0x90] sm:$0xff]
  %v400 = vld [vmem:[%s2 + $0x98] sm:$0xff]
  %v401 = vld [vmem:[%s2 + $0xa0] sm:$0xff]
  %v402 = vld [vmem:[%s2 + $0xa8] sm:$0xff]
  %v403 = vld [vmem:[%s2 + $0xb0] sm:$0xff]
  %v404 = vld [vmem:[%s2 + $0xb8] sm:$0xff]
  %v405 = vld [vmem:[%s2 + $0xc0] sm:$0xff]
  %v406 = vld [vmem:[%s2 + $0xc8] sm:$0xff]
  %v407 = vld [vmem:[%s2 + $0xd0] sm:$0xff]
  %v408 = vld [vmem:[%s2 + $0xd8] sm:$0xff]
  %v409 = vld [vmem:[%s2 + $0xe0] sm:$0xff]
  %v410 = vld [vmem:[%s2 + $0xe8] sm:$0xff]
  %v411 = vld [vmem:[%s2 + $0xf0] sm:$0xff]
  %v412 = vld [vmem:[%s2 + $0xf8] sm:$0xff]
  %v413 = vld [vmem:[%s2 + $0x100] sm:$0xff]
  %v414 = vld [vmem:[%s2 + $0x108] sm:$0xff]
  %v415 = vld [vmem:[%s2 + $0x110] sm:$0xff]
  %v416 = vld [vmem:[%s2 + $0x118] sm:$0xff]
  %v417 = vld [vmem:[%s2 + $0x120] sm:$0xff]
  %v418 = vld [vmem:[%s2 + $0x128] sm:$0xff]
  %v419 = vld [vmem:[%s2 + $0x130] sm:$0xff]
  %v420 = vld [vmem:[%s2 + $0x138] sm:$0xff]
  %v421 = vld [vmem:[%s2 + $0x140] sm:$0xff]
  %v422 = vld [vmem:[%s2 + $0x148] sm:$0xff]
  %v423 = vld [vmem:[%s2 + $0x150] sm:$0xff]
  %v424 = vld [vmem:[%s2 + $0x158] sm:$0xff]
  %v425 = vld [vmem:[%s2 + $0x160] sm:$0xff]
  %v426 = vld [vmem:[%s2 + $0x168] sm:$0xff]
  %v427 = vld [vmem:[%s2 + $0x170] sm:$0xff]
  %v428 = vld [vmem:[%s2 + $0x178] sm:$0xff]
  %v429 = vld [vmem:[%s2 + $0x180] sm:$0xff]
  %v430 = vld [vmem:[%s2 + $0x188] sm:$0xff]
  %v431 = vld [vmem:[%s2 + $0x190] sm:$0xff]
  %v432 = vld [vmem:[%s2 + $0x198] sm:$0xff]
  %v433 = vld [vmem:[%s2 + $0x1a0] sm:$0xff]
  %v434 = vld [vmem:[%s2 + $0x1a8] sm:$0xff]
  %v435 = vld [vmem:[%s2 + $0x1b0] sm:$0xff]
  %v436 = vld [vmem:[%s2 + $0x1b8] sm:$0xff]
  %v437 = vld [vmem:[%s2 + $0x1c0] sm:$0xff]
  %v438 = vld [vmem:[%s2 + $0x1c8] sm:$0xff]
  %v439 = vld [vmem:[%s2 + $0x1d0] sm:$0xff]
  %v440 = vld [vmem:[%s2 + $0x1d8] sm:$0xff]
  %v441 = vld [vmem:[%s2 + $0x1e0] sm:$0xff]
  %v442 = vld [vmem:[%s2 + $0x1e8] sm:$0xff]
  %v443 = vld [vmem:[%s2 + $0x1f0] sm:$0xff]
  %v444 = vld [vmem:[%s2 + $0x1f8] sm:$0xff]
  %v445 = vld [vmem:[#allocation2] sm:$0xff]
  %v446 = vld [vmem:[#allocation3] sm:$0xff]
  %v447 = vld [vmem:[#allocation4] sm:$0xff]
  %v448 = vld [vmem:[#allocation4 + $0x8] sm:$0xff]
  %v449 = vld [vmem:[#allocation4 + $0x10] sm:$0xff]
  %v450 = vld [vmem:[#allocation4 + $0x18] sm:$0xff]
  %451 = vmatprep.subr.mxu0 %v442
  %452 = vmatpush1.msra.mxu0 %v441
  %453 = vmatprep.subr.mxu0 %v438
  %454 = vmatpush1.msra.mxu0 %v437
  %455 = vmatprep.subr.mxu0 %v434
  %456 = vmatpush1.msra.mxu0 %v433
  %457 = vmatprep.subr.mxu0 %v430
  %458 = vmatpush1.msra.mxu0 %v429
  %459 = vmatprep.subr.mxu0 %v426
  %460 = vmatpush1.msra.mxu0 %v425
  %461 = vmatprep.subr.mxu0 %v422
  %462 = vmatpush1.msra.mxu0 %v421
  %463 = vmatprep.subr.mxu0 %v418
  %464 = vmatpush1.msra.mxu0 %v417
  %465 = vmatprep.subr.mxu0 %v414
  %466 = vmatpush1.msra.mxu0 %v413
  %467 = vmatprep.subr.mxu0 %v410
  %468 = vmatpush1.msra.mxu0 %v409
  %469 = vmatprep.subr.mxu0 %v406
  %470 = vmatpush1.msra.mxu0 %v405
  %471 = vmatprep.subr.mxu0 %v402
  %472 = vmatpush1.msra.mxu0 %v401
  %473 = vmatprep.subr.mxu0 %v398
  %474 = vmatpush1.msra.mxu0 %v397
  %475 = vmatprep.subr.mxu0 %v394
  %476 = vmatpush1.msra.mxu0 %v393
  %477 = vmatprep.subr.mxu0 %v390
  %478 = vmatpush1.msra.mxu0 %v389
  %479 = vmatprep.subr.mxu0 %v386
  %480 = vmatpush1.msra.mxu0 %v385
  %481 = vmatprep.subr.mxu0 %v382
  %482 = vmatpush1.msra.mxu0 %v381
  %483 = vmatprep.subr.mxu0 0.0
  %484 = vmatpush2.msra.mxu0 0.0
  %485 = vmatprep.subr.mxu0 0.0
  %486 = vmatpush2.msra.mxu0 0.0
  %487 = vmatprep.subr.mxu0 0.0
  %488 = vmatpush2.msra.mxu0 0.0
  %489 = vmatprep.subr.mxu0 0.0
  %490 = vmatpush2.msra.mxu0 0.0
  %491 = vmatprep.subr.mxu0 0.0
  %492 = vmatpush2.msra.mxu0 0.0
  %493 = vmatprep.subr.mxu0 0.0
  %494 = vmatpush2.msra.mxu0 0.0
  %495 = vmatprep.subr.mxu0 0.0
  %496 = vmatpush2.msra.mxu0 0.0
  %497 = vmatprep.subr.mxu0 0.0
  %498 = vmatpush2.msra.mxu0 0.0
  %499 = vmatprep.subr.mxu0 0.0
  %500 = vmatpush2.msra.mxu0 0.0
  %501 = vmatprep.subr.mxu0 0.0
  %502 = vmatpush2.msra.mxu0 0.0
  %503 = vmatprep.subr.mxu0 0.0
  %504 = vmatpush2.msra.mxu0 0.0
  %505 = vmatprep.subr.mxu0 0.0
  %506 = vmatpush2.msra.mxu0 0.0
  %507 = vmatprep.subr.mxu0 0.0
  %508 = vmatpush2.msra.mxu0 0.0
  %509 = vmatprep.subr.mxu0 0.0
  %510 = vmatpush2.msra.mxu0 0.0
  %511 = vmatprep.subr.mxu0 0.0
  %512 = vmatpush2.msra.mxu0 0.0
  %513 = vmatprep.subr.mxu0 0.0
  %514 = vmatpush2.msra.mxu0 0.0
  %515 = vmatprep.mubr.f32.mxu0 0.0
  %516 = vmatmul.mubr.f32.gmra.mxu0 %v445
  %v517 = vpop.f32.mrf.mxu0
  %v518 = vadd.f32 0.0, %v517
  %v519 = vpop.f32.mrf.mxu0
  %v520 = vadd.f32 0.0, %v519
  %521 = vdwg.mxu0
  %522 = vmatprep.subr.mxu0 %v444
  %523 = vmatpush1.msra.mxu0 %v443
  %524 = vmatprep.subr.mxu0 %v440
  %525 = vmatpush1.msra.mxu0 %v439
  %526 = vmatprep.subr.mxu0 %v436
  %527 = vmatpush1.msra.mxu0 %v435
  %528 = vmatprep.subr.mxu0 %v432
  %529 = vmatpush1.msra.mxu0 %v431
  %530 = vmatprep.subr.mxu0 %v428
  %531 = vmatpush1.msra.mxu0 %v427
  %532 = vmatprep.subr.mxu0 %v424
  %533 = vmatpush1.msra.mxu0 %v423
  %534 = vmatprep.subr.mxu0 %v420
  %535 = vmatpush1.msra.mxu0 %v419
  %536 = vmatprep.subr.mxu0 %v416
  %537 = vmatpush1.msra.mxu0 %v415
  %538 = vmatprep.subr.mxu0 %v412
  %539 = vmatpush1.msra.mxu0 %v411
  %540 = vmatprep.subr.mxu0 %v408
  %541 = vmatpush1.msra.mxu0 %v407
  %542 = vmatprep.subr.mxu0 %v404
  %543 = vmatpush1.msra.mxu0 %v403
  %544 = vmatprep.subr.mxu0 %v400
  %545 = vmatpush1.msra.mxu0 %v399
  %546 = vmatprep.subr.mxu0 %v396
  %547 = vmatpush1.msra.mxu0 %v395
  %548 = vmatprep.subr.mxu0 %v392
  %549 = vmatpush1.msra.mxu0 %v391
  %550 = vmatprep.subr.mxu0 %v388
  %551 = vmatpush1.msra.mxu0 %v387
  %552 = vmatprep.subr.mxu0 %v384
  %553 = vmatpush1.msra.mxu0 %v383
  %554 = vmatprep.subr.mxu0 0.0
  %555 = vmatpush2.msra.mxu0 0.0
  %556 = vmatprep.subr.mxu0 0.0
  %557 = vmatpush2.msra.mxu0 0.0
  %558 = vmatprep.subr.mxu0 0.0
  %559 = vmatpush2.msra.mxu0 0.0
  %560 = vmatprep.subr.mxu0 0.0
  %561 = vmatpush2.msra.mxu0 0.0
  %562 = vmatprep.subr.mxu0 0.0
  %563 = vmatpush2.msra.mxu0 0.0
  %564 = vmatprep.subr.mxu0 0.0
  %565 = vmatpush2.msra.mxu0 0.0
  %566 = vmatprep.subr.mxu0 0.0
  %567 = vmatpush2.msra.mxu0 0.0
  %568 = vmatprep.subr.mxu0 0.0
  %569 = vmatpush2.msra.mxu0 0.0
  %570 = vmatprep.subr.mxu0 0.0
  %571 = vmatpush2.msra.mxu0 0.0
  %572 = vmatprep.subr.mxu0 0.0
  %573 = vmatpush2.msra.mxu0 0.0
  %574 = vmatprep.subr.mxu0 0.0
  %575 = vmatpush2.msra.mxu0 0.0
  %576 = vmatprep.subr.mxu0 0.0
  %577 = vmatpush2.msra.mxu0 0.0
  %578 = vmatprep.subr.mxu0 0.0
  %579 = vmatpush2.msra.mxu0 0.0
  %580 = vmatprep.subr.mxu0 0.0
  %581 = vmatpush2.msra.mxu0 0.0
  %582 = vmatprep.subr.mxu0 0.0
  %583 = vmatpush2.msra.mxu0 0.0
  %584 = vmatprep.subr.mxu0 0.0
  %585 = vmatpush2.msra.mxu0 0.0
  %586 = vmatprep.mubr.f32.mxu0 0.0
  %587 = vmatmul.mubr.f32.gmra.mxu0 %v445
  %v588 = vpop.f32.mrf.mxu0
  %v589 = vadd.f32 0.0, %v588
  %v590 = vpop.f32.mrf.mxu0
  %v591 = vadd.f32 0.0, %v590
  %592 = vdwg.mxu0
  %v593 = vadd.f32 %v447, %v518
  %v594 = vadd.f32 %v448, %v520
  %v595 = vadd.f32 %v449, %v589
  %v596 = vadd.f32 %v450, %v591
  %v597 = vxor.u32 %v593, 2147483648
  %v598 = vmul.f32 %v597, 1.442695
  %v599 = vpow.pop %v598
  %v600 = vadd.f32 %v599, 1.0
  %v601 = vrcp.pop %v600
  %v602 = vmul.f32 1.0, %v601
  %v603 = vxor.u32 %v594, 2147483648
  %v604 = vmul.f32 %v603, 1.442695
  %v605 = vpow.pop %v604
  %v606 = vadd.f32 %v605, 1.0
  %v607 = vrcp.pop %v606
  %v608 = vmul.f32 1.0, %v607
  %v609 = vtanh.pop %v595
  %v610 = vxor.u32 %v596, 2147483648
  %v611 = vmul.f32 %v610, 1.442695
  %v612 = vpow.pop %v611
  %v613 = vadd.f32 %v612, 1.0
  %v614 = vrcp.pop %v613
  %v615 = vmul.f32 1.0, %v614
  %v616 = vmul.f32 %v608, %v446
  %v617 = vmul.f32 %v602, %v609
  %v618 = vadd.f32 %v616, %v617
  %v619 = vtanh.pop %v618
  %v620 = vmul.f32 %v615, %v619
  %s621 = scalar_lea.vmem [#allocation4], 32
  %v622 = vld [vmem:[%s621] sm:$0xff]
  %v623 = vld [vmem:[%s621 + $0x8] sm:$0xff]
  %v624 = vld [vmem:[%s621 + $0x10] sm:$0xff]
  %v625 = vld [vmem:[%s621 + $0x18] sm:$0xff]
  %626 = vmatprep.subr.mxu0 %v442
  %627 = vmatpush1.msra.mxu0 %v441
  %628 = vmatprep.subr.mxu0 %v438
  %629 = vmatpush1.msra.mxu0 %v437
  %630 = vmatprep.subr.mxu0 %v434
  %631 = vmatpush1.msra.mxu0 %v433
  %632 = vmatprep.subr.mxu0 %v430
  %633 = vmatpush1.msra.mxu0 %v429
  %634 = vmatprep.subr.mxu0 %v426
  %635 = vmatpush1.msra.mxu0 %v425
  %636 = vmatprep.subr.mxu0 %v422
  %637 = vmatpush1.msra.mxu0 %v421
  %638 = vmatprep.subr.mxu0 %v418
  %639 = vmatpush1.msra.mxu0 %v417
  %640 = vmatprep.subr.mxu0 %v414
  %641 = vmatpush1.msra.mxu0 %v413
  %642 = vmatprep.subr.mxu0 %v410
  %643 = vmatpush1.msra.mxu0 %v409
  %644 = vmatprep.subr.mxu0 %v406
  %645 = vmatpush1.msra.mxu0 %v405
  %646 = vmatprep.subr.mxu0 %v402
  %647 = vmatpush1.msra.mxu0 %v401
  %648 = vmatprep.subr.mxu0 %v398
  %649 = vmatpush1.msra.mxu0 %v397
  %650 = vmatprep.subr.mxu0 %v394
  %651 = vmatpush1.msra.mxu0 %v393
  %652 = vmatprep.subr.mxu0 %v390
  %653 = vmatpush1.msra.mxu0 %v389
  %654 = vmatprep.subr.mxu0 %v386
  %655 = vmatpush1.msra.mxu0 %v385
  %656 = vmatprep.subr.mxu0 %v382
  %657 = vmatpush1.msra.mxu0 %v381
  %658 = vmatprep.subr.mxu0 0.0
  %659 = vmatpush2.msra.mxu0 0.0
  %660 = vmatprep.subr.mxu0 0.0
  %661 = vmatpush2.msra.mxu0 0.0
  %662 = vmatprep.subr.mxu0 0.0
  %663 = vmatpush2.msra.mxu0 0.0
  %664 = vmatprep.subr.mxu0 0.0
  %665 = vmatpush2.msra.mxu0 0.0
  %666 = vmatprep.subr.mxu0 0.0
  %667 = vmatpush2.msra.mxu0 0.0
  %668 = vmatprep.subr.mxu0 0.0
  %669 = vmatpush2.msra.mxu0 0.0
  %670 = vmatprep.subr.mxu0 0.0
  %671 = vmatpush2.msra.mxu0 0.0
  %672 = vmatprep.subr.mxu0 0.0
  %673 = vmatpush2.msra.mxu0 0.0
  %674 = vmatprep.subr.mxu0 0.0
  %675 = vmatpush2.msra.mxu0 0.0
  %676 = vmatprep.subr.mxu0 0.0
  %677 = vmatpush2.msra.mxu0 0.0
  %678 = vmatprep.subr.mxu0 0.0
  %679 = vmatpush2.msra.mxu0 0.0
  %680 = vmatprep.subr.mxu0 0.0
  %681 = vmatpush2.msra.mxu0 0.0
  %682 = vmatprep.subr.mxu0 0.0
  %683 = vmatpush2.msra.mxu0 0.0
  %684 = vmatprep.subr.mxu0 0.0
  %685 = vmatpush2.msra.mxu0 0.0
  %686 = vmatprep.subr.mxu0 0.0
  %687 = vmatpush2.msra.mxu0 0.0
  %688 = vmatprep.subr.mxu0 0.0
  %689 = vmatpush2.msra.mxu0 0.0
  %690 = vmatprep.mubr.f32.mxu0 0.0
  %691 = vmatmul.mubr.f32.gmra.mxu0 %v620
  %v692 = vpop.f32.mrf.mxu0
  %v693 = vadd.f32 0.0, %v692
  %v694 = vpop.f32.mrf.mxu0
  %v695 = vadd.f32 0.0, %v694
  %696 = vdwg.mxu0
  %697 = vmatprep.subr.mxu0 %v444
  %698 = vmatpush1.msra.mxu0 %v443
  %699 = vmatprep.subr.mxu0 %v440
  %700 = vmatpush1.msra.mxu0 %v439
  %701 = vmatprep.subr.mxu0 %v436
  %702 = vmatpush1.msra.mxu0 %v435
  %703 = vmatprep.subr.mxu0 %v432
  %704 = vmatpush1.msra.mxu0 %v431
  %705 = vmatprep.subr.mxu0 %v428
  %706 = vmatpush1.msra.mxu0 %v427
  %707 = vmatprep.subr.mxu0 %v424
  %708 = vmatpush1.msra.mxu0 %v423
  %709 = vmatprep.subr.mxu0 %v420
  %710 = vmatpush1.msra.mxu0 %v419
  %711 = vmatprep.subr.mxu0 %v416
  %712 = vmatpush1.msra.mxu0 %v415
  %713 = vmatprep.subr.mxu0 %v412
  %714 = vmatpush1.msra.mxu0 %v411
  %715 = vmatprep.subr.mxu0 %v408
  %716 = vmatpush1.msra.mxu0 %v407
  %717 = vmatprep.subr.mxu0 %v404
  %718 = vmatpush1.msra.mxu0 %v403
  %719 = vmatprep.subr.mxu0 %v400
  %720 = vmatpush1.msra.mxu0 %v399
  %721 = vmatprep.subr.mxu0 %v396
  %722 = vmatpush1.msra.mxu0 %v395
  %723 = vmatprep.subr.mxu0 %v392
  %724 = vmatpush1.msra.mxu0 %v391
  %725 = vmatprep.subr.mxu0 %v388
  %726 = vmatpush1.msra.mxu0 %v387
  %727 = vmatprep.subr.mxu0 %v384
  %728 = vmatpush1.msra.mxu0 %v383
  %729 = vmatprep.subr.mxu0 0.0
  %730 = vmatpush2.msra.mxu0 0.0
  %731 = vmatprep.subr.mxu0 0.0
  %732 = vmatpush2.msra.mxu0 0.0
  %733 = vmatprep.subr.mxu0 0.0
  %734 = vmatpush2.msra.mxu0 0.0
  %735 = vmatprep.subr.mxu0 0.0
  %736 = vmatpush2.msra.mxu0 0.0
  %737 = vmatprep.subr.mxu0 0.0
  %738 = vmatpush2.msra.mxu0 0.0
  %739 = vmatprep.subr.mxu0 0.0
  %740 = vmatpush2.msra.mxu0 0.0
  %741 = vmatprep.subr.mxu0 0.0
  %742 = vmatpush2.msra.mxu0 0.0
  %743 = vmatprep.subr.mxu0 0.0
  %744 = vmatpush2.msra.mxu0 0.0
  %745 = vmatprep.subr.mxu0 0.0
  %746 = vmatpush2.msra.mxu0 0.0
  %747 = vmatprep.subr.mxu0 0.0
  %748 = vmatpush2.msra.mxu0 0.0
  %749 = vmatprep.subr.mxu0 0.0
  %750 = vmatpush2.msra.mxu0 0.0
  %751 = vmatprep.subr.mxu0 0.0
  %752 = vmatpush2.msra.mxu0 0.0
  %753 = vmatprep.subr.mxu0 0.0
  %754 = vmatpush2.msra.mxu0 0.0
  %755 = vmatprep.subr.mxu0 0.0
  %756 = vmatpush2.msra.mxu0 0.0
  %757 = vmatprep.subr.mxu0 0.0
  %758 = vmatpush2.msra.mxu0 0.0
  %759 = vmatprep.subr.mxu0 0.0
  %760 = vmatpush2.msra.mxu0 0.0
  %761 = vmatprep.mubr.f32.mxu0 0.0
  %762 = vmatmul.mubr.f32.gmra.mxu0 %v620
  %v763 = vpop.f32.mrf.mxu0
  %v764 = vadd.f32 0.0, %v763
  %v765 = vpop.f32.mrf.mxu0
  %v766 = vadd.f32 0.0, %v765
  %767 = vdwg.mxu0
  %v768 = vadd.f32 %v622, %v693
  %v769 = vadd.f32 %v623, %v695
  %v770 = vadd.f32 %v624, %v764
  %v771 = vadd.f32 %v625, %v766
  %v772 = vxor.u32 %v768, 2147483648
  %v773 = vmul.f32 %v772, 1.442695
  %v774 = vpow.pop %v773
  %v775 = vadd.f32 %v774, 1.0
  %v776 = vrcp.pop %v775
  %v777 = vmul.f32 1.0, %v776
  %v778 = vxor.u32 %v769, 2147483648
  %v779 = vmul.f32 %v778, 1.442695
  %v780 = vpow.pop %v779
  %v781 = vadd.f32 %v780, 1.0
  %v782 = vrcp.pop %v781
  %v783 = vmul.f32 1.0, %v782
  %v784 = vtanh.pop %v770
  %v785 = vxor.u32 %v771, 2147483648
  %v786 = vmul.f32 %v785, 1.442695
  %v787 = vpow.pop %v786
  %v788 = vadd.f32 %v787, 1.0
  %v789 = vrcp.pop %v788
  %v790 = vmul.f32 1.0, %v789
  %v791 = vmul.f32 %v783, %v618
  %v792 = vmul.f32 %v777, %v784
  %v793 = vadd.f32 %v791, %v792
  %v794 = vtanh.pop %v793
  %v795 = vmul.f32 %v790, %v794
  %s796 = scalar_lea.vmem [#allocation4], 64
  %v797 = vld [vmem:[%s796] sm:$0xff]
  %v798 = vld [vmem:[%s796 + $0x8] sm:$0xff]
  %v799 = vld [vmem:[%s796 + $0x10] sm:$0xff]
  %v800 = vld [vmem:[%s796 + $0x18] sm:$0xff]
  %801 = vmatprep.subr.mxu0 %v442
  %802 = vmatpush1.msra.mxu0 %v441
  %803 = vmatprep.subr.mxu0 %v438
  %804 = vmatpush1.msra.mxu0 %v437
  %805 = vmatprep.subr.mxu0 %v434
  %806 = vmatpush1.msra.mxu0 %v433
  %807 = vmatprep.subr.mxu0 %v430
  %808 = vmatpush1.msra.mxu0 %v429
  %809 = vmatprep.subr.mxu0 %v426
  %810 = vmatpush1.msra.mxu0 %v425
  %811 = vmatprep.subr.mxu0 %v422
  %812 = vmatpush1.msra.mxu0 %v421
  %813 = vmatprep.subr.mxu0 %v418
  %814 = vmatpush1.msra.mxu0 %v417
  %815 = vmatprep.subr.mxu0 %v414
  %816 = vmatpush1.msra.mxu0 %v413
  %817 = vmatprep.subr.mxu0 %v410
  %818 = vmatpush1.msra.mxu0 %v409
  %819 = vmatprep.subr.mxu0 %v406
  %820 = vmatpush1.msra.mxu0 %v405
  %821 = vmatprep.subr.mxu0 %v402
  %822 = vmatpush1.msra.mxu0 %v401
  %823 = vmatprep.subr.mxu0 %v398
  %824 = vmatpush1.msra.mxu0 %v397
  %825 = vmatprep.subr.mxu0 %v394
  %826 = vmatpush1.msra.mxu0 %v393
  %827 = vmatprep.subr.mxu0 %v390
  %828 = vmatpush1.msra.mxu0 %v389
  %829 = vmatprep.subr.mxu0 %v386
  %830 = vmatpush1.msra.mxu0 %v385
  %831 = vmatprep.subr.mxu0 %v382
  %832 = vmatpush1.msra.mxu0 %v381
  %833 = vmatprep.subr.mxu0 0.0
  %834 = vmatpush2.msra.mxu0 0.0
  %835 = vmatprep.subr.mxu0 0.0
  %836 = vmatpush2.msra.mxu0 0.0
  %837 = vmatprep.subr.mxu0 0.0
  %838 = vmatpush2.msra.mxu0 0.0
  %839 = vmatprep.subr.mxu0 0.0
  %840 = vmatpush2.msra.mxu0 0.0
  %841 = vmatprep.subr.mxu0 0.0
  %842 = vmatpush2.msra.mxu0 0.0
  %843 = vmatprep.subr.mxu0 0.0
  %844 = vmatpush2.msra.mxu0 0.0
  %845 = vmatprep.subr.mxu0 0.0
  %846 = vmatpush2.msra.mxu0 0.0
  %847 = vmatprep.subr.mxu0 0.0
  %848 = vmatpush2.msra.mxu0 0.0
  %849 = vmatprep.subr.mxu0 0.0
  %850 = vmatpush2.msra.mxu0 0.0
  %851 = vmatprep.subr.mxu0 0.0
  %852 = vmatpush2.msra.mxu0 0.0
  %853 = vmatprep.subr.mxu0 0.0
  %854 = vmatpush2.msra.mxu0 0.0
  %855 = vmatprep.subr.mxu0 0.0
  %856 = vmatpush2.msra.mxu0 0.0
  %857 = vmatprep.subr.mxu0 0.0
  %858 = vmatpush2.msra.mxu0 0.0
  %859 = vmatprep.subr.mxu0 0.0
  %860 = vmatpush2.msra.mxu0 0.0
  %861 = vmatprep.subr.mxu0 0.0
  %862 = vmatpush2.msra.mxu0 0.0
  %863 = vmatprep.subr.mxu0 0.0
  %864 = vmatpush2.msra.mxu0 0.0
  %865 = vmatprep.mubr.f32.mxu0 0.0
  %866 = vmatmul.mubr.f32.gmra.mxu0 %v795
  %v867 = vpop.f32.mrf.mxu0
  %v868 = vadd.f32 0.0, %v867
  %v869 = vpop.f32.mrf.mxu0
  %v870 = vadd.f32 0.0, %v869
  %871 = vdwg.mxu0
  %872 = vmatprep.subr.mxu0 %v444
  %873 = vmatpush1.msra.mxu0 %v443
  %874 = vmatprep.subr.mxu0 %v440
  %875 = vmatpush1.msra.mxu0 %v439
  %876 = vmatprep.subr.mxu0 %v436
  %877 = vmatpush1.msra.mxu0 %v435
  %878 = vmatprep.subr.mxu0 %v432
  %879 = vmatpush1.msra.mxu0 %v431
  %880 = vmatprep.subr.mxu0 %v428
  %881 = vmatpush1.msra.mxu0 %v427
  %882 = vmatprep.subr.mxu0 %v424
  %883 = vmatpush1.msra.mxu0 %v423
  %884 = vmatprep.subr.mxu0 %v420
  %885 = vmatpush1.msra.mxu0 %v419
  %886 = vmatprep.subr.mxu0 %v416
  %887 = vmatpush1.msra.mxu0 %v415
  %888 = vmatprep.subr.mxu0 %v412
  %889 = vmatpush1.msra.mxu0 %v411
  %890 = vmatprep.subr.mxu0 %v408
  %891 = vmatpush1.msra.mxu0 %v407
  %892 = vmatprep.subr.mxu0 %v404
  %893 = vmatpush1.msra.mxu0 %v403
  %894 = vmatprep.subr.mxu0 %v400
  %895 = vmatpush1.msra.mxu0 %v399
  %896 = vmatprep.subr.mxu0 %v396
  %897 = vmatpush1.msra.mxu0 %v395
  %898 = vmatprep.subr.mxu0 %v392
  %899 = vmatpush1.msra.mxu0 %v391
  %900 = vmatprep.subr.mxu0 %v388
  %901 = vmatpush1.msra.mxu0 %v387
  %902 = vmatprep.subr.mxu0 %v384
  %903 = vmatpush1.msra.mxu0 %v383
  %904 = vmatprep.subr.mxu0 0.0
  %905 = vmatpush2.msra.mxu0 0.0
  %906 = vmatprep.subr.mxu0 0.0
  %907 = vmatpush2.msra.mxu0 0.0
  %908 = vmatprep.subr.mxu0 0.0
  %909 = vmatpush2.msra.mxu0 0.0
  %910 = vmatprep.subr.mxu0 0.0
  %911 = vmatpush2.msra.mxu0 0.0
  %912 = vmatprep.subr.mxu0 0.0
  %913 = vmatpush2.msra.mxu0 0.0
  %914 = vmatprep.subr.mxu0 0.0
  %915 = vmatpush2.msra.mxu0 0.0
  %916 = vmatprep.subr.mxu0 0.0
  %917 = vmatpush2.msra.mxu0 0.0
  %918 = vmatprep.subr.mxu0 0.0
  %919 = vmatpush2.msra.mxu0 0.0
  %920 = vmatprep.subr.mxu0 0.0
  %921 = vmatpush2.msra.mxu0 0.0
  %922 = vmatprep.subr.mxu0 0.0
  %923 = vmatpush2.msra.mxu0 0.0
  %924 = vmatprep.subr.mxu0 0.0
  %925 = vmatpush2.msra.mxu0 0.0
  %926 = vmatprep.subr.mxu0 0.0
  %927 = vmatpush2.msra.mxu0 0.0
  %928 = vmatprep.subr.mxu0 0.0
  %929 = vmatpush2.msra.mxu0 0.0
  %930 = vmatprep.subr.mxu0 0.0
  %931 = vmatpush2.msra.mxu0 0.0
  %932 = vmatprep.subr.mxu0 0.0
  %933 = vmatpush2.msra.mxu0 0.0
  %934 = vmatprep.subr.mxu0 0.0
  %935 = vmatpush2.msra.mxu0 0.0
  %936 = vmatprep.mubr.f32.mxu0 0.0
  %937 = vmatmul.mubr.f32.gmra.mxu0 %v795
  %v938 = vpop.f32.mrf.mxu0
  %v939 = vadd.f32 0.0, %v938
  %v940 = vpop.f32.mrf.mxu0
  %v941 = vadd.f32 0.0, %v940
  %942 = vdwg.mxu0
  %v943 = vadd.f32 %v797, %v868
  %v944 = vadd.f32 %v798, %v870
  %v945 = vadd.f32 %v799, %v939
  %v946 = vadd.f32 %v800, %v941
  %v947 = vxor.u32 %v943, 2147483648
  %v948 = vmul.f32 %v947, 1.442695
  %v949 = vpow.pop %v948
  %v950 = vadd.f32 %v949, 1.0
  %v951 = vrcp.pop %v950
  %v952 = vmul.f32 1.0, %v951
  %v953 = vxor.u32 %v944, 2147483648
  %v954 = vmul.f32 %v953, 1.442695
  %v955 = vpow.pop %v954
  %v956 = vadd.f32 %v955, 1.0
  %v957 = vrcp.pop %v956
  %v958 = vmul.f32 1.0, %v957
  %v959 = vtanh.pop %v945
  %v960 = vxor.u32 %v946, 2147483648
  %v961 = vmul.f32 %v960, 1.442695
  %v962 = vpow.pop %v961
  %v963 = vadd.f32 %v962, 1.0
  %v964 = vrcp.pop %v963
  %v965 = vmul.f32 1.0, %v964
  %v966 = vmul.f32 %v958, %v793
  %v967 = vmul.f32 %v952, %v959
  %v968 = vadd.f32 %v966, %v967
  %v969 = vtanh.pop %v968
  %v970 = vmul.f32 %v965, %v969
  %s971 = scalar_lea.vmem [#allocation4], 96
  %v972 = vld [vmem:[%s971] sm:$0xff]
  %v973 = vld [vmem:[%s971 + $0x8] sm:$0xff]
  %v974 = vld [vmem:[%s971 + $0x10] sm:$0xff]
  %v975 = vld [vmem:[%s971 + $0x18] sm:$0xff]
  %976 = vmatprep.subr.mxu0 %v442
  %977 = vmatpush1.msra.mxu0 %v441
  %978 = vmatprep.subr.mxu0 %v438
  %979 = vmatpush1.msra.mxu0 %v437
  %980 = vmatprep.subr.mxu0 %v434
  %981 = vmatpush1.msra.mxu0 %v433
  %982 = vmatprep.subr.mxu0 %v430
  %983 = vmatpush1.msra.mxu0 %v429
  %984 = vmatprep.subr.mxu0 %v426
  %985 = vmatpush1.msra.mxu0 %v425
  %986 = vmatprep.subr.mxu0 %v422
  %987 = vmatpush1.msra.mxu0 %v421
  %988 = vmatprep.subr.mxu0 %v418
  %989 = vmatpush1.msra.mxu0 %v417
  %990 = vmatprep.subr.mxu0 %v414
  %991 = vmatpush1.msra.mxu0 %v413
  %992 = vmatprep.subr.mxu0 %v410
  %993 = vmatpush1.msra.mxu0 %v409
  %994 = vmatprep.subr.mxu0 %v406
  %995 = vmatpush1.msra.mxu0 %v405
  %996 = vmatprep.subr.mxu0 %v402
  %997 = vmatpush1.msra.mxu0 %v401
  %998 = vmatprep.subr.mxu0 %v398
  %999 = vmatpush1.msra.mxu0 %v397
  %1000 = vmatprep.subr.mxu0 %v394
  %1001 = vmatpush1.msra.mxu0 %v393
  %1002 = vmatprep.subr.mxu0 %v390
  %1003 = vmatpush1.msra.mxu0 %v389
  %1004 = vmatprep.subr.mxu0 %v386
  %1005 = vmatpush1.msra.mxu0 %v385
  %1006 = vmatprep.subr.mxu0 %v382
  %1007 = vmatpush1.msra.mxu0 %v381
  %1008 = vmatprep.subr.mxu0 0.0
  %1009 = vmatpush2.msra.mxu0 0.0
  %1010 = vmatprep.subr.mxu0 0.0
  %1011 = vmatpush2.msra.mxu0 0.0
  %1012 = vmatprep.subr.mxu0 0.0
  %1013 = vmatpush2.msra.mxu0 0.0
  %1014 = vmatprep.subr.mxu0 0.0
  %1015 = vmatpush2.msra.mxu0 0.0
  %1016 = vmatprep.subr.mxu0 0.0
  %1017 = vmatpush2.msra.mxu0 0.0
  %1018 = vmatprep.subr.mxu0 0.0
  %1019 = vmatpush2.msra.mxu0 0.0
  %1020 = vmatprep.subr.mxu0 0.0
  %1021 = vmatpush2.msra.mxu0 0.0
  %1022 = vmatprep.subr.mxu0 0.0
  %1023 = vmatpush2.msra.mxu0 0.0
  %1024 = vmatprep.subr.mxu0 0.0
  %1025 = vmatpush2.msra.mxu0 0.0
  %1026 = vmatprep.subr.mxu0 0.0
  %1027 = vmatpush2.msra.mxu0 0.0
  %1028 = vmatprep.subr.mxu0 0.0
  %1029 = vmatpush2.msra.mxu0 0.0
  %1030 = vmatprep.subr.mxu0 0.0
  %1031 = vmatpush2.msra.mxu0 0.0
  %1032 = vmatprep.subr.mxu0 0.0
  %1033 = vmatpush2.msra.mxu0 0.0
  %1034 = vmatprep.subr.mxu0 0.0
  %1035 = vmatpush2.msra.mxu0 0.0
  %1036 = vmatprep.subr.mxu0 0.0
  %1037 = vmatpush2.msra.mxu0 0.0
  %1038 = vmatprep.subr.mxu0 0.0
  %1039 = vmatpush2.msra.mxu0 0.0
  %1040 = vmatprep.mubr.f32.mxu0 0.0
  %1041 = vmatmul.mubr.f32.gmra.mxu0 %v970
  %v1042 = vpop.f32.mrf.mxu0
  %v1043 = vadd.f32 0.0, %v1042
  %v1044 = vpop.f32.mrf.mxu0
  %v1045 = vadd.f32 0.0, %v1044
  %1046 = vdwg.mxu0
  %1047 = vmatprep.subr.mxu0 %v444
  %1048 = vmatpush1.msra.mxu0 %v443
  %1049 = vmatprep.subr.mxu0 %v440
  %1050 = vmatpush1.msra.mxu0 %v439
  %1051 = vmatprep.subr.mxu0 %v436
  %1052 = vmatpush1.msra.mxu0 %v435
  %1053 = vmatprep.subr.mxu0 %v432
  %1054 = vmatpush1.msra.mxu0 %v431
  %1055 = vmatprep.subr.mxu0 %v428
  %1056 = vmatpush1.msra.mxu0 %v427
  %1057 = vmatprep.subr.mxu0 %v424
  %1058 = vmatpush1.msra.mxu0 %v423
  %1059 = vmatprep.subr.mxu0 %v420
  %1060 = vmatpush1.msra.mxu0 %v419
  %1061 = vmatprep.subr.mxu0 %v416
  %1062 = vmatpush1.msra.mxu0 %v415
  %1063 = vmatprep.subr.mxu0 %v412
  %1064 = vmatpush1.msra.mxu0 %v411
  %1065 = vmatprep.subr.mxu0 %v408
  %1066 = vmatpush1.msra.mxu0 %v407
  %1067 = vmatprep.subr.mxu0 %v404
  %1068 = vmatpush1.msra.mxu0 %v403
  %1069 = vmatprep.subr.mxu0 %v400
  %1070 = vmatpush1.msra.mxu0 %v399
  %1071 = vmatprep.subr.mxu0 %v396
  %1072 = vmatpush1.msra.mxu0 %v395
  %1073 = vmatprep.subr.mxu0 %v392
  %1074 = vmatpush1.msra.mxu0 %v391
  %1075 = vmatprep.subr.mxu0 %v388
  %1076 = vmatpush1.msra.mxu0 %v387
  %1077 = vmatprep.subr.mxu0 %v384
  %1078 = vmatpush1.msra.mxu0 %v383
  %1079 = vmatprep.subr.mxu0 0.0
  %1080 = vmatpush2.msra.mxu0 0.0
  %1081 = vmatprep.subr.mxu0 0.0
  %1082 = vmatpush2.msra.mxu0 0.0
  %1083 = vmatprep.subr.mxu0 0.0
  %1084 = vmatpush2.msra.mxu0 0.0
  %1085 = vmatprep.subr.mxu0 0.0
  %1086 = vmatpush2.msra.mxu0 0.0
  %1087 = vmatprep.subr.mxu0 0.0
  %1088 = vmatpush2.msra.mxu0 0.0
  %1089 = vmatprep.subr.mxu0 0.0
  %1090 = vmatpush2.msra.mxu0 0.0
  %1091 = vmatprep.subr.mxu0 0.0
  %1092 = vmatpush2.msra.mxu0 0.0
  %1093 = vmatprep.subr.mxu0 0.0
  %1094 = vmatpush2.msra.mxu0 0.0
  %1095 = vmatprep.subr.mxu0 0.0
  %1096 = vmatpush2.msra.mxu0 0.0
  %1097 = vmatprep.subr.mxu0 0.0
  %1098 = vmatpush2.msra.mxu0 0.0
  %1099 = vmatprep.subr.mxu0 0.0
  %1100 = vmatpush2.msra.mxu0 0.0
  %1101 = vmatprep.subr.mxu0 0.0
  %1102 = vmatpush2.msra.mxu0 0.0
  %1103 = vmatprep.subr.mxu0 0.0
  %1104 = vmatpush2.msra.mxu0 0.0
  %1105 = vmatprep.subr.mxu0 0.0
  %1106 = vmatpush2.msra.mxu0 0.0
  %1107 = vmatprep.subr.mxu0 0.0
  %1108 = vmatpush2.msra.mxu0 0.0
  %1109 = vmatprep.subr.mxu0 0.0
  %1110 = vmatpush2.msra.mxu0 0.0
  %1111 = vmatprep.mubr.f32.mxu0 0.0
  %1112 = vmatmul.mubr.f32.gmra.mxu0 %v970
  %v1113 = vpop.f32.mrf.mxu0
  %v1114 = vadd.f32 0.0, %v1113
  %v1115 = vpop.f32.mrf.mxu0
  %v1116 = vadd.f32 0.0, %v1115
  %1117 = vdwg.mxu0
  %v1118 = vadd.f32 %v972, %v1043
  %v1119 = vadd.f32 %v973, %v1045
  %v1120 = vadd.f32 %v974, %v1114
  %v1121 = vadd.f32 %v975, %v1116
  %v1122 = vxor.u32 %v1118, 2147483648
  %v1123 = vmul.f32 %v1122, 1.442695
  %v1124 = vpow.pop %v1123
  %v1125 = vadd.f32 %v1124, 1.0
  %v1126 = vrcp.pop %v1125
  %v1127 = vmul.f32 1.0, %v1126
  %v1128 = vxor.u32 %v1119, 2147483648
  %v1129 = vmul.f32 %v1128, 1.442695
  %v1130 = vpow.pop %v1129
  %v1131 = vadd.f32 %v1130, 1.0
  %v1132 = vrcp.pop %v1131
  %v1133 = vmul.f32 1.0, %v1132
  %v1134 = vtanh.pop %v1120
  %v1135 = vxor.u32 %v1121, 2147483648
  %v1136 = vmul.f32 %v1135, 1.442695
  %v1137 = vpow.pop %v1136
  %v1138 = vadd.f32 %v1137, 1.0
  %v1139 = vrcp.pop %v1138
  %v1140 = vmul.f32 1.0, %v1139
  %v1141 = vmul.f32 %v1133, %v968
  %v1142 = vmul.f32 %v1127, %v1134
  %v1143 = vadd.f32 %v1141, %v1142
  %v1144 = vtanh.pop %v1143
  %v1145 = vmul.f32 %v1140, %v1144
  %s1146 = scalar_lea.vmem [#allocation4], 128
  %v1147 = vld [vmem:[%s1146] sm:$0xff]
  %v1148 = vld [vmem:[%s1146 + $0x8] sm:$0xff]
  %v1149 = vld [vmem:[%s1146 + $0x10] sm:$0xff]
  %v1150 = vld [vmem:[%s1146 + $0x18] sm:$0xff]
  %1151 = vmatprep.subr.mxu0 %v442
  %1152 = vmatpush1.msra.mxu0 %v441
  %1153 = vmatprep.subr.mxu0 %v438
  %1154 = vmatpush1.msra.mxu0 %v437
  %1155 = vmatprep.subr.mxu0 %v434
  %1156 = vmatpush1.msra.mxu0 %v433
  %1157 = vmatprep.subr.mxu0 %v430
  %1158 = vmatpush1.msra.mxu0 %v429
  %1159 = vmatprep.subr.mxu0 %v426
  %1160 = vmatpush1.msra.mxu0 %v425
  %1161 = vmatprep.subr.mxu0 %v422
  %1162 = vmatpush1.msra.mxu0 %v421
  %1163 = vmatprep.subr.mxu0 %v418
  %1164 = vmatpush1.msra.mxu0 %v417
  %1165 = vmatprep.subr.mxu0 %v414
  %1166 = vmatpush1.msra.mxu0 %v413
  %1167 = vmatprep.subr.mxu0 %v410
  %1168 = vmatpush1.msra.mxu0 %v409
  %1169 = vmatprep.subr.mxu0 %v406
  %1170 = vmatpush1.msra.mxu0 %v405
  %1171 = vmatprep.subr.mxu0 %v402
  %1172 = vmatpush1.msra.mxu0 %v401
  %1173 = vmatprep.subr.mxu0 %v398
  %1174 = vmatpush1.msra.mxu0 %v397
  %1175 = vmatprep.subr.mxu0 %v394
  %1176 = vmatpush1.msra.mxu0 %v393
  %1177 = vmatprep.subr.mxu0 %v390
  %1178 = vmatpush1.msra.mxu0 %v389
  %1179 = vmatprep.subr.mxu0 %v386
  %1180 = vmatpush1.msra.mxu0 %v385
  %1181 = vmatprep.subr.mxu0 %v382
  %1182 = vmatpush1.msra.mxu0 %v381
  %1183 = vmatprep.subr.mxu0 0.0
  %1184 = vmatpush2.msra.mxu0 0.0
  %1185 = vmatprep.subr.mxu0 0.0
  %1186 = vmatpush2.msra.mxu0 0.0
  %1187 = vmatprep.subr.mxu0 0.0
  %1188 = vmatpush2.msra.mxu0 0.0
  %1189 = vmatprep.subr.mxu0 0.0
  %1190 = vmatpush2.msra.mxu0 0.0
  %1191 = vmatprep.subr.mxu0 0.0
  %1192 = vmatpush2.msra.mxu0 0.0
  %1193 = vmatprep.subr.mxu0 0.0
  %1194 = vmatpush2.msra.mxu0 0.0
  %1195 = vmatprep.subr.mxu0 0.0
  %1196 = vmatpush2.msra.mxu0 0.0
  %1197 = vmatprep.subr.mxu0 0.0
  %1198 = vmatpush2.msra.mxu0 0.0
  %1199 = vmatprep.subr.mxu0 0.0
  %1200 = vmatpush2.msra.mxu0 0.0
  %1201 = vmatprep.subr.mxu0 0.0
  %1202 = vmatpush2.msra.mxu0 0.0
  %1203 = vmatprep.subr.mxu0 0.0
  %1204 = vmatpush2.msra.mxu0 0.0
  %1205 = vmatprep.subr.mxu0 0.0
  %1206 = vmatpush2.msra.mxu0 0.0
  %1207 = vmatprep.subr.mxu0 0.0
  %1208 = vmatpush2.msra.mxu0 0.0
  %1209 = vmatprep.subr.mxu0 0.0
  %1210 = vmatpush2.msra.mxu0 0.0
  %1211 = vmatprep.subr.mxu0 0.0
  %1212 = vmatpush2.msra.mxu0 0.0
  %1213 = vmatprep.subr.mxu0 0.0
  %1214 = vmatpush2.msra.mxu0 0.0
  %1215 = vmatprep.mubr.f32.mxu0 0.0
  %1216 = vmatmul.mubr.f32.gmra.mxu0 %v1145
  %v1217 = vpop.f32.mrf.mxu0
  %v1218 = vadd.f32 0.0, %v1217
  %v1219 = vpop.f32.mrf.mxu0
  %v1220 = vadd.f32 0.0, %v1219
  %1221 = vdwg.mxu0
  %1222 = vmatprep.subr.mxu0 %v444
  %1223 = vmatpush1.msra.mxu0 %v443
  %1224 = vmatprep.subr.mxu0 %v440
  %1225 = vmatpush1.msra.mxu0 %v439
  %1226 = vmatprep.subr.mxu0 %v436
  %1227 = vmatpush1.msra.mxu0 %v435
  %1228 = vmatprep.subr.mxu0 %v432
  %1229 = vmatpush1.msra.mxu0 %v431
  %1230 = vmatprep.subr.mxu0 %v428
  %1231 = vmatpush1.msra.mxu0 %v427
  %1232 = vmatprep.subr.mxu0 %v424
  %1233 = vmatpush1.msra.mxu0 %v423
  %1234 = vmatprep.subr.mxu0 %v420
  %1235 = vmatpush1.msra.mxu0 %v419
  %1236 = vmatprep.subr.mxu0 %v416
  %1237 = vmatpush1.msra.mxu0 %v415
  %1238 = vmatprep.subr.mxu0 %v412
  %1239 = vmatpush1.msra.mxu0 %v411
  %1240 = vmatprep.subr.mxu0 %v408
  %1241 = vmatpush1.msra.mxu0 %v407
  %1242 = vmatprep.subr.mxu0 %v404
  %1243 = vmatpush1.msra.mxu0 %v403
  %1244 = vmatprep.subr.mxu0 %v400
  %1245 = vmatpush1.msra.mxu0 %v399
  %1246 = vmatprep.subr.mxu0 %v396
  %1247 = vmatpush1.msra.mxu0 %v395
  %1248 = vmatprep.subr.mxu0 %v392
  %1249 = vmatpush1.msra.mxu0 %v391
  %1250 = vmatprep.subr.mxu0 %v388
  %1251 = vmatpush1.msra.mxu0 %v387
  %1252 = vmatprep.subr.mxu0 %v384
  %1253 = vmatpush1.msra.mxu0 %v383
  %1254 = vmatprep.subr.mxu0 0.0
  %1255 = vmatpush2.msra.mxu0 0.0
  %1256 = vmatprep.subr.mxu0 0.0
  %1257 = vmatpush2.msra.mxu0 0.0
  %1258 = vmatprep.subr.mxu0 0.0
  %1259 = vmatpush2.msra.mxu0 0.0
  %1260 = vmatprep.subr.mxu0 0.0
  %1261 = vmatpush2.msra.mxu0 0.0
  %1262 = vmatprep.subr.mxu0 0.0
  %1263 = vmatpush2.msra.mxu0 0.0
  %1264 = vmatprep.subr.mxu0 0.0
  %1265 = vmatpush2.msra.mxu0 0.0
  %1266 = vmatprep.subr.mxu0 0.0
  %1267 = vmatpush2.msra.mxu0 0.0
  %1268 = vmatprep.subr.mxu0 0.0
  %1269 = vmatpush2.msra.mxu0 0.0
  %1270 = vmatprep.subr.mxu0 0.0
  %1271 = vmatpush2.msra.mxu0 0.0
  %1272 = vmatprep.subr.mxu0 0.0
  %1273 = vmatpush2.msra.mxu0 0.0
  %1274 = vmatprep.subr.mxu0 0.0
  %1275 = vmatpush2.msra.mxu0 0.0
  %1276 = vmatprep.subr.mxu0 0.0
  %1277 = vmatpush2.msra.mxu0 0.0
  %1278 = vmatprep.subr.mxu0 0.0
  %1279 = vmatpush2.msra.mxu0 0.0
  %1280 = vmatprep.subr.mxu0 0.0
  %1281 = vmatpush2.msra.mxu0 0.0
  %1282 = vmatprep.subr.mxu0 0.0
  %1283 = vmatpush2.msra.mxu0 0.0
  %1284 = vmatprep.subr.mxu0 0.0
  %1285 = vmatpush2.msra.mxu0 0.0
  %1286 = vmatprep.mubr.f32.mxu0 0.0
  %1287 = vmatmul.mubr.f32.gmra.mxu0 %v1145
  %v1288 = vpop.f32.mrf.mxu0
  %v1289 = vadd.f32 0.0, %v1288
  %v1290 = vpop.f32.mrf.mxu0
  %v1291 = vadd.f32 0.0, %v1290
  %1292 = vdwg.mxu0
  %v1293 = vadd.f32 %v1147, %v1218
  %v1294 = vadd.f32 %v1148, %v1220
  %v1295 = vadd.f32 %v1149, %v1289
  %v1296 = vadd.f32 %v1150, %v1291
  %v1297 = vxor.u32 %v1293, 2147483648
  %v1298 = vmul.f32 %v1297, 1.442695
  %v1299 = vpow.pop %v1298
  %v1300 = vadd.f32 %v1299, 1.0
  %v1301 = vrcp.pop %v1300
  %v1302 = vmul.f32 1.0, %v1301
  %v1303 = vxor.u32 %v1294, 2147483648
  %v1304 = vmul.f32 %v1303, 1.442695
  %v1305 = vpow.pop %v1304
  %v1306 = vadd.f32 %v1305, 1.0
  %v1307 = vrcp.pop %v1306
  %v1308 = vmul.f32 1.0, %v1307
  %v1309 = vtanh.pop %v1295
  %v1310 = vxor.u32 %v1296, 2147483648
  %v1311 = vmul.f32 %v1310, 1.442695
  %v1312 = vpow.pop %v1311
  %v1313 = vadd.f32 %v1312, 1.0
  %v1314 = vrcp.pop %v1313
  %v1315 = vmul.f32 1.0, %v1314
  %v1316 = vmul.f32 %v1308, %v1143
  %v1317 = vmul.f32 %v1302, %v1309
  %v1318 = vadd.f32 %v1316, %v1317
  %v1319 = vtanh.pop %v1318
  %v1320 = vmul.f32 %v1315, %v1319
  %s1321 = scalar_lea.vmem [#allocation4], 160
  %v1322 = vld [vmem:[%s1321] sm:$0xff]
  %v1323 = vld [vmem:[%s1321 + $0x8] sm:$0xff]
  %v1324 = vld [vmem:[%s1321 + $0x10] sm:$0xff]
  %v1325 = vld [vmem:[%s1321 + $0x18] sm:$0xff]
  %1326 = vmatprep.subr.mxu0 %v442
  %1327 = vmatpush1.msra.mxu0 %v441
  %1328 = vmatprep.subr.mxu0 %v438
  %1329 = vmatpush1.msra.mxu0 %v437
  %1330 = vmatprep.subr.mxu0 %v434
  %1331 = vmatpush1.msra.mxu0 %v433
  %1332 = vmatprep.subr.mxu0 %v430
  %1333 = vmatpush1.msra.mxu0 %v429
  %1334 = vmatprep.subr.mxu0 %v426
  %1335 = vmatpush1.msra.mxu0 %v425
  %1336 = vmatprep.subr.mxu0 %v422
  %1337 = vmatpush1.msra.mxu0 %v421
  %1338 = vmatprep.subr.mxu0 %v418
  %1339 = vmatpush1.msra.mxu0 %v417
  %1340 = vmatprep.subr.mxu0 %v414
  %1341 = vmatpush1.msra.mxu0 %v413
  %1342 = vmatprep.subr.mxu0 %v410
  %1343 = vmatpush1.msra.mxu0 %v409
  %1344 = vmatprep.subr.mxu0 %v406
  %1345 = vmatpush1.msra.mxu0 %v405
  %1346 = vmatprep.subr.mxu0 %v402
  %1347 = vmatpush1.msra.mxu0 %v401
  %1348 = vmatprep.subr.mxu0 %v398
  %1349 = vmatpush1.msra.mxu0 %v397
  %1350 = vmatprep.subr.mxu0 %v394
  %1351 = vmatpush1.msra.mxu0 %v393
  %1352 = vmatprep.subr.mxu0 %v390
  %1353 = vmatpush1.msra.mxu0 %v389
  %1354 = vmatprep.subr.mxu0 %v386
  %1355 = vmatpush1.msra.mxu0 %v385
  %1356 = vmatprep.subr.mxu0 %v382
  %1357 = vmatpush1.msra.mxu0 %v381
  %1358 = vmatprep.subr.mxu0 0.0
  %1359 = vmatpush2.msra.mxu0 0.0
  %1360 = vmatprep.subr.mxu0 0.0
  %1361 = vmatpush2.msra.mxu0 0.0
  %1362 = vmatprep.subr.mxu0 0.0
  %1363 = vmatpush2.msra.mxu0 0.0
  %1364 = vmatprep.subr.mxu0 0.0
  %1365 = vmatpush2.msra.mxu0 0.0
  %1366 = vmatprep.subr.mxu0 0.0
  %1367 = vmatpush2.msra.mxu0 0.0
  %1368 = vmatprep.subr.mxu0 0.0
  %1369 = vmatpush2.msra.mxu0 0.0
  %1370 = vmatprep.subr.mxu0 0.0
  %1371 = vmatpush2.msra.mxu0 0.0
  %1372 = vmatprep.subr.mxu0 0.0
  %1373 = vmatpush2.msra.mxu0 0.0
  %1374 = vmatprep.subr.mxu0 0.0
  %1375 = vmatpush2.msra.mxu0 0.0
  %1376 = vmatprep.subr.mxu0 0.0
  %1377 = vmatpush2.msra.mxu0 0.0
  %1378 = vmatprep.subr.mxu0 0.0
  %1379 = vmatpush2.msra.mxu0 0.0
  %1380 = vmatprep.subr.mxu0 0.0
  %1381 = vmatpush2.msra.mxu0 0.0
  %1382 = vmatprep.subr.mxu0 0.0
  %1383 = vmatpush2.msra.mxu0 0.0
  %1384 = vmatprep.subr.mxu0 0.0
  %1385 = vmatpush2.msra.mxu0 0.0
  %1386 = vmatprep.subr.mxu0 0.0
  %1387 = vmatpush2.msra.mxu0 0.0
  %1388 = vmatprep.subr.mxu0 0.0
  %1389 = vmatpush2.msra.mxu0 0.0
  %1390 = vmatprep.mubr.f32.mxu0 0.0
  %1391 = vmatmul.mubr.f32.gmra.mxu0 %v1320
  %v1392 = vpop.f32.mrf.mxu0
  %v1393 = vadd.f32 0.0, %v1392
  %v1394 = vpop.f32.mrf.mxu0
  %v1395 = vadd.f32 0.0, %v1394
  %1396 = vdwg.mxu0
  %1397 = vmatprep.subr.mxu0 %v444
  %1398 = vmatpush1.msra.mxu0 %v443
  %1399 = vmatprep.subr.mxu0 %v440
  %1400 = vmatpush1.msra.mxu0 %v439
  %1401 = vmatprep.subr.mxu0 %v436
  %1402 = vmatpush1.msra.mxu0 %v435
  %1403 = vmatprep.subr.mxu0 %v432
  %1404 = vmatpush1.msra.mxu0 %v431
  %1405 = vmatprep.subr.mxu0 %v428
  %1406 = vmatpush1.msra.mxu0 %v427
  %1407 = vmatprep.subr.mxu0 %v424
  %1408 = vmatpush1.msra.mxu0 %v423
  %1409 = vmatprep.subr.mxu0 %v420
  %1410 = vmatpush1.msra.mxu0 %v419
  %1411 = vmatprep.subr.mxu0 %v416
  %1412 = vmatpush1.msra.mxu0 %v415
  %1413 = vmatprep.subr.mxu0 %v412
  %1414 = vmatpush1.msra.mxu0 %v411
  %1415 = vmatprep.subr.mxu0 %v408
  %1416 = vmatpush1.msra.mxu0 %v407
  %1417 = vmatprep.subr.mxu0 %v404
  %1418 = vmatpush1.msra.mxu0 %v403
  %1419 = vmatprep.subr.mxu0 %v400
  %1420 = vmatpush1.msra.mxu0 %v399
  %1421 = vmatprep.subr.mxu0 %v396
  %1422 = vmatpush1.msra.mxu0 %v395
  %1423 = vmatprep.subr.mxu0 %v392
  %1424 = vmatpush1.msra.mxu0 %v391
  %1425 = vmatprep.subr.mxu0 %v388
  %1426 = vmatpush1.msra.mxu0 %v387
  %1427 = vmatprep.subr.mxu0 %v384
  %1428 = vmatpush1.msra.mxu0 %v383
  %1429 = vmatprep.subr.mxu0 0.0
  %1430 = vmatpush2.msra.mxu0 0.0
  %1431 = vmatprep.subr.mxu0 0.0
  %1432 = vmatpush2.msra.mxu0 0.0
  %1433 = vmatprep.subr.mxu0 0.0
  %1434 = vmatpush2.msra.mxu0 0.0
  %1435 = vmatprep.subr.mxu0 0.0
  %1436 = vmatpush2.msra.mxu0 0.0
  %1437 = vmatprep.subr.mxu0 0.0
  %1438 = vmatpush2.msra.mxu0 0.0
  %1439 = vmatprep.subr.mxu0 0.0
  %1440 = vmatpush2.msra.mxu0 0.0
  %1441 = vmatprep.subr.mxu0 0.0
  %1442 = vmatpush2.msra.mxu0 0.0
  %1443 = vmatprep.subr.mxu0 0.0
  %1444 = vmatpush2.msra.mxu0 0.0
  %1445 = vmatprep.subr.mxu0 0.0
  %1446 = vmatpush2.msra.mxu0 0.0
  %1447 = vmatprep.subr.mxu0 0.0
  %1448 = vmatpush2.msra.mxu0 0.0
  %1449 = vmatprep.subr.mxu0 0.0
  %1450 = vmatpush2.msra.mxu0 0.0
  %1451 = vmatprep.subr.mxu0 0.0
  %1452 = vmatpush2.msra.mxu0 0.0
  %1453 = vmatprep.subr.mxu0 0.0
  %1454 = vmatpush2.msra.mxu0 0.0
  %1455 = vmatprep.subr.mxu0 0.0
  %1456 = vmatpush2.msra.mxu0 0.0
  %1457 = vmatprep.subr.mxu0 0.0
  %1458 = vmatpush2.msra.mxu0 0.0
  %1459 = vmatprep.subr.mxu0 0.0
  %1460 = vmatpush2.msra.mxu0 0.0
  %1461 = vmatprep.mubr.f32.mxu0 0.0
  %1462 = vmatmul.mubr.f32.gmra.mxu0 %v1320
  %v1463 = vpop.f32.mrf.mxu0
  %v1464 = vadd.f32 0.0, %v1463
  %v1465 = vpop.f32.mrf.mxu0
  %v1466 = vadd.f32 0.0, %v1465
  %1467 = vdwg.mxu0
  %v1468 = vadd.f32 %v1322, %v1393
  %v1469 = vadd.f32 %v1323, %v1395
  %v1470 = vadd.f32 %v1324, %v1464
  %v1471 = vadd.f32 %v1325, %v1466
  %v1472 = vxor.u32 %v1468, 2147483648
  %v1473 = vmul.f32 %v1472, 1.442695
  %v1474 = vpow.pop %v1473
  %v1475 = vadd.f32 %v1474, 1.0
  %v1476 = vrcp.pop %v1475
  %v1477 = vmul.f32 1.0, %v1476
  %v1478 = vxor.u32 %v1469, 2147483648
  %v1479 = vmul.f32 %v1478, 1.442695
  %v1480 = vpow.pop %v1479
  %v1481 = vadd.f32 %v1480, 1.0
  %v1482 = vrcp.pop %v1481
  %v1483 = vmul.f32 1.0, %v1482
  %v1484 = vtanh.pop %v1470
  %v1485 = vxor.u32 %v1471, 2147483648
  %v1486 = vmul.f32 %v1485, 1.442695
  %v1487 = vpow.pop %v1486
  %v1488 = vadd.f32 %v1487, 1.0
  %v1489 = vrcp.pop %v1488
  %v1490 = vmul.f32 1.0, %v1489
  %v1491 = vmul.f32 %v1483, %v1318
  %v1492 = vmul.f32 %v1477, %v1484
  %v1493 = vadd.f32 %v1491, %v1492
  %v1494 = vtanh.pop %v1493
  %v1495 = vmul.f32 %v1490, %v1494
  %s1496 = scalar_lea.vmem [#allocation4], 192
  %v1497 = vld [vmem:[%s1496] sm:$0xff]
  %v1498 = vld [vmem:[%s1496 + $0x8] sm:$0xff]
  %v1499 = vld [vmem:[%s1496 + $0x10] sm:$0xff]
  %v1500 = vld [vmem:[%s1496 + $0x18] sm:$0xff]
  %1501 = vmatprep.subr.mxu0 %v442
  %1502 = vmatpush1.msra.mxu0 %v441
  %1503 = vmatprep.subr.mxu0 %v438
  %1504 = vmatpush1.msra.mxu0 %v437
  %1505 = vmatprep.subr.mxu0 %v434
  %1506 = vmatpush1.msra.mxu0 %v433
  %1507 = vmatprep.subr.mxu0 %v430
  %1508 = vmatpush1.msra.mxu0 %v429
  %1509 = vmatprep.subr.mxu0 %v426
  %1510 = vmatpush1.msra.mxu0 %v425
  %1511 = vmatprep.subr.mxu0 %v422
  %1512 = vmatpush1.msra.mxu0 %v421
  %1513 = vmatprep.subr.mxu0 %v418
  %1514 = vmatpush1.msra.mxu0 %v417
  %1515 = vmatprep.subr.mxu0 %v414
  %1516 = vmatpush1.msra.mxu0 %v413
  %1517 = vmatprep.subr.mxu0 %v410
  %1518 = vmatpush1.msra.mxu0 %v409
  %1519 = vmatprep.subr.mxu0 %v406
  %1520 = vmatpush1.msra.mxu0 %v405
  %1521 = vmatprep.subr.mxu0 %v402
  %1522 = vmatpush1.msra.mxu0 %v401
  %1523 = vmatprep.subr.mxu0 %v398
  %1524 = vmatpush1.msra.mxu0 %v397
  %1525 = vmatprep.subr.mxu0 %v394
  %1526 = vmatpush1.msra.mxu0 %v393
  %1527 = vmatprep.subr.mxu0 %v390
  %1528 = vmatpush1.msra.mxu0 %v389
  %1529 = vmatprep.subr.mxu0 %v386
  %1530 = vmatpush1.msra.mxu0 %v385
  %1531 = vmatprep.subr.mxu0 %v382
  %1532 = vmatpush1.msra.mxu0 %v381
  %1533 = vmatprep.subr.mxu0 0.0
  %1534 = vmatpush2.msra.mxu0 0.0
  %1535 = vmatprep.subr.mxu0 0.0
  %1536 = vmatpush2.msra.mxu0 0.0
  %1537 = vmatprep.subr.mxu0 0.0
  %1538 = vmatpush2.msra.mxu0 0.0
  %1539 = vmatprep.subr.mxu0 0.0
  %1540 = vmatpush2.msra.mxu0 0.0
  %1541 = vmatprep.subr.mxu0 0.0
  %1542 = vmatpush2.msra.mxu0 0.0
  %1543 = vmatprep.subr.mxu0 0.0
  %1544 = vmatpush2.msra.mxu0 0.0
  %1545 = vmatprep.subr.mxu0 0.0
  %1546 = vmatpush2.msra.mxu0 0.0
  %1547 = vmatprep.subr.mxu0 0.0
  %1548 = vmatpush2.msra.mxu0 0.0
  %1549 = vmatprep.subr.mxu0 0.0
  %1550 = vmatpush2.msra.mxu0 0.0
  %1551 = vmatprep.subr.mxu0 0.0
  %1552 = vmatpush2.msra.mxu0 0.0
  %1553 = vmatprep.subr.mxu0 0.0
  %1554 = vmatpush2.msra.mxu0 0.0
  %1555 = vmatprep.subr.mxu0 0.0
  %1556 = vmatpush2.msra.mxu0 0.0
  %1557 = vmatprep.subr.mxu0 0.0
  %1558 = vmatpush2.msra.mxu0 0.0
  %1559 = vmatprep.subr.mxu0 0.0
  %1560 = vmatpush2.msra.mxu0 0.0
  %1561 = vmatprep.subr.mxu0 0.0
  %1562 = vmatpush2.msra.mxu0 0.0
  %1563 = vmatprep.subr.mxu0 0.0
  %1564 = vmatpush2.msra.mxu0 0.0
  %1565 = vmatprep.mubr.f32.mxu0 0.0
  %1566 = vmatmul.mubr.f32.gmra.mxu0 %v1495
  %v1567 = vpop.f32.mrf.mxu0
  %v1568 = vadd.f32 0.0, %v1567
  %v1569 = vpop.f32.mrf.mxu0
  %v1570 = vadd.f32 0.0, %v1569
  %1571 = vdwg.mxu0
  %1572 = vmatprep.subr.mxu0 %v444
  %1573 = vmatpush1.msra.mxu0 %v443
  %1574 = vmatprep.subr.mxu0 %v440
  %1575 = vmatpush1.msra.mxu0 %v439
  %1576 = vmatprep.subr.mxu0 %v436
  %1577 = vmatpush1.msra.mxu0 %v435
  %1578 = vmatprep.subr.mxu0 %v432
  %1579 = vmatpush1.msra.mxu0 %v431
  %1580 = vmatprep.subr.mxu0 %v428
  %1581 = vmatpush1.msra.mxu0 %v427
  %1582 = vmatprep.subr.mxu0 %v424
  %1583 = vmatpush1.msra.mxu0 %v423
  %1584 = vmatprep.subr.mxu0 %v420
  %1585 = vmatpush1.msra.mxu0 %v419
  %1586 = vmatprep.subr.mxu0 %v416
  %1587 = vmatpush1.msra.mxu0 %v415
  %1588 = vmatprep.subr.mxu0 %v412
  %1589 = vmatpush1.msra.mxu0 %v411
  %1590 = vmatprep.subr.mxu0 %v408
  %1591 = vmatpush1.msra.mxu0 %v407
  %1592 = vmatprep.subr.mxu0 %v404
  %1593 = vmatpush1.msra.mxu0 %v403
  %1594 = vmatprep.subr.mxu0 %v400
  %1595 = vmatpush1.msra.mxu0 %v399
  %1596 = vmatprep.subr.mxu0 %v396
  %1597 = vmatpush1.msra.mxu0 %v395
  %1598 = vmatprep.subr.mxu0 %v392
  %1599 = vmatpush1.msra.mxu0 %v391
  %1600 = vmatprep.subr.mxu0 %v388
  %1601 = vmatpush1.msra.mxu0 %v387
  %1602 = vmatprep.subr.mxu0 %v384
  %1603 = vmatpush1.msra.mxu0 %v383
  %1604 = vmatprep.subr.mxu0 0.0
  %1605 = vmatpush2.msra.mxu0 0.0
  %1606 = vmatprep.subr.mxu0 0.0
  %1607 = vmatpush2.msra.mxu0 0.0
  %1608 = vmatprep.subr.mxu0 0.0
  %1609 = vmatpush2.msra.mxu0 0.0
  %1610 = vmatprep.subr.mxu0 0.0
  %1611 = vmatpush2.msra.mxu0 0.0
  %1612 = vmatprep.subr.mxu0 0.0
  %1613 = vmatpush2.msra.mxu0 0.0
  %1614 = vmatprep.subr.mxu0 0.0
  %1615 = vmatpush2.msra.mxu0 0.0
  %1616 = vmatprep.subr.mxu0 0.0
  %1617 = vmatpush2.msra.mxu0 0.0
  %1618 = vmatprep.subr.mxu0 0.0
  %1619 = vmatpush2.msra.mxu0 0.0
  %1620 = vmatprep.subr.mxu0 0.0
  %1621 = vmatpush2.msra.mxu0 0.0
  %1622 = vmatprep.subr.mxu0 0.0
  %1623 = vmatpush2.msra.mxu0 0.0
  %1624 = vmatprep.subr.mxu0 0.0
  %1625 = vmatpush2.msra.mxu0 0.0
  %1626 = vmatprep.subr.mxu0 0.0
  %1627 = vmatpush2.msra.mxu0 0.0
  %1628 = vmatprep.subr.mxu0 0.0
  %1629 = vmatpush2.msra.mxu0 0.0
  %1630 = vmatprep.subr.mxu0 0.0
  %1631 = vmatpush2.msra.mxu0 0.0
  %1632 = vmatprep.subr.mxu0 0.0
  %1633 = vmatpush2.msra.mxu0 0.0
  %1634 = vmatprep.subr.mxu0 0.0
  %1635 = vmatpush2.msra.mxu0 0.0
  %1636 = vmatprep.mubr.f32.mxu0 0.0
  %1637 = vmatmul.mubr.f32.gmra.mxu0 %v1495
  %v1638 = vpop.f32.mrf.mxu0
  %v1639 = vadd.f32 0.0, %v1638
  %v1640 = vpop.f32.mrf.mxu0
  %v1641 = vadd.f32 0.0, %v1640
  %1642 = vdwg.mxu0
  %v1643 = vadd.f32 %v1497, %v1568
  %v1644 = vadd.f32 %v1498, %v1570
  %v1645 = vadd.f32 %v1499, %v1639
  %v1646 = vadd.f32 %v1500, %v1641
  %v1647 = vxor.u32 %v1643, 2147483648
  %v1648 = vmul.f32 %v1647, 1.442695
  %v1649 = vpow.pop %v1648
  %v1650 = vadd.f32 %v1649, 1.0
  %v1651 = vrcp.pop %v1650
  %v1652 = vmul.f32 1.0, %v1651
  %v1653 = vxor.u32 %v1644, 2147483648
  %v1654 = vmul.f32 %v1653, 1.442695
  %v1655 = vpow.pop %v1654
  %v1656 = vadd.f32 %v1655, 1.0
  %v1657 = vrcp.pop %v1656
  %v1658 = vmul.f32 1.0, %v1657
  %v1659 = vtanh.pop %v1645
  %v1660 = vxor.u32 %v1646, 2147483648
  %v1661 = vmul.f32 %v1660, 1.442695
  %v1662 = vpow.pop %v1661
  %v1663 = vadd.f32 %v1662, 1.0
  %v1664 = vrcp.pop %v1663
  %v1665 = vmul.f32 1.0, %v1664
  %v1666 = vmul.f32 %v1658, %v1493
  %v1667 = vmul.f32 %v1652, %v1659
  %v1668 = vadd.f32 %v1666, %v1667
  %v1669 = vtanh.pop %v1668
  %v1670 = vmul.f32 %v1665, %v1669
  %s1671 = scalar_lea.vmem [#allocation4], 224
  %v1672 = vld [vmem:[%s1671] sm:$0xff]
  %v1673 = vld [vmem:[%s1671 + $0x8] sm:$0xff]
  %v1674 = vld [vmem:[%s1671 + $0x10] sm:$0xff]
  %v1675 = vld [vmem:[%s1671 + $0x18] sm:$0xff]
  %1676 = vmatprep.subr.mxu0 %v442
  %1677 = vmatpush1.msra.mxu0 %v441
  %1678 = vmatprep.subr.mxu0 %v438
  %1679 = vmatpush1.msra.mxu0 %v437
  %1680 = vmatprep.subr.mxu0 %v434
  %1681 = vmatpush1.msra.mxu0 %v433
  %1682 = vmatprep.subr.mxu0 %v430
  %1683 = vmatpush1.msra.mxu0 %v429
  %1684 = vmatprep.subr.mxu0 %v426
  %1685 = vmatpush1.msra.mxu0 %v425
  %1686 = vmatprep.subr.mxu0 %v422
  %1687 = vmatpush1.msra.mxu0 %v421
  %1688 = vmatprep.subr.mxu0 %v418
  %1689 = vmatpush1.msra.mxu0 %v417
  %1690 = vmatprep.subr.mxu0 %v414
  %1691 = vmatpush1.msra.mxu0 %v413
  %1692 = vmatprep.subr.mxu0 %v410
  %1693 = vmatpush1.msra.mxu0 %v409
  %1694 = vmatprep.subr.mxu0 %v406
  %1695 = vmatpush1.msra.mxu0 %v405
  %1696 = vmatprep.subr.mxu0 %v402
  %1697 = vmatpush1.msra.mxu0 %v401
  %1698 = vmatprep.subr.mxu0 %v398
  %1699 = vmatpush1.msra.mxu0 %v397
  %1700 = vmatprep.subr.mxu0 %v394
  %1701 = vmatpush1.msra.mxu0 %v393
  %1702 = vmatprep.subr.mxu0 %v390
  %1703 = vmatpush1.msra.mxu0 %v389
  %1704 = vmatprep.subr.mxu0 %v386
  %1705 = vmatpush1.msra.mxu0 %v385
  %1706 = vmatprep.subr.mxu0 %v382
  %1707 = vmatpush1.msra.mxu0 %v381
  %1708 = vmatprep.subr.mxu0 0.0
  %1709 = vmatpush2.msra.mxu0 0.0
  %1710 = vmatprep.subr.mxu0 0.0
  %1711 = vmatpush2.msra.mxu0 0.0
  %1712 = vmatprep.subr.mxu0 0.0
  %1713 = vmatpush2.msra.mxu0 0.0
  %1714 = vmatprep.subr.mxu0 0.0
  %1715 = vmatpush2.msra.mxu0 0.0
  %1716 = vmatprep.subr.mxu0 0.0
  %1717 = vmatpush2.msra.mxu0 0.0
  %1718 = vmatprep.subr.mxu0 0.0
  %1719 = vmatpush2.msra.mxu0 0.0
  %1720 = vmatprep.subr.mxu0 0.0
  %1721 = vmatpush2.msra.mxu0 0.0
  %1722 = vmatprep.subr.mxu0 0.0
  %1723 = vmatpush2.msra.mxu0 0.0
  %1724 = vmatprep.subr.mxu0 0.0
  %1725 = vmatpush2.msra.mxu0 0.0
  %1726 = vmatprep.subr.mxu0 0.0
  %1727 = vmatpush2.msra.mxu0 0.0
  %1728 = vmatprep.subr.mxu0 0.0
  %1729 = vmatpush2.msra.mxu0 0.0
  %1730 = vmatprep.subr.mxu0 0.0
  %1731 = vmatpush2.msra.mxu0 0.0
  %1732 = vmatprep.subr.mxu0 0.0
  %1733 = vmatpush2.msra.mxu0 0.0
  %1734 = vmatprep.subr.mxu0 0.0
  %1735 = vmatpush2.msra.mxu0 0.0
  %1736 = vmatprep.subr.mxu0 0.0
  %1737 = vmatpush2.msra.mxu0 0.0
  %1738 = vmatprep.subr.mxu0 0.0
  %1739 = vmatpush2.msra.mxu0 0.0
  %1740 = vmatprep.mubr.f32.mxu0 0.0
  %1741 = vmatmul.mubr.f32.gmra.mxu0 %v1670
  %v1742 = vpop.f32.mrf.mxu0
  %v1743 = vadd.f32 0.0, %v1742
  %v1744 = vpop.f32.mrf.mxu0
  %v1745 = vadd.f32 0.0, %v1744
  %1746 = vdwg.mxu0
  %1747 = vmatprep.subr.mxu0 %v444
  %1748 = vmatpush1.msra.mxu0 %v443
  %1749 = vmatprep.subr.mxu0 %v440
  %1750 = vmatpush1.msra.mxu0 %v439
  %1751 = vmatprep.subr.mxu0 %v436
  %1752 = vmatpush1.msra.mxu0 %v435
  %1753 = vmatprep.subr.mxu0 %v432
  %1754 = vmatpush1.msra.mxu0 %v431
  %1755 = vmatprep.subr.mxu0 %v428
  %1756 = vmatpush1.msra.mxu0 %v427
  %1757 = vmatprep.subr.mxu0 %v424
  %1758 = vmatpush1.msra.mxu0 %v423
  %1759 = vmatprep.subr.mxu0 %v420
  %1760 = vmatpush1.msra.mxu0 %v419
  %1761 = vmatprep.subr.mxu0 %v416
  %1762 = vmatpush1.msra.mxu0 %v415
  %1763 = vmatprep.subr.mxu0 %v412
  %1764 = vmatpush1.msra.mxu0 %v411
  %1765 = vmatprep.subr.mxu0 %v408
  %1766 = vmatpush1.msra.mxu0 %v407
  %1767 = vmatprep.subr.mxu0 %v404
  %1768 = vmatpush1.msra.mxu0 %v403
  %1769 = vmatprep.subr.mxu0 %v400
  %1770 = vmatpush1.msra.mxu0 %v399
  %1771 = vmatprep.subr.mxu0 %v396
  %1772 = vmatpush1.msra.mxu0 %v395
  %1773 = vmatprep.subr.mxu0 %v392
  %1774 = vmatpush1.msra.mxu0 %v391
  %1775 = vmatprep.subr.mxu0 %v388
  %1776 = vmatpush1.msra.mxu0 %v387
  %1777 = vmatprep.subr.mxu0 %v384
  %1778 = vmatpush1.msra.mxu0 %v383
  %1779 = vmatprep.subr.mxu0 0.0
  %1780 = vmatpush2.msra.mxu0 0.0
  %1781 = vmatprep.subr.mxu0 0.0
  %1782 = vmatpush2.msra.mxu0 0.0
  %1783 = vmatprep.subr.mxu0 0.0
  %1784 = vmatpush2.msra.mxu0 0.0
  %1785 = vmatprep.subr.mxu0 0.0
  %1786 = vmatpush2.msra.mxu0 0.0
  %1787 = vmatprep.subr.mxu0 0.0
  %1788 = vmatpush2.msra.mxu0 0.0
  %1789 = vmatprep.subr.mxu0 0.0
  %1790 = vmatpush2.msra.mxu0 0.0
  %1791 = vmatprep.subr.mxu0 0.0
  %1792 = vmatpush2.msra.mxu0 0.0
  %1793 = vmatprep.subr.mxu0 0.0
  %1794 = vmatpush2.msra.mxu0 0.0
  %1795 = vmatprep.subr.mxu0 0.0
  %1796 = vmatpush2.msra.mxu0 0.0
  %1797 = vmatprep.subr.mxu0 0.0
  %1798 = vmatpush2.msra.mxu0 0.0
  %1799 = vmatprep.subr.mxu0 0.0
  %1800 = vmatpush2.msra.mxu0 0.0
  %1801 = vmatprep.subr.mxu0 0.0
  %1802 = vmatpush2.msra.mxu0 0.0
  %1803 = vmatprep.subr.mxu0 0.0
  %1804 = vmatpush2.msra.mxu0 0.0
  %1805 = vmatprep.subr.mxu0 0.0
  %1806 = vmatpush2.msra.mxu0 0.0
  %1807 = vmatprep.subr.mxu0 0.0
  %1808 = vmatpush2.msra.mxu0 0.0
  %1809 = vmatprep.subr.mxu0 0.0
  %1810 = vmatpush2.msra.mxu0 0.0
  %1811 = vmatprep.mubr.f32.mxu0 0.0
  %1812 = vmatmul.mubr.f32.gmra.mxu0 %v1670
  %v1813 = vpop.f32.mrf.mxu0
  %v1814 = vadd.f32 0.0, %v1813
  %v1815 = vpop.f32.mrf.mxu0
  %v1816 = vadd.f32 0.0, %v1815
  %1817 = vdwg.mxu0
  %v1818 = vadd.f32 %v1672, %v1743
  %v1819 = vadd.f32 %v1673, %v1745
  %v1820 = vadd.f32 %v1674, %v1814
  %v1821 = vadd.f32 %v1675, %v1816
  %v1822 = vxor.u32 %v1818, 2147483648
  %v1823 = vmul.f32 %v1822, 1.442695
  %v1824 = vpow.pop %v1823
  %v1825 = vadd.f32 %v1824, 1.0
  %v1826 = vrcp.pop %v1825
  %v1827 = vmul.f32 1.0, %v1826
  %v1828 = vxor.u32 %v1819, 2147483648
  %v1829 = vmul.f32 %v1828, 1.442695
  %v1830 = vpow.pop %v1829
  %v1831 = vadd.f32 %v1830, 1.0
  %v1832 = vrcp.pop %v1831
  %v1833 = vmul.f32 1.0, %v1832
  %v1834 = vtanh.pop %v1820
  %v1835 = vxor.u32 %v1821, 2147483648
  %v1836 = vmul.f32 %v1835, 1.442695
  %v1837 = vpow.pop %v1836
  %v1838 = vadd.f32 %v1837, 1.0
  %v1839 = vrcp.pop %v1838
  %v1840 = vmul.f32 1.0, %v1839
  %v1841 = vmul.f32 %v1833, %v1668
  %v1842 = vmul.f32 %v1827, %v1834
  %v1843 = vadd.f32 %v1841, %v1842
  %v1844 = vtanh.pop %v1843
  %v1845 = vmul.f32 %v1840, %v1844
  %1846 = vst [vmem:[#allocation2] sm:$0xff] %v1845
  %1847 = vst [vmem:[#allocation3] sm:$0xff] %v1843
  // Predicated region
  $region30: #{baseline_lstm_forward.3} parent=0 // pred_check
    %p1848 = pneg %p23
  $region31: #{baseline_lstm_forward.3} parent=0 // pred_check_branch
    %1850 = sbr.rel (%p1848) target = $region33
  $region32: #{baseline_lstm_forward.3} parent=0 // pred_region
    %v1851 = vld [vmem:[#allocation2] sm:$0xff]
    %v1852 = vld [vmem:[%s4] sm:$0xff]
    %v1853 = vld [vmem:[%s4 + $0x8] sm:$0xff]
    %v1854 = vld [vmem:[%s4 + $0x10] sm:$0xff]
    %v1855 = vld [vmem:[%s4 + $0x18] sm:$0xff]
    %v1856 = vld [vmem:[%s4 + $0x20] sm:$0xff]
    %v1857 = vld [vmem:[%s4 + $0x28] sm:$0xff]
    %v1858 = vld [vmem:[%s4 + $0x30] sm:$0xff]
    %v1859 = vld [vmem:[%s4 + $0x38] sm:$0xff]
    %v1860 = vld [vmem:[%s4 + $0x40] sm:$0xff]
    %v1861 = vld [vmem:[%s4 + $0x48] sm:$0xff]
    %v1862 = vld [vmem:[%s4 + $0x50] sm:$0xff]
    %v1863 = vld [vmem:[%s4 + $0x58] sm:$0xff]
    %v1864 = vld [vmem:[%s4 + $0x60] sm:$0xff]
    %v1865 = vld [vmem:[%s4 + $0x68] sm:$0xff]
    %v1866 = vld [vmem:[%s4 + $0x70] sm:$0xff]
    %v1867 = vld [vmem:[%s4 + $0x78] sm:$0xff]
    %v1868 = vld [vmem:[%s5] sm:$0x1]
    %v1870 = vlaneseq
    %v1871 = vshrl.u32 %v1870, 7
    %v1872 = vsub.s32 0, %v1871
    %v1873 = vrot.slane %v1868, %v1872
    %1875 = vmatprep.subr.mxu0 0.0
    %1876 = vmatpush1.msra.mxu0 %v1867
    %1877 = vmatprep.subr.mxu0 0.0
    %1878 = vmatpush1.msra.mxu0 %v1866
    %1879 = vmatprep.subr.mxu0 0.0
    %1880 = vmatpush1.msra.mxu0 %v1865
    %1881 = vmatprep.subr.mxu0 0.0
    %1882 = vmatpush1.msra.mxu0 %v1864
    %1883 = vmatprep.subr.mxu0 0.0
    %1884 = vmatpush1.msra.mxu0 %v1863
    %1885 = vmatprep.subr.mxu0 0.0
    %1886 = vmatpush1.msra.mxu0 %v1862
    %1887 = vmatprep.subr.mxu0 0.0
    %1888 = vmatpush1.msra.mxu0 %v1861
    %1889 = vmatprep.subr.mxu0 0.0
    %1890 = vmatpush1.msra.mxu0 %v1860
    %1891 = vmatprep.subr.mxu0 0.0
    %1892 = vmatpush1.msra.mxu0 %v1859
    %1893 = vmatprep.subr.mxu0 0.0
    %1894 = vmatpush1.msra.mxu0 %v1858
    %1895 = vmatprep.subr.mxu0 0.0
    %1896 = vmatpush1.msra.mxu0 %v1857
    %1897 = vmatprep.subr.mxu0 0.0
    %1898 = vmatpush1.msra.mxu0 %v1856
    %1899 = vmatprep.subr.mxu0 0.0
    %1900 = vmatpush1.msra.mxu0 %v1855
    %1901 = vmatprep.subr.mxu0 0.0
    %1902 = vmatpush1.msra.mxu0 %v1854
    %1903 = vmatprep.subr.mxu0 0.0
    %1904 = vmatpush1.msra.mxu0 %v1853
    %1905 = vmatprep.subr.mxu0 0.0
    %1906 = vmatpush1.msra.mxu0 %v1852
    %1907 = vmatprep.subr.mxu0 0.0
    %1908 = vmatpush2.msra.mxu0 0.0
    %1909 = vmatprep.subr.mxu0 0.0
    %1910 = vmatpush2.msra.mxu0 0.0
    %1911 = vmatprep.subr.mxu0 0.0
    %1912 = vmatpush2.msra.mxu0 0.0
    %1913 = vmatprep.subr.mxu0 0.0
    %1914 = vmatpush2.msra.mxu0 0.0
    %1915 = vmatprep.subr.mxu0 0.0
    %1916 = vmatpush2.msra.mxu0 0.0
    %1917 = vmatprep.subr.mxu0 0.0
    %1918 = vmatpush2.msra.mxu0 0.0
    %1919 = vmatprep.subr.mxu0 0.0
    %1920 = vmatpush2.msra.mxu0 0.0
    %1921 = vmatprep.subr.mxu0 0.0
    %1922 = vmatpush2.msra.mxu0 0.0
    %1923 = vmatprep.subr.mxu0 0.0
    %1924 = vmatpush2.msra.mxu0 0.0
    %1925 = vmatprep.subr.mxu0 0.0
    %1926 = vmatpush2.msra.mxu0 0.0
    %1927 = vmatprep.subr.mxu0 0.0
    %1928 = vmatpush2.msra.mxu0 0.0
    %1929 = vmatprep.subr.mxu0 0.0
    %1930 = vmatpush2.msra.mxu0 0.0
    %1931 = vmatprep.subr.mxu0 0.0
    %1932 = vmatpush2.msra.mxu0 0.0
    %1933 = vmatprep.subr.mxu0 0.0
    %1934 = vmatpush2.msra.mxu0 0.0
    %1935 = vmatprep.subr.mxu0 0.0
    %1936 = vmatpush2.msra.mxu0 0.0
    %1937 = vmatprep.subr.mxu0 0.0
    %1938 = vmatpush2.msra.mxu0 0.0
    %1939 = vmatprep.mubr.f32.mxu0 0.0
    %1940 = vmatmul.mubr.f32.gmra.mxu0 %v1851
    %v1941 = vpop.f32.mrf.mxu0
    %v1942 = vadd.f32 %v1873, %v1941
    %v1943 = vpop.f32.mrf.mxu0
    %1944 = vdwg.mxu0
    %1945 = vst [vmem:[%s6] sm:$0xff] %v1942
  $region33: #{baseline_lstm_forward.3} parent=0 // pred_fallthru
    _
  // Predicated region
  $region34: #{baseline_lstm_forward.3} parent=0 // pred_check
    _
  $region35: #{baseline_lstm_forward.3} parent=0 // pred_check_branch
    %1947 = sbr.rel (0) target = $region37
  $region36: #{baseline_lstm_forward.3} parent=0 // pred_region
    _
  $region37: #{baseline_lstm_forward.3} parent=0 // pred_fallthru
    _
  // Predicated region
  $region38: #{baseline_lstm_forward.3} parent=0 // pred_check
    _
  $region39: #{baseline_lstm_forward.3} parent=0 // pred_check_branch
    %1949 = sbr.rel (0) target = $region41
  $region40: #{baseline_lstm_forward.3} parent=0 // pred_region
    _
  $region41: #{baseline_lstm_forward.3} parent=0 // pred_fallthru
    _

// kernel: baseline_lstm_forward.2
$region0: #{baseline_lstm_forward.2}
  #allocation0 [shape = 'u32[]', space=smem, size = 0x4, offset = 0x4, fixed_abs, tag = 'smem constant byte address 0x4 - core index']
  #allocation1 [shape = 'u32[144,128]{1,0:T(1,128)}', space=vmem, size = 0x12000, scoped, tag = 'internal scratch']
  #allocation2 [shape = 'f32[8,128]{1,0:T(8,128)}', space=vmem, size = 0x1000, scoped, tag = 'scratch operand']
  #allocation3 [shape = 'f32[8,128]{1,0:T(8,128)}', space=vmem, size = 0x1000, scoped, tag = 'scratch operand']
  #allocation4 [shape = 'f32[8,8,512]{2,1,0:T(8,128)}', space=vmem, size = 0x20000, scoped, tag = 'scratch operand']
  %s0 = inlined_call_operand.vmem [shape: f32[8,8,128], index: 0, kind: input, shape index: {}]
  %s1 = inlined_call_operand.hbm [shape: f32[128,512], index: 1, kind: input, shape index: {}]
  %s2 = inlined_call_operand.hbm [shape: f32[128,512], index: 2, kind: input, shape index: {}]
  %s3 = inlined_call_operand.vmem [shape: f32[1,512], index: 3, kind: input, shape index: {}]
  %s4 = inlined_call_operand.vmem [shape: f32[8,8,128], index: 4, kind: output, shape index: {}]
  %s5 = sld [smem:[#allocation0]]
  $region38: #{baseline_lstm_forward.2} parent=0
    _
  %s7 = ssub.s32 1, %s5
  %s8 = scalar_select 0, %s7, %s5
  $region1: #{baseline_lstm_forward.2} parent=0
    #allocation5 [shape = 'u8[262144]{0}', space=vmem, size = 0x40000, scoped, tag = 'input window, operand 1, single buffered']
    #allocation6 [shape = 's32[1]{0}', space=sflag, size = 0x4, scoped, tag = 'scoped memory for baseline_lstm_forward.2']
    #allocation7 [shape = 'u8[262144]{0}', space=vmem, size = 0x40000, scoped, tag = 'input window, operand 2, single buffered']
    #allocation8 [shape = 's32[1]{0}', space=sflag, size = 0x4, scoped, tag = 'scoped memory for baseline_lstm_forward.2']
    %9 = vsyncpa [#allocation6], 0
    %10 = vsyncpa [#allocation8], 0
    // Predicated region
    $region2: #{baseline_lstm_forward.2} parent=1 // pred_check
      _
    $region3: #{baseline_lstm_forward.2} parent=1 // pred_check_branch
      %12 = sbr.rel (0) target = $region5
    $region4: #{baseline_lstm_forward.2} parent=1 // pred_region
      _
    $region5: #{baseline_lstm_forward.2} parent=1 // pred_fallthru
      _
    // Predicated region
    $region6: #{baseline_lstm_forward.2} parent=1 // pred_check
      _
    $region7: #{baseline_lstm_forward.2} parent=1 // pred_check_branch
      %14 = sbr.rel (0) target = $region9
    $region8: #{baseline_lstm_forward.2} parent=1 // pred_region
      %s16 = ssub.s32 8192, 8192
      %17 = vsyncadd [#allocation6], %s16
      %s18 = sshll.u32 [#allocation5], 4
      %s19 = int_to_ptr.vmem [resolvable:$true] %s18
      %24 = dma.hbm_to_vmem [thread:$0]  %s1, 8192, %s19, [#allocation6], 512, 512, 32
    $region9: #{baseline_lstm_forward.2} parent=1 // pred_fallthru
      _
    // Predicated region
    $region10: #{baseline_lstm_forward.2} parent=1 // pred_check
      _
    $region11: #{baseline_lstm_forward.2} parent=1 // pred_check_branch
      %26 = sbr.rel (0) target = $region13
    $region12: #{baseline_lstm_forward.2} parent=1 // pred_region
      %s28 = ssub.s32 8192, 8192
      %29 = vsyncadd [#allocation8], %s28
      %s30 = sshll.u32 [#allocation7], 4
      %s31 = int_to_ptr.vmem [resolvable:$true] %s30
      %36 = dma.hbm_to_vmem [thread:$0]  %s2, 8192, %s31, [#allocation8], 512, 512, 32
    $region13: #{baseline_lstm_forward.2} parent=1 // pred_fallthru
      _
    // Predicated region
    $region14: #{baseline_lstm_forward.2} parent=1 // pred_check
      _
    $region15: #{baseline_lstm_forward.2} parent=1 // pred_check_branch
      %38 = sbr.rel (0) target = $region17
    $region16: #{baseline_lstm_forward.2} parent=1 // pred_region
      _
    $region17: #{baseline_lstm_forward.2} parent=1 // pred_fallthru
      _
    // Predicated region
    $region18: #{baseline_lstm_forward.2} parent=1 // pred_check
      _
    $region19: #{baseline_lstm_forward.2} parent=1 // pred_check_branch
      %40 = sbr.rel (0) target = $region21
    $region20: #{baseline_lstm_forward.2} parent=1 // pred_region
      %41 = dma.done [#allocation6], 8192
    $region21: #{baseline_lstm_forward.2} parent=1 // pred_fallthru
      _
    // Predicated region
    $region22: #{baseline_lstm_forward.2} parent=1 // pred_check
      _
    $region23: #{baseline_lstm_forward.2} parent=1 // pred_check_branch
      %43 = sbr.rel (0) target = $region25
    $region24: #{baseline_lstm_forward.2} parent=1 // pred_region
      %44 = dma.done [#allocation8], 8192
    $region25: #{baseline_lstm_forward.2} parent=1 // pred_fallthru
      _
    %p45 = scmp.eq.s32.totalorder 0, 0
    // Predicated region
    $region26: #{baseline_lstm_forward.2} parent=1 // pred_check
      %p46 = pneg %p45
    $region27: #{baseline_lstm_forward.2} parent=1 // pred_check_branch
      %48 = sbr.rel (%p46) target = $region29
    $region28: #{baseline_lstm_forward.2} parent=1 // pred_region
      %49 = vst [vmem:[#allocation2] sm:$0xff] 0.0
      %50 = vst [vmem:[#allocation3] sm:$0xff] 0.0
    $region29: #{baseline_lstm_forward.2} parent=1 // pred_fallthru
      _
    %v51 = vld [vmem:[%s0] sm:$0xff]
    %v52 = vld [vmem:[%s0 + $0x8] sm:$0xff]
    %v53 = vld [vmem:[%s0 + $0x10] sm:$0xff]
    %v54 = vld [vmem:[%s0 + $0x18] sm:$0xff]
    %v55 = vld [vmem:[%s0 + $0x20] sm:$0xff]
    %v56 = vld [vmem:[%s0 + $0x28] sm:$0xff]
    %v57 = vld [vmem:[%s0 + $0x30] sm:$0xff]
    %v58 = vld [vmem:[%s0 + $0x38] sm:$0xff]
    %v59 = vld [vmem:[#allocation5] sm:$0xff]
    %v60 = vld [vmem:[#allocation5 + $0x8] sm:$0xff]
    %v61 = vld [vmem:[#allocation5 + $0x10] sm:$0xff]
    %v62 = vld [vmem:[#allocation5 + $0x18] sm:$0xff]
    %v63 = vld [vmem:[#allocation5 + $0x20] sm:$0xff]
    %v64 = vld [vmem:[#allocation5 + $0x28] sm:$0xff]
    %v65 = vld [vmem:[#allocation5 + $0x30] sm:$0xff]
    %v66 = vld [vmem:[#allocation5 + $0x38] sm:$0xff]
    %v67 = vld [vmem:[#allocation5 + $0x40] sm:$0xff]
    %v68 = vld [vmem:[#allocation5 + $0x48] sm:$0xff]
    %v69 = vld [vmem:[#allocation5 + $0x50] sm:$0xff]
    %v70 = vld [vmem:[#allocation5 + $0x58] sm:$0xff]
    %v71 = vld [vmem:[#allocation5 + $0x60] sm:$0xff]
    %v72 = vld [vmem:[#allocation5 + $0x68] sm:$0xff]
    %v73 = vld [vmem:[#allocation5 + $0x70] sm:$0xff]
    %v74 = vld [vmem:[#allocation5 + $0x78] sm:$0xff]
    %v75 = vld [vmem:[#allocation5 + $0x80] sm:$0xff]
    %v76 = vld [vmem:[#allocation5 + $0x88] sm:$0xff]
    %v77 = vld [vmem:[#allocation5 + $0x90] sm:$0xff]
    %v78 = vld [vmem:[#allocation5 + $0x98] sm:$0xff]
    %v79 = vld [vmem:[#allocation5 + $0xa0] sm:$0xff]
    %v80 = vld [vmem:[#allocation5 + $0xa8] sm:$0xff]
    %v81 = vld [vmem:[#allocation5 + $0xb0] sm:$0xff]
    %v82 = vld [vmem:[#allocation5 + $0xb8] sm:$0xff]
    %v83 = vld [vmem:[#allocation5 + $0xc0] sm:$0xff]
    %v84 = vld [vmem:[#allocation5 + $0xc8] sm:$0xff]
    %v85 = vld [vmem:[#allocation5 + $0xd0] sm:$0xff]
    %v86 = vld [vmem:[#allocation5 + $0xd8] sm:$0xff]
    %v87 = vld [vmem:[#allocation5 + $0xe0] sm:$0xff]
    %v88 = vld [vmem:[#allocation5 + $0xe8] sm:$0xff]
    %v89 = vld [vmem:[#allocation5 + $0xf0] sm:$0xff]
    %v90 = vld [vmem:[#allocation5 + $0xf8] sm:$0xff]
    %v91 = vld [vmem:[#allocation5 + $0x100] sm:$0xff]
    %v92 = vld [vmem:[#allocation5 + $0x108] sm:$0xff]
    %v93 = vld [vmem:[#allocation5 + $0x110] sm:$0xff]
    %v94 = vld [vmem:[#allocation5 + $0x118] sm:$0xff]
    %v95 = vld [vmem:[#allocation5 + $0x120] sm:$0xff]
    %v96 = vld [vmem:[#allocation5 + $0x128] sm:$0xff]
    %v97 = vld [vmem:[#allocation5 + $0x130] sm:$0xff]
    %v98 = vld [vmem:[#allocation5 + $0x138] sm:$0xff]
    %v99 = vld [vmem:[#allocation5 + $0x140] sm:$0xff]
    %v100 = vld [vmem:[#allocation5 + $0x148] sm:$0xff]
    %v101 = vld [vmem:[#allocation5 + $0x150] sm:$0xff]
    %v102 = vld [vmem:[#allocation5 + $0x158] sm:$0xff]
    %v103 = vld [vmem:[#allocation5 + $0x160] sm:$0xff]
    %v104 = vld [vmem:[#allocation5 + $0x168] sm:$0xff]
    %v105 = vld [vmem:[#allocation5 + $0x170] sm:$0xff]
    %v106 = vld [vmem:[#allocation5 + $0x178] sm:$0xff]
    %v107 = vld [vmem:[#allocation5 + $0x180] sm:$0xff]
    %v108 = vld [vmem:[#allocation5 + $0x188] sm:$0xff]
    %v109 = vld [vmem:[#allocation5 + $0x190] sm:$0xff]
    %v110 = vld [vmem:[#allocation5 + $0x198] sm:$0xff]
    %v111 = vld [vmem:[#allocation5 + $0x1a0] sm:$0xff]
    %v112 = vld [vmem:[#allocation5 + $0x1a8] sm:$0xff]
    %v113 = vld [vmem:[#allocation5 + $0x1b0] sm:$0xff]
    %v114 = vld [vmem:[#allocation5 + $0x1b8] sm:$0xff]
    %v115 = vld [vmem:[#allocation5 + $0x1c0] sm:$0xff]
    %v116 = vld [vmem:[#allocation5 + $0x1c8] sm:$0xff]
    %v117 = vld [vmem:[#allocation5 + $0x1d0] sm:$0xff]
    %v118 = vld [vmem:[#allocation5 + $0x1d8] sm:$0xff]
    %v119 = vld [vmem:[#allocation5 + $0x1e0] sm:$0xff]
    %v120 = vld [vmem:[#allocation5 + $0x1e8] sm:$0xff]
    %v121 = vld [vmem:[#allocation5 + $0x1f0] sm:$0xff]
    %v122 = vld [vmem:[#allocation5 + $0x1f8] sm:$0xff]
    %v123 = vld [vmem:[%s3] sm:$0xf]
    %v125 = vlaneseq
    %v126 = vshrl.u32 %v125, 7
    %v127 = vsub.s32 0, %v126
    %v128 = vrot.slane %v123, %v127
    %v129 = vlaneseq
    %v130 = vshrl.u32 %v129, 7
    %v131 = vsub.s32 1, %v130
    %v132 = vrot.slane %v123, %v131
    %v133 = vlaneseq
    %v134 = vshrl.u32 %v133, 7
    %v135 = vsub.s32 2, %v134
    %v136 = vrot.slane %v123, %v135
    %v137 = vlaneseq
    %v138 = vshrl.u32 %v137, 7
    %v139 = vsub.s32 3, %v138
    %v140 = vrot.slane %v123, %v139
    %145 = vmatprep.subr.mxu0 %v120
    %146 = vmatpush1.msra.mxu0 %v119
    %147 = vmatprep.subr.mxu0 %v116
    %148 = vmatpush1.msra.mxu0 %v115
    %149 = vmatprep.subr.mxu0 %v112
    %150 = vmatpush1.msra.mxu0 %v111
    %151 = vmatprep.subr.mxu0 %v108
    %152 = vmatpush1.msra.mxu0 %v107
    %153 = vmatprep.subr.mxu0 %v104
    %154 = vmatpush1.msra.mxu0 %v103
    %155 = vmatprep.subr.mxu0 %v100
    %156 = vmatpush1.msra.mxu0 %v99
    %157 = vmatprep.subr.mxu0 %v96
    %158 = vmatpush1.msra.mxu0 %v95
    %159 = vmatprep.subr.mxu0 %v92
    %160 = vmatpush1.msra.mxu0 %v91
    %161 = vmatprep.subr.mxu0 %v88
    %162 = vmatpush1.msra.mxu0 %v87
    %163 = vmatprep.subr.mxu0 %v84
    %164 = vmatpush1.msra.mxu0 %v83
    %165 = vmatprep.subr.mxu0 %v80
    %166 = vmatpush1.msra.mxu0 %v79
    %167 = vmatprep.subr.mxu0 %v76
    %168 = vmatpush1.msra.mxu0 %v75
    %169 = vmatprep.subr.mxu0 %v72
    %170 = vmatpush1.msra.mxu0 %v71
    %171 = vmatprep.subr.mxu0 %v68
    %172 = vmatpush1.msra.mxu0 %v67
    %173 = vmatprep.subr.mxu0 %v64
    %174 = vmatpush1.msra.mxu0 %v63
    %175 = vmatprep.subr.mxu0 %v60
    %176 = vmatpush1.msra.mxu0 %v59
    %177 = vmatprep.subr.mxu0 0.0
    %178 = vmatpush2.msra.mxu0 0.0
    %179 = vmatprep.subr.mxu0 0.0
    %180 = vmatpush2.msra.mxu0 0.0
    %181 = vmatprep.subr.mxu0 0.0
    %182 = vmatpush2.msra.mxu0 0.0
    %183 = vmatprep.subr.mxu0 0.0
    %184 = vmatpush2.msra.mxu0 0.0
    %185 = vmatprep.subr.mxu0 0.0
    %186 = vmatpush2.msra.mxu0 0.0
    %187 = vmatprep.subr.mxu0 0.0
    %188 = vmatpush2.msra.mxu0 0.0
    %189 = vmatprep.subr.mxu0 0.0
    %190 = vmatpush2.msra.mxu0 0.0
    %191 = vmatprep.subr.mxu0 0.0
    %192 = vmatpush2.msra.mxu0 0.0
    %193 = vmatprep.subr.mxu0 0.0
    %194 = vmatpush2.msra.mxu0 0.0
    %195 = vmatprep.subr.mxu0 0.0
    %196 = vmatpush2.msra.mxu0 0.0
    %197 = vmatprep.subr.mxu0 0.0
    %198 = vmatpush2.msra.mxu0 0.0
    %199 = vmatprep.subr.mxu0 0.0
    %200 = vmatpush2.msra.mxu0 0.0
    %201 = vmatprep.subr.mxu0 0.0
    %202 = vmatpush2.msra.mxu0 0.0
    %203 = vmatprep.subr.mxu0 0.0
    %204 = vmatpush2.msra.mxu0 0.0
    %205 = vmatprep.subr.mxu0 0.0
    %206 = vmatpush2.msra.mxu0 0.0
    %207 = vmatprep.subr.mxu0 0.0
    %208 = vmatpush2.msra.mxu0 0.0
    %209 = vmatprep.mubr.f32.mxu0 0.0
    %210 = vmatmul.mubr.f32.gmra.mxu0 %v51
    %v211 = vpop.f32.mrf.mxu0
    %v212 = vadd.f32 %v128, %v211
    %v213 = vpop.f32.mrf.mxu0
    %v214 = vadd.f32 %v132, %v213
    %215 = vmatprep.mubr.f32.mxu0 0.0
    %216 = vmatmul.mubr.f32.gmra.mxu0 %v52
    %v217 = vpop.f32.mrf.mxu0
    %v218 = vadd.f32 %v128, %v217
    %v219 = vpop.f32.mrf.mxu0
    %v220 = vadd.f32 %v132, %v219
    %221 = vmatprep.mubr.f32.mxu0 0.0
    %222 = vmatmul.mubr.f32.gmra.mxu0 %v53
    %v223 = vpop.f32.mrf.mxu0
    %v224 = vadd.f32 %v128, %v223
    %v225 = vpop.f32.mrf.mxu0
    %v226 = vadd.f32 %v132, %v225
    %227 = vmatprep.mubr.f32.mxu0 0.0
    %228 = vmatmul.mubr.f32.gmra.mxu0 %v54
    %v229 = vpop.f32.mrf.mxu0
    %v230 = vadd.f32 %v128, %v229
    %v231 = vpop.f32.mrf.mxu0
    %v232 = vadd.f32 %v132, %v231
    %233 = vmatprep.mubr.f32.mxu0 0.0
    %234 = vmatmul.mubr.f32.gmra.mxu0 %v55
    %v235 = vpop.f32.mrf.mxu0
    %v236 = vadd.f32 %v128, %v235
    %v237 = vpop.f32.mrf.mxu0
    %v238 = vadd.f32 %v132, %v237
    %239 = vmatprep.mubr.f32.mxu0 0.0
    %240 = vmatmul.mubr.f32.gmra.mxu0 %v56
    %v241 = vpop.f32.mrf.mxu0
    %v242 = vadd.f32 %v128, %v241
    %v243 = vpop.f32.mrf.mxu0
    %v244 = vadd.f32 %v132, %v243
    %245 = vmatprep.mubr.f32.mxu0 0.0
    %246 = vmatmul.mubr.f32.gmra.mxu0 %v57
    %v247 = vpop.f32.mrf.mxu0
    %v248 = vadd.f32 %v128, %v247
    %v249 = vpop.f32.mrf.mxu0
    %v250 = vadd.f32 %v132, %v249
    %251 = vmatprep.mubr.f32.mxu0 0.0
    %252 = vmatmul.mubr.f32.gmra.mxu0 %v58
    %v253 = vpop.f32.mrf.mxu0
    %v254 = vadd.f32 %v128, %v253
    %v255 = vpop.f32.mrf.mxu0
    %v256 = vadd.f32 %v132, %v255
    %257 = vdwg.mxu0
    %258 = vmatprep.subr.mxu0 %v122
    %259 = vmatpush1.msra.mxu0 %v121
    %260 = vmatprep.subr.mxu0 %v118
    %261 = vmatpush1.msra.mxu0 %v117
    %262 = vmatprep.subr.mxu0 %v114
    %263 = vmatpush1.msra.mxu0 %v113
    %264 = vmatprep.subr.mxu0 %v110
    %265 = vmatpush1.msra.mxu0 %v109
    %266 = vmatprep.subr.mxu0 %v106
    %267 = vmatpush1.msra.mxu0 %v105
    %268 = vmatprep.subr.mxu0 %v102
    %269 = vmatpush1.msra.mxu0 %v101
    %270 = vmatprep.subr.mxu0 %v98
    %271 = vmatpush1.msra.mxu0 %v97
    %272 = vmatprep.subr.mxu0 %v94
    %273 = vmatpush1.msra.mxu0 %v93
    %274 = vmatprep.subr.mxu0 %v90
    %275 = vmatpush1.msra.mxu0 %v89
    %276 = vmatprep.subr.mxu0 %v86
    %277 = vmatpush1.msra.mxu0 %v85
    %278 = vmatprep.subr.mxu0 %v82
    %279 = vmatpush1.msra.mxu0 %v81
    %280 = vmatprep.subr.mxu0 %v78
    %281 = vmatpush1.msra.mxu0 %v77
    %282 = vmatprep.subr.mxu0 %v74
    %283 = vmatpush1.msra.mxu0 %v73
    %284 = vmatprep.subr.mxu0 %v70
    %285 = vmatpush1.msra.mxu0 %v69
    %286 = vmatprep.subr.mxu0 %v66
    %287 = vmatpush1.msra.mxu0 %v65
    %288 = vmatprep.subr.mxu0 %v62
    %289 = vmatpush1.msra.mxu0 %v61
    %290 = vmatprep.subr.mxu0 0.0
    %291 = vmatpush2.msra.mxu0 0.0
    %292 = vmatprep.subr.mxu0 0.0
    %293 = vmatpush2.msra.mxu0 0.0
    %294 = vmatprep.subr.mxu0 0.0
    %295 = vmatpush2.msra.mxu0 0.0
    %296 = vmatprep.subr.mxu0 0.0
    %297 = vmatpush2.msra.mxu0 0.0
    %298 = vmatprep.subr.mxu0 0.0
    %299 = vmatpush2.msra.mxu0 0.0
    %300 = vmatprep.subr.mxu0 0.0
    %301 = vmatpush2.msra.mxu0 0.0
    %302 = vmatprep.subr.mxu0 0.0
    %303 = vmatpush2.msra.mxu0 0.0
    %304 = vmatprep.subr.mxu0 0.0
    %305 = vmatpush2.msra.mxu0 0.0
    %306 = vmatprep.subr.mxu0 0.0
    %307 = vmatpush2.msra.mxu0 0.0
    %308 = vmatprep.subr.mxu0 0.0
    %309 = vmatpush2.msra.mxu0 0.0
    %310 = vmatprep.subr.mxu0 0.0
    %311 = vmatpush2.msra.mxu0 0.0
    %312 = vmatprep.subr.mxu0 0.0
    %313 = vmatpush2.msra.mxu0 0.0
    %314 = vmatprep.subr.mxu0 0.0
    %315 = vmatpush2.msra.mxu0 0.0
    %316 = vmatprep.subr.mxu0 0.0
    %317 = vmatpush2.msra.mxu0 0.0
    %318 = vmatprep.subr.mxu0 0.0
    %319 = vmatpush2.msra.mxu0 0.0
    %320 = vmatprep.subr.mxu0 0.0
    %321 = vmatpush2.msra.mxu0 0.0
    %322 = vmatprep.mubr.f32.mxu0 0.0
    %323 = vmatmul.mubr.f32.gmra.mxu0 %v51
    %v324 = vpop.f32.mrf.mxu0
    %v325 = vadd.f32 %v136, %v324
    %v326 = vpop.f32.mrf.mxu0
    %v327 = vadd.f32 %v140, %v326
    %328 = vmatprep.mubr.f32.mxu0 0.0
    %329 = vmatmul.mubr.f32.gmra.mxu0 %v52
    %v330 = vpop.f32.mrf.mxu0
    %v331 = vadd.f32 %v136, %v330
    %v332 = vpop.f32.mrf.mxu0
    %v333 = vadd.f32 %v140, %v332
    %334 = vmatprep.mubr.f32.mxu0 0.0
    %335 = vmatmul.mubr.f32.gmra.mxu0 %v53
    %v336 = vpop.f32.mrf.mxu0
    %v337 = vadd.f32 %v136, %v336
    %v338 = vpop.f32.mrf.mxu0
    %v339 = vadd.f32 %v140, %v338
    %340 = vmatprep.mubr.f32.mxu0 0.0
    %341 = vmatmul.mubr.f32.gmra.mxu0 %v54
    %v342 = vpop.f32.mrf.mxu0
    %v343 = vadd.f32 %v136, %v342
    %v344 = vpop.f32.mrf.mxu0
    %v345 = vadd.f32 %v140, %v344
    %346 = vmatprep.mubr.f32.mxu0 0.0
    %347 = vmatmul.mubr.f32.gmra.mxu0 %v55
    %v348 = vpop.f32.mrf.mxu0
    %v349 = vadd.f32 %v136, %v348
    %v350 = vpop.f32.mrf.mxu0
    %v351 = vadd.f32 %v140, %v350
    %352 = vmatprep.mubr.f32.mxu0 0.0
    %353 = vmatmul.mubr.f32.gmra.mxu0 %v56
    %v354 = vpop.f32.mrf.mxu0
    %v355 = vadd.f32 %v136, %v354
    %v356 = vpop.f32.mrf.mxu0
    %v357 = vadd.f32 %v140, %v356
    %358 = vmatprep.mubr.f32.mxu0 0.0
    %359 = vmatmul.mubr.f32.gmra.mxu0 %v57
    %v360 = vpop.f32.mrf.mxu0
    %v361 = vadd.f32 %v136, %v360
    %v362 = vpop.f32.mrf.mxu0
    %v363 = vadd.f32 %v140, %v362
    %364 = vmatprep.mubr.f32.mxu0 0.0
    %365 = vmatmul.mubr.f32.gmra.mxu0 %v58
    %v366 = vpop.f32.mrf.mxu0
    %v367 = vadd.f32 %v136, %v366
    %v368 = vpop.f32.mrf.mxu0
    %v369 = vadd.f32 %v140, %v368
    %370 = vdwg.mxu0
    %371 = vst [vmem:[#allocation4] sm:$0xff] %v212
    %372 = vst [vmem:[#allocation4 + $0x8] sm:$0xff] %v214
    %373 = vst [vmem:[#allocation4 + $0x10] sm:$0xff] %v325
    %374 = vst [vmem:[#allocation4 + $0x18] sm:$0xff] %v327
    %375 = vst [vmem:[#allocation4 + $0x20] sm:$0xff] %v218
    %376 = vst [vmem:[#allocation4 + $0x28] sm:$0xff] %v220
    %377 = vst [vmem:[#allocation4 + $0x30] sm:$0xff] %v331
    %378 = vst [vmem:[#allocation4 + $0x38] sm:$0xff] %v333
    %379 = vst [vmem:[#allocation4 + $0x40] sm:$0xff] %v224
    %380 = vst [vmem:[#allocation4 + $0x48] sm:$0xff] %v226
    %381 = vst [vmem:[#allocation4 + $0x50] sm:$0xff] %v337
    %382 = vst [vmem:[#allocation4 + $0x58] sm:$0xff] %v339
    %383 = vst [vmem:[#allocation4 + $0x60] sm:$0xff] %v230
    %384 = vst [vmem:[#allocation4 + $0x68] sm:$0xff] %v232
    %385 = vst [vmem:[#allocation4 + $0x70] sm:$0xff] %v343
    %386 = vst [vmem:[#allocation4 + $0x78] sm:$0xff] %v345
    %387 = vst [vmem:[#allocation4 + $0x80] sm:$0xff] %v236
    %388 = vst [vmem:[#allocation4 + $0x88] sm:$0xff] %v238
    %389 = vst [vmem:[#allocation4 + $0x90] sm:$0xff] %v349
    %390 = vst [vmem:[#allocation4 + $0x98] sm:$0xff] %v351
    %391 = vst [vmem:[#allocation4 + $0xa0] sm:$0xff] %v242
    %392 = vst [vmem:[#allocation4 + $0xa8] sm:$0xff] %v244
    %393 = vst [vmem:[#allocation4 + $0xb0] sm:$0xff] %v355
    %394 = vst [vmem:[#allocation4 + $0xb8] sm:$0xff] %v357
    %395 = vst [vmem:[#allocation4 + $0xc0] sm:$0xff] %v248
    %396 = vst [vmem:[#allocation4 + $0xc8] sm:$0xff] %v250
    %397 = vst [vmem:[#allocation4 + $0xd0] sm:$0xff] %v361
    %398 = vst [vmem:[#allocation4 + $0xd8] sm:$0xff] %v363
    %399 = vst [vmem:[#allocation4 + $0xe0] sm:$0xff] %v254
    %400 = vst [vmem:[#allocation4 + $0xe8] sm:$0xff] %v256
    %401 = vst [vmem:[#allocation4 + $0xf0] sm:$0xff] %v367
    %402 = vst [vmem:[#allocation4 + $0xf8] sm:$0xff] %v369
    %v403 = vld [vmem:[#allocation7] sm:$0xff]
    %v404 = vld [vmem:[#allocation7 + $0x8] sm:$0xff]
    %v405 = vld [vmem:[#allocation7 + $0x10] sm:$0xff]
    %v406 = vld [vmem:[#allocation7 + $0x18] sm:$0xff]
    %v407 = vld [vmem:[#allocation7 + $0x20] sm:$0xff]
    %v408 = vld [vmem:[#allocation7 + $0x28] sm:$0xff]
    %v409 = vld [vmem:[#allocation7 + $0x30] sm:$0xff]
    %v410 = vld [vmem:[#allocation7 + $0x38] sm:$0xff]
    %v411 = vld [vmem:[#allocation7 + $0x40] sm:$0xff]
    %v412 = vld [vmem:[#allocation7 + $0x48] sm:$0xff]
    %v413 = vld [vmem:[#allocation7 + $0x50] sm:$0xff]
    %v414 = vld [vmem:[#allocation7 + $0x58] sm:$0xff]
    %v415 = vld [vmem:[#allocation7 + $0x60] sm:$0xff]
    %v416 = vld [vmem:[#allocation7 + $0x68] sm:$0xff]
    %v417 = vld [vmem:[#allocation7 + $0x70] sm:$0xff]
    %v418 = vld [vmem:[#allocation7 + $0x78] sm:$0xff]
    %v419 = vld [vmem:[#allocation7 + $0x80] sm:$0xff]
    %v420 = vld [vmem:[#allocation7 + $0x88] sm:$0xff]
    %v421 = vld [vmem:[#allocation7 + $0x90] sm:$0xff]
    %v422 = vld [vmem:[#allocation7 + $0x98] sm:$0xff]
    %v423 = vld [vmem:[#allocation7 + $0xa0] sm:$0xff]
    %v424 = vld [vmem:[#allocation7 + $0xa8] sm:$0xff]
    %v425 = vld [vmem:[#allocation7 + $0xb0] sm:$0xff]
    %v426 = vld [vmem:[#allocation7 + $0xb8] sm:$0xff]
    %v427 = vld [vmem:[#allocation7 + $0xc0] sm:$0xff]
    %v428 = vld [vmem:[#allocation7 + $0xc8] sm:$0xff]
    %v429 = vld [vmem:[#allocation7 + $0xd0] sm:$0xff]
    %v430 = vld [vmem:[#allocation7 + $0xd8] sm:$0xff]
    %v431 = vld [vmem:[#allocation7 + $0xe0] sm:$0xff]
    %v432 = vld [vmem:[#allocation7 + $0xe8] sm:$0xff]
    %v433 = vld [vmem:[#allocation7 + $0xf0] sm:$0xff]
    %v434 = vld [vmem:[#allocation7 + $0xf8] sm:$0xff]
    %v435 = vld [vmem:[#allocation7 + $0x100] sm:$0xff]
    %v436 = vld [vmem:[#allocation7 + $0x108] sm:$0xff]
    %v437 = vld [vmem:[#allocation7 + $0x110] sm:$0xff]
    %v438 = vld [vmem:[#allocation7 + $0x118] sm:$0xff]
    %v439 = vld [vmem:[#allocation7 + $0x120] sm:$0xff]
    %v440 = vld [vmem:[#allocation7 + $0x128] sm:$0xff]
    %v441 = vld [vmem:[#allocation7 + $0x130] sm:$0xff]
    %v442 = vld [vmem:[#allocation7 + $0x138] sm:$0xff]
    %v443 = vld [vmem:[#allocation7 + $0x140] sm:$0xff]
    %v444 = vld [vmem:[#allocation7 + $0x148] sm:$0xff]
    %v445 = vld [vmem:[#allocation7 + $0x150] sm:$0xff]
    %v446 = vld [vmem:[#allocation7 + $0x158] sm:$0xff]
    %v447 = vld [vmem:[#allocation7 + $0x160] sm:$0xff]
    %v448 = vld [vmem:[#allocation7 + $0x168] sm:$0xff]
    %v449 = vld [vmem:[#allocation7 + $0x170] sm:$0xff]
    %v450 = vld [vmem:[#allocation7 + $0x178] sm:$0xff]
    %v451 = vld [vmem:[#allocation7 + $0x180] sm:$0xff]
    %v452 = vld [vmem:[#allocation7 + $0x188] sm:$0xff]
    %v453 = vld [vmem:[#allocation7 + $0x190] sm:$0xff]
    %v454 = vld [vmem:[#allocation7 + $0x198] sm:$0xff]
    %v455 = vld [vmem:[#allocation7 + $0x1a0] sm:$0xff]
    %v456 = vld [vmem:[#allocation7 + $0x1a8] sm:$0xff]
    %v457 = vld [vmem:[#allocation7 + $0x1b0] sm:$0xff]
    %v458 = vld [vmem:[#allocation7 + $0x1b8] sm:$0xff]
    %v459 = vld [vmem:[#allocation7 + $0x1c0] sm:$0xff]
    %v460 = vld [vmem:[#allocation7 + $0x1c8] sm:$0xff]
    %v461 = vld [vmem:[#allocation7 + $0x1d0] sm:$0xff]
    %v462 = vld [vmem:[#allocation7 + $0x1d8] sm:$0xff]
    %v463 = vld [vmem:[#allocation7 + $0x1e0] sm:$0xff]
    %v464 = vld [vmem:[#allocation7 + $0x1e8] sm:$0xff]
    %v465 = vld [vmem:[#allocation7 + $0x1f0] sm:$0xff]
    %v466 = vld [vmem:[#allocation7 + $0x1f8] sm:$0xff]
    %v467 = vld [vmem:[#allocation2] sm:$0xff]
    %v468 = vld [vmem:[#allocation3] sm:$0xff]
    %v469 = vld [vmem:[#allocation4] sm:$0xff]
    %v470 = vld [vmem:[#allocation4 + $0x8] sm:$0xff]
    %v471 = vld [vmem:[#allocation4 + $0x10] sm:$0xff]
    %v472 = vld [vmem:[#allocation4 + $0x18] sm:$0xff]
    %473 = vmatprep.subr.mxu0 %v464
    %474 = vmatpush1.msra.mxu0 %v463
    %475 = vmatprep.subr.mxu0 %v460
    %476 = vmatpush1.msra.mxu0 %v459
    %477 = vmatprep.subr.mxu0 %v456
    %478 = vmatpush1.msra.mxu0 %v455
    %479 = vmatprep.subr.mxu0 %v452
    %480 = vmatpush1.msra.mxu0 %v451
    %481 = vmatprep.subr.mxu0 %v448
    %482 = vmatpush1.msra.mxu0 %v447
    %483 = vmatprep.subr.mxu0 %v444
    %484 = vmatpush1.msra.mxu0 %v443
    %485 = vmatprep.subr.mxu0 %v440
    %486 = vmatpush1.msra.mxu0 %v439
    %487 = vmatprep.subr.mxu0 %v436
    %488 = vmatpush1.msra.mxu0 %v435
    %489 = vmatprep.subr.mxu0 %v432
    %490 = vmatpush1.msra.mxu0 %v431
    %491 = vmatprep.subr.mxu0 %v428
    %492 = vmatpush1.msra.mxu0 %v427
    %493 = vmatprep.subr.mxu0 %v424
    %494 = vmatpush1.msra.mxu0 %v423
    %495 = vmatprep.subr.mxu0 %v420
    %496 = vmatpush1.msra.mxu0 %v419
    %497 = vmatprep.subr.mxu0 %v416
    %498 = vmatpush1.msra.mxu0 %v415
    %499 = vmatprep.subr.mxu0 %v412
    %500 = vmatpush1.msra.mxu0 %v411
    %501 = vmatprep.subr.mxu0 %v408
    %502 = vmatpush1.msra.mxu0 %v407
    %503 = vmatprep.subr.mxu0 %v404
    %504 = vmatpush1.msra.mxu0 %v403
    %505 = vmatprep.subr.mxu0 0.0
    %506 = vmatpush2.msra.mxu0 0.0
    %507 = vmatprep.subr.mxu0 0.0
    %508 = vmatpush2.msra.mxu0 0.0
    %509 = vmatprep.subr.mxu0 0.0
    %510 = vmatpush2.msra.mxu0 0.0
    %511 = vmatprep.subr.mxu0 0.0
    %512 = vmatpush2.msra.mxu0 0.0
    %513 = vmatprep.subr.mxu0 0.0
    %514 = vmatpush2.msra.mxu0 0.0
    %515 = vmatprep.subr.mxu0 0.0
    %516 = vmatpush2.msra.mxu0 0.0
    %517 = vmatprep.subr.mxu0 0.0
    %518 = vmatpush2.msra.mxu0 0.0
    %519 = vmatprep.subr.mxu0 0.0
    %520 = vmatpush2.msra.mxu0 0.0
    %521 = vmatprep.subr.mxu0 0.0
    %522 = vmatpush2.msra.mxu0 0.0
    %523 = vmatprep.subr.mxu0 0.0
    %524 = vmatpush2.msra.mxu0 0.0
    %525 = vmatprep.subr.mxu0 0.0
    %526 = vmatpush2.msra.mxu0 0.0
    %527 = vmatprep.subr.mxu0 0.0
    %528 = vmatpush2.msra.mxu0 0.0
    %529 = vmatprep.subr.mxu0 0.0
    %530 = vmatpush2.msra.mxu0 0.0
    %531 = vmatprep.subr.mxu0 0.0
    %532 = vmatpush2.msra.mxu0 0.0
    %533 = vmatprep.subr.mxu0 0.0
    %534 = vmatpush2.msra.mxu0 0.0
    %535 = vmatprep.subr.mxu0 0.0
    %536 = vmatpush2.msra.mxu0 0.0
    %537 = vmatprep.mubr.f32.mxu0 0.0
    %538 = vmatmul.mubr.f32.gmra.mxu0 %v467
    %v539 = vpop.f32.mrf.mxu0
    %v540 = vadd.f32 0.0, %v539
    %v541 = vpop.f32.mrf.mxu0
    %v542 = vadd.f32 0.0, %v541
    %543 = vdwg.mxu0
    %544 = vmatprep.subr.mxu0 %v466
    %545 = vmatpush1.msra.mxu0 %v465
    %546 = vmatprep.subr.mxu0 %v462
    %547 = vmatpush1.msra.mxu0 %v461
    %548 = vmatprep.subr.mxu0 %v458
    %549 = vmatpush1.msra.mxu0 %v457
    %550 = vmatprep.subr.mxu0 %v454
    %551 = vmatpush1.msra.mxu0 %v453
    %552 = vmatprep.subr.mxu0 %v450
    %553 = vmatpush1.msra.mxu0 %v449
    %554 = vmatprep.subr.mxu0 %v446
    %555 = vmatpush1.msra.mxu0 %v445
    %556 = vmatprep.subr.mxu0 %v442
    %557 = vmatpush1.msra.mxu0 %v441
    %558 = vmatprep.subr.mxu0 %v438
    %559 = vmatpush1.msra.mxu0 %v437
    %560 = vmatprep.subr.mxu0 %v434
    %561 = vmatpush1.msra.mxu0 %v433
    %562 = vmatprep.subr.mxu0 %v430
    %563 = vmatpush1.msra.mxu0 %v429
    %564 = vmatprep.subr.mxu0 %v426
    %565 = vmatpush1.msra.mxu0 %v425
    %566 = vmatprep.subr.mxu0 %v422
    %567 = vmatpush1.msra.mxu0 %v421
    %568 = vmatprep.subr.mxu0 %v418
    %569 = vmatpush1.msra.mxu0 %v417
    %570 = vmatprep.subr.mxu0 %v414
    %571 = vmatpush1.msra.mxu0 %v413
    %572 = vmatprep.subr.mxu0 %v410
    %573 = vmatpush1.msra.mxu0 %v409
    %574 = vmatprep.subr.mxu0 %v406
    %575 = vmatpush1.msra.mxu0 %v405
    %576 = vmatprep.subr.mxu0 0.0
    %577 = vmatpush2.msra.mxu0 0.0
    %578 = vmatprep.subr.mxu0 0.0
    %579 = vmatpush2.msra.mxu0 0.0
    %580 = vmatprep.subr.mxu0 0.0
    %581 = vmatpush2.msra.mxu0 0.0
    %582 = vmatprep.subr.mxu0 0.0
    %583 = vmatpush2.msra.mxu0 0.0
    %584 = vmatprep.subr.mxu0 0.0
    %585 = vmatpush2.msra.mxu0 0.0
    %586 = vmatprep.subr.mxu0 0.0
    %587 = vmatpush2.msra.mxu0 0.0
    %588 = vmatprep.subr.mxu0 0.0
    %589 = vmatpush2.msra.mxu0 0.0
    %590 = vmatprep.subr.mxu0 0.0
    %591 = vmatpush2.msra.mxu0 0.0
    %592 = vmatprep.subr.mxu0 0.0
    %593 = vmatpush2.msra.mxu0 0.0
    %594 = vmatprep.subr.mxu0 0.0
    %595 = vmatpush2.msra.mxu0 0.0
    %596 = vmatprep.subr.mxu0 0.0
    %597 = vmatpush2.msra.mxu0 0.0
    %598 = vmatprep.subr.mxu0 0.0
    %599 = vmatpush2.msra.mxu0 0.0
    %600 = vmatprep.subr.mxu0 0.0
    %601 = vmatpush2.msra.mxu0 0.0
    %602 = vmatprep.subr.mxu0 0.0
    %603 = vmatpush2.msra.mxu0 0.0
    %604 = vmatprep.subr.mxu0 0.0
    %605 = vmatpush2.msra.mxu0 0.0
    %606 = vmatprep.subr.mxu0 0.0
    %607 = vmatpush2.msra.mxu0 0.0
    %608 = vmatprep.mubr.f32.mxu0 0.0
    %609 = vmatmul.mubr.f32.gmra.mxu0 %v467
    %v610 = vpop.f32.mrf.mxu0
    %v611 = vadd.f32 0.0, %v610
    %v612 = vpop.f32.mrf.mxu0
    %v613 = vadd.f32 0.0, %v612
    %614 = vdwg.mxu0
    %v615 = vadd.f32 %v469, %v540
    %v616 = vadd.f32 %v470, %v542
    %v617 = vadd.f32 %v471, %v611
    %v618 = vadd.f32 %v472, %v613
    %v619 = vxor.u32 %v615, 2147483648
    %v620 = vmul.f32 %v619, 1.442695
    %v621 = vpow.pop %v620
    %v622 = vadd.f32 %v621, 1.0
    %v623 = vrcp.pop %v622
    %v624 = vmul.f32 1.0, %v623
    %v625 = vxor.u32 %v616, 2147483648
    %v626 = vmul.f32 %v625, 1.442695
    %v627 = vpow.pop %v626
    %v628 = vadd.f32 %v627, 1.0
    %v629 = vrcp.pop %v628
    %v630 = vmul.f32 1.0, %v629
    %v631 = vtanh.pop %v617
    %v632 = vxor.u32 %v618, 2147483648
    %v633 = vmul.f32 %v632, 1.442695
    %v634 = vpow.pop %v633
    %v635 = vadd.f32 %v634, 1.0
    %v636 = vrcp.pop %v635
    %v637 = vmul.f32 1.0, %v636
    %v638 = vmul.f32 %v630, %v468
    %v639 = vmul.f32 %v624, %v631
    %v640 = vadd.f32 %v638, %v639
    %v641 = vtanh.pop %v640
    %v642 = vmul.f32 %v637, %v641
    %643 = vst [vmem:[%s4] sm:$0xff] %v642
    %s644 = scalar_lea.vmem [#allocation4], 32
    %v645 = vld [vmem:[%s644] sm:$0xff]
    %v646 = vld [vmem:[%s644 + $0x8] sm:$0xff]
    %v647 = vld [vmem:[%s644 + $0x10] sm:$0xff]
    %v648 = vld [vmem:[%s644 + $0x18] sm:$0xff]
    %649 = vmatprep.subr.mxu0 %v464
    %650 = vmatpush1.msra.mxu0 %v463
    %651 = vmatprep.subr.mxu0 %v460
    %652 = vmatpush1.msra.mxu0 %v459
    %653 = vmatprep.subr.mxu0 %v456
    %654 = vmatpush1.msra.mxu0 %v455
    %655 = vmatprep.subr.mxu0 %v452
    %656 = vmatpush1.msra.mxu0 %v451
    %657 = vmatprep.subr.mxu0 %v448
    %658 = vmatpush1.msra.mxu0 %v447
    %659 = vmatprep.subr.mxu0 %v444
    %660 = vmatpush1.msra.mxu0 %v443
    %661 = vmatprep.subr.mxu0 %v440
    %662 = vmatpush1.msra.mxu0 %v439
    %663 = vmatprep.subr.mxu0 %v436
    %664 = vmatpush1.msra.mxu0 %v435
    %665 = vmatprep.subr.mxu0 %v432
    %666 = vmatpush1.msra.mxu0 %v431
    %667 = vmatprep.subr.mxu0 %v428
    %668 = vmatpush1.msra.mxu0 %v427
    %669 = vmatprep.subr.mxu0 %v424
    %670 = vmatpush1.msra.mxu0 %v423
    %671 = vmatprep.subr.mxu0 %v420
    %672 = vmatpush1.msra.mxu0 %v419
    %673 = vmatprep.subr.mxu0 %v416
    %674 = vmatpush1.msra.mxu0 %v415
    %675 = vmatprep.subr.mxu0 %v412
    %676 = vmatpush1.msra.mxu0 %v411
    %677 = vmatprep.subr.mxu0 %v408
    %678 = vmatpush1.msra.mxu0 %v407
    %679 = vmatprep.subr.mxu0 %v404
    %680 = vmatpush1.msra.mxu0 %v403
    %681 = vmatprep.subr.mxu0 0.0
    %682 = vmatpush2.msra.mxu0 0.0
    %683 = vmatprep.subr.mxu0 0.0
    %684 = vmatpush2.msra.mxu0 0.0
    %685 = vmatprep.subr.mxu0 0.0
    %686 = vmatpush2.msra.mxu0 0.0
    %687 = vmatprep.subr.mxu0 0.0
    %688 = vmatpush2.msra.mxu0 0.0
    %689 = vmatprep.subr.mxu0 0.0
    %690 = vmatpush2.msra.mxu0 0.0
    %691 = vmatprep.subr.mxu0 0.0
    %692 = vmatpush2.msra.mxu0 0.0
    %693 = vmatprep.subr.mxu0 0.0
    %694 = vmatpush2.msra.mxu0 0.0
    %695 = vmatprep.subr.mxu0 0.0
    %696 = vmatpush2.msra.mxu0 0.0
    %697 = vmatprep.subr.mxu0 0.0
    %698 = vmatpush2.msra.mxu0 0.0
    %699 = vmatprep.subr.mxu0 0.0
    %700 = vmatpush2.msra.mxu0 0.0
    %701 = vmatprep.subr.mxu0 0.0
    %702 = vmatpush2.msra.mxu0 0.0
    %703 = vmatprep.subr.mxu0 0.0
    %704 = vmatpush2.msra.mxu0 0.0
    %705 = vmatprep.subr.mxu0 0.0
    %706 = vmatpush2.msra.mxu0 0.0
    %707 = vmatprep.subr.mxu0 0.0
    %708 = vmatpush2.msra.mxu0 0.0
    %709 = vmatprep.subr.mxu0 0.0
    %710 = vmatpush2.msra.mxu0 0.0
    %711 = vmatprep.subr.mxu0 0.0
    %712 = vmatpush2.msra.mxu0 0.0
    %713 = vmatprep.mubr.f32.mxu0 0.0
    %714 = vmatmul.mubr.f32.gmra.mxu0 %v642
    %v715 = vpop.f32.mrf.mxu0
    %v716 = vadd.f32 0.0, %v715
    %v717 = vpop.f32.mrf.mxu0
    %v718 = vadd.f32 0.0, %v717
    %719 = vdwg.mxu0
    %720 = vmatprep.subr.mxu0 %v466
    %721 = vmatpush1.msra.mxu0 %v465
    %722 = vmatprep.subr.mxu0 %v462
    %723 = vmatpush1.msra.mxu0 %v461
    %724 = vmatprep.subr.mxu0 %v458
    %725 = vmatpush1.msra.mxu0 %v457
    %726 = vmatprep.subr.mxu0 %v454
    %727 = vmatpush1.msra.mxu0 %v453
    %728 = vmatprep.subr.mxu0 %v450
    %729 = vmatpush1.msra.mxu0 %v449
    %730 = vmatprep.subr.mxu0 %v446
    %731 = vmatpush1.msra.mxu0 %v445
    %732 = vmatprep.subr.mxu0 %v442
    %733 = vmatpush1.msra.mxu0 %v441
    %734 = vmatprep.subr.mxu0 %v438
    %735 = vmatpush1.msra.mxu0 %v437
    %736 = vmatprep.subr.mxu0 %v434
    %737 = vmatpush1.msra.mxu0 %v433
    %738 = vmatprep.subr.mxu0 %v430
    %739 = vmatpush1.msra.mxu0 %v429
    %740 = vmatprep.subr.mxu0 %v426
    %741 = vmatpush1.msra.mxu0 %v425
    %742 = vmatprep.subr.mxu0 %v422
    %743 = vmatpush1.msra.mxu0 %v421
    %744 = vmatprep.subr.mxu0 %v418
    %745 = vmatpush1.msra.mxu0 %v417
    %746 = vmatprep.subr.mxu0 %v414
    %747 = vmatpush1.msra.mxu0 %v413
    %748 = vmatprep.subr.mxu0 %v410
    %749 = vmatpush1.msra.mxu0 %v409
    %750 = vmatprep.subr.mxu0 %v406
    %751 = vmatpush1.msra.mxu0 %v405
    %752 = vmatprep.subr.mxu0 0.0
    %753 = vmatpush2.msra.mxu0 0.0
    %754 = vmatprep.subr.mxu0 0.0
    %755 = vmatpush2.msra.mxu0 0.0
    %756 = vmatprep.subr.mxu0 0.0
    %757 = vmatpush2.msra.mxu0 0.0
    %758 = vmatprep.subr.mxu0 0.0
    %759 = vmatpush2.msra.mxu0 0.0
    %760 = vmatprep.subr.mxu0 0.0
    %761 = vmatpush2.msra.mxu0 0.0
    %762 = vmatprep.subr.mxu0 0.0
    %763 = vmatpush2.msra.mxu0 0.0
    %764 = vmatprep.subr.mxu0 0.0
    %765 = vmatpush2.msra.mxu0 0.0
    %766 = vmatprep.subr.mxu0 0.0
    %767 = vmatpush2.msra.mxu0 0.0
    %768 = vmatprep.subr.mxu0 0.0
    %769 = vmatpush2.msra.mxu0 0.0
    %770 = vmatprep.subr.mxu0 0.0
    %771 = vmatpush2.msra.mxu0 0.0
    %772 = vmatprep.subr.mxu0 0.0
    %773 = vmatpush2.msra.mxu0 0.0
    %774 = vmatprep.subr.mxu0 0.0
    %775 = vmatpush2.msra.mxu0 0.0
    %776 = vmatprep.subr.mxu0 0.0
    %777 = vmatpush2.msra.mxu0 0.0
    %778 = vmatprep.subr.mxu0 0.0
    %779 = vmatpush2.msra.mxu0 0.0
    %780 = vmatprep.subr.mxu0 0.0
    %781 = vmatpush2.msra.mxu0 0.0
    %782 = vmatprep.subr.mxu0 0.0
    %783 = vmatpush2.msra.mxu0 0.0
    %784 = vmatprep.mubr.f32.mxu0 0.0
    %785 = vmatmul.mubr.f32.gmra.mxu0 %v642
    %v786 = vpop.f32.mrf.mxu0
    %v787 = vadd.f32 0.0, %v786
    %v788 = vpop.f32.mrf.mxu0
    %v789 = vadd.f32 0.0, %v788
    %790 = vdwg.mxu0
    %v791 = vadd.f32 %v645, %v716
    %v792 = vadd.f32 %v646, %v718
    %v793 = vadd.f32 %v647, %v787
    %v794 = vadd.f32 %v648, %v789
    %v795 = vxor.u32 %v791, 2147483648
    %v796 = vmul.f32 %v795, 1.442695
    %v797 = vpow.pop %v796
    %v798 = vadd.f32 %v797, 1.0
    %v799 = vrcp.pop %v798
    %v800 = vmul.f32 1.0, %v799
    %v801 = vxor.u32 %v792, 2147483648
    %v802 = vmul.f32 %v801, 1.442695
    %v803 = vpow.pop %v802
    %v804 = vadd.f32 %v803, 1.0
    %v805 = vrcp.pop %v804
    %v806 = vmul.f32 1.0, %v805
    %v807 = vtanh.pop %v793
    %v808 = vxor.u32 %v794, 2147483648
    %v809 = vmul.f32 %v808, 1.442695
    %v810 = vpow.pop %v809
    %v811 = vadd.f32 %v810, 1.0
    %v812 = vrcp.pop %v811
    %v813 = vmul.f32 1.0, %v812
    %v814 = vmul.f32 %v806, %v640
    %v815 = vmul.f32 %v800, %v807
    %v816 = vadd.f32 %v814, %v815
    %v817 = vtanh.pop %v816
    %v818 = vmul.f32 %v813, %v817
    %s819 = scalar_lea.vmem %s4, 8
    %820 = vst [vmem:[%s819] sm:$0xff] %v818
    %s821 = scalar_lea.vmem [#allocation4], 64
    %v822 = vld [vmem:[%s821] sm:$0xff]
    %v823 = vld [vmem:[%s821 + $0x8] sm:$0xff]
    %v824 = vld [vmem:[%s821 + $0x10] sm:$0xff]
    %v825 = vld [vmem:[%s821 + $0x18] sm:$0xff]
    %826 = vmatprep.subr.mxu0 %v464
    %827 = vmatpush1.msra.mxu0 %v463
    %828 = vmatprep.subr.mxu0 %v460
    %829 = vmatpush1.msra.mxu0 %v459
    %830 = vmatprep.subr.mxu0 %v456
    %831 = vmatpush1.msra.mxu0 %v455
    %832 = vmatprep.subr.mxu0 %v452
    %833 = vmatpush1.msra.mxu0 %v451
    %834 = vmatprep.subr.mxu0 %v448
    %835 = vmatpush1.msra.mxu0 %v447
    %836 = vmatprep.subr.mxu0 %v444
    %837 = vmatpush1.msra.mxu0 %v443
    %838 = vmatprep.subr.mxu0 %v440
    %839 = vmatpush1.msra.mxu0 %v439
    %840 = vmatprep.subr.mxu0 %v436
    %841 = vmatpush1.msra.mxu0 %v435
    %842 = vmatprep.subr.mxu0 %v432
    %843 = vmatpush1.msra.mxu0 %v431
    %844 = vmatprep.subr.mxu0 %v428
    %845 = vmatpush1.msra.mxu0 %v427
    %846 = vmatprep.subr.mxu0 %v424
    %847 = vmatpush1.msra.mxu0 %v423
    %848 = vmatprep.subr.mxu0 %v420
    %849 = vmatpush1.msra.mxu0 %v419
    %850 = vmatprep.subr.mxu0 %v416
    %851 = vmatpush1.msra.mxu0 %v415
    %852 = vmatprep.subr.mxu0 %v412
    %853 = vmatpush1.msra.mxu0 %v411
    %854 = vmatprep.subr.mxu0 %v408
    %855 = vmatpush1.msra.mxu0 %v407
    %856 = vmatprep.subr.mxu0 %v404
    %857 = vmatpush1.msra.mxu0 %v403
    %858 = vmatprep.subr.mxu0 0.0
    %859 = vmatpush2.msra.mxu0 0.0
    %860 = vmatprep.subr.mxu0 0.0
    %861 = vmatpush2.msra.mxu0 0.0
    %862 = vmatprep.subr.mxu0 0.0
    %863 = vmatpush2.msra.mxu0 0.0
    %864 = vmatprep.subr.mxu0 0.0
    %865 = vmatpush2.msra.mxu0 0.0
    %866 = vmatprep.subr.mxu0 0.0
    %867 = vmatpush2.msra.mxu0 0.0
    %868 = vmatprep.subr.mxu0 0.0
    %869 = vmatpush2.msra.mxu0 0.0
    %870 = vmatprep.subr.mxu0 0.0
    %871 = vmatpush2.msra.mxu0 0.0
    %872 = vmatprep.subr.mxu0 0.0
    %873 = vmatpush2.msra.mxu0 0.0
    %874 = vmatprep.subr.mxu0 0.0
    %875 = vmatpush2.msra.mxu0 0.0
    %876 = vmatprep.subr.mxu0 0.0
    %877 = vmatpush2.msra.mxu0 0.0
    %878 = vmatprep.subr.mxu0 0.0
    %879 = vmatpush2.msra.mxu0 0.0
    %880 = vmatprep.subr.mxu0 0.0
    %881 = vmatpush2.msra.mxu0 0.0
    %882 = vmatprep.subr.mxu0 0.0
    %883 = vmatpush2.msra.mxu0 0.0
    %884 = vmatprep.subr.mxu0 0.0
    %885 = vmatpush2.msra.mxu0 0.0
    %886 = vmatprep.subr.mxu0 0.0
    %887 = vmatpush2.msra.mxu0 0.0
    %888 = vmatprep.subr.mxu0 0.0
    %889 = vmatpush2.msra.mxu0 0.0
    %890 = vmatprep.mubr.f32.mxu0 0.0
    %891 = vmatmul.mubr.f32.gmra.mxu0 %v818
    %v892 = vpop.f32.mrf.mxu0
    %v893 = vadd.f32 0.0, %v892
    %v894 = vpop.f32.mrf.mxu0
    %v895 = vadd.f32 0.0, %v894
    %896 = vdwg.mxu0
    %897 = vmatprep.subr.mxu0 %v466
    %898 = vmatpush1.msra.mxu0 %v465
    %899 = vmatprep.subr.mxu0 %v462
    %900 = vmatpush1.msra.mxu0 %v461
    %901 = vmatprep.subr.mxu0 %v458
    %902 = vmatpush1.msra.mxu0 %v457
    %903 = vmatprep.subr.mxu0 %v454
    %904 = vmatpush1.msra.mxu0 %v453
    %905 = vmatprep.subr.mxu0 %v450
    %906 = vmatpush1.msra.mxu0 %v449
    %907 = vmatprep.subr.mxu0 %v446
    %908 = vmatpush1.msra.mxu0 %v445
    %909 = vmatprep.subr.mxu0 %v442
    %910 = vmatpush1.msra.mxu0 %v441
    %911 = vmatprep.subr.mxu0 %v438
    %912 = vmatpush1.msra.mxu0 %v437
    %913 = vmatprep.subr.mxu0 %v434
    %914 = vmatpush1.msra.mxu0 %v433
    %915 = vmatprep.subr.mxu0 %v430
    %916 = vmatpush1.msra.mxu0 %v429
    %917 = vmatprep.subr.mxu0 %v426
    %918 = vmatpush1.msra.mxu0 %v425
    %919 = vmatprep.subr.mxu0 %v422
    %920 = vmatpush1.msra.mxu0 %v421
    %921 = vmatprep.subr.mxu0 %v418
    %922 = vmatpush1.msra.mxu0 %v417
    %923 = vmatprep.subr.mxu0 %v414
    %924 = vmatpush1.msra.mxu0 %v413
    %925 = vmatprep.subr.mxu0 %v410
    %926 = vmatpush1.msra.mxu0 %v409
    %927 = vmatprep.subr.mxu0 %v406
    %928 = vmatpush1.msra.mxu0 %v405
    %929 = vmatprep.subr.mxu0 0.0
    %930 = vmatpush2.msra.mxu0 0.0
    %931 = vmatprep.subr.mxu0 0.0
    %932 = vmatpush2.msra.mxu0 0.0
    %933 = vmatprep.subr.mxu0 0.0
    %934 = vmatpush2.msra.mxu0 0.0
    %935 = vmatprep.subr.mxu0 0.0
    %936 = vmatpush2.msra.mxu0 0.0
    %937 = vmatprep.subr.mxu0 0.0
    %938 = vmatpush2.msra.mxu0 0.0
    %939 = vmatprep.subr.mxu0 0.0
    %940 = vmatpush2.msra.mxu0 0.0
    %941 = vmatprep.subr.mxu0 0.0
    %942 = vmatpush2.msra.mxu0 0.0
    %943 = vmatprep.subr.mxu0 0.0
    %944 = vmatpush2.msra.mxu0 0.0
    %945 = vmatprep.subr.mxu0 0.0
    %946 = vmatpush2.msra.mxu0 0.0
    %947 = vmatprep.subr.mxu0 0.0
    %948 = vmatpush2.msra.mxu0 0.0
    %949 = vmatprep.subr.mxu0 0.0
    %950 = vmatpush2.msra.mxu0 0.0
    %951 = vmatprep.subr.mxu0 0.0
    %952 = vmatpush2.msra.mxu0 0.0
    %953 = vmatprep.subr.mxu0 0.0
    %954 = vmatpush2.msra.mxu0 0.0
    %955 = vmatprep.subr.mxu0 0.0
    %956 = vmatpush2.msra.mxu0 0.0
    %957 = vmatprep.subr.mxu0 0.0
    %958 = vmatpush2.msra.mxu0 0.0
    %959 = vmatprep.subr.mxu0 0.0
    %960 = vmatpush2.msra.mxu0 0.0
    %961 = vmatprep.mubr.f32.mxu0 0.0
    %962 = vmatmul.mubr.f32.gmra.mxu0 %v818
    %v963 = vpop.f32.mrf.mxu0
    %v964 = vadd.f32 0.0, %v963
    %v965 = vpop.f32.mrf.mxu0
    %v966 = vadd.f32 0.0, %v965
    %967 = vdwg.mxu0
    %v968 = vadd.f32 %v822, %v893
    %v969 = vadd.f32 %v823, %v895
    %v970 = vadd.f32 %v824, %v964
    %v971 = vadd.f32 %v825, %v966
    %v972 = vxor.u32 %v968, 2147483648
    %v973 = vmul.f32 %v972, 1.442695
    %v974 = vpow.pop %v973
    %v975 = vadd.f32 %v974, 1.0
    %v976 = vrcp.pop %v975
    %v977 = vmul.f32 1.0, %v976
    %v978 = vxor.u32 %v969, 2147483648
    %v979 = vmul.f32 %v978, 1.442695
    %v980 = vpow.pop %v979
    %v981 = vadd.f32 %v980, 1.0
    %v982 = vrcp.pop %v981
    %v983 = vmul.f32 1.0, %v982
    %v984 = vtanh.pop %v970
    %v985 = vxor.u32 %v971, 2147483648
    %v986 = vmul.f32 %v985, 1.442695
    %v987 = vpow.pop %v986
    %v988 = vadd.f32 %v987, 1.0
    %v989 = vrcp.pop %v988
    %v990 = vmul.f32 1.0, %v989
    %v991 = vmul.f32 %v983, %v816
    %v992 = vmul.f32 %v977, %v984
    %v993 = vadd.f32 %v991, %v992
    %v994 = vtanh.pop %v993
    %v995 = vmul.f32 %v990, %v994
    %s996 = scalar_lea.vmem %s4, 16
    %997 = vst [vmem:[%s996] sm:$0xff] %v995
    %s998 = scalar_lea.vmem [#allocation4], 96
    %v999 = vld [vmem:[%s998] sm:$0xff]
    %v1000 = vld [vmem:[%s998 + $0x8] sm:$0xff]
    %v1001 = vld [vmem:[%s998 + $0x10] sm:$0xff]
    %v1002 = vld [vmem:[%s998 + $0x18] sm:$0xff]
    %1003 = vmatprep.subr.mxu0 %v464
    %1004 = vmatpush1.msra.mxu0 %v463
    %1005 = vmatprep.subr.mxu0 %v460
    %1006 = vmatpush1.msra.mxu0 %v459
    %1007 = vmatprep.subr.mxu0 %v456
    %1008 = vmatpush1.msra.mxu0 %v455
    %1009 = vmatprep.subr.mxu0 %v452
    %1010 = vmatpush1.msra.mxu0 %v451
    %1011 = vmatprep.subr.mxu0 %v448
    %1012 = vmatpush1.msra.mxu0 %v447
    %1013 = vmatprep.subr.mxu0 %v444
    %1014 = vmatpush1.msra.mxu0 %v443
    %1015 = vmatprep.subr.mxu0 %v440
    %1016 = vmatpush1.msra.mxu0 %v439
    %1017 = vmatprep.subr.mxu0 %v436
    %1018 = vmatpush1.msra.mxu0 %v435
    %1019 = vmatprep.subr.mxu0 %v432
    %1020 = vmatpush1.msra.mxu0 %v431
    %1021 = vmatprep.subr.mxu0 %v428
    %1022 = vmatpush1.msra.mxu0 %v427
    %1023 = vmatprep.subr.mxu0 %v424
    %1024 = vmatpush1.msra.mxu0 %v423
    %1025 = vmatprep.subr.mxu0 %v420
    %1026 = vmatpush1.msra.mxu0 %v419
    %1027 = vmatprep.subr.mxu0 %v416
    %1028 = vmatpush1.msra.mxu0 %v415
    %1029 = vmatprep.subr.mxu0 %v412
    %1030 = vmatpush1.msra.mxu0 %v411
    %1031 = vmatprep.subr.mxu0 %v408
    %1032 = vmatpush1.msra.mxu0 %v407
    %1033 = vmatprep.subr.mxu0 %v404
    %1034 = vmatpush1.msra.mxu0 %v403
    %1035 = vmatprep.subr.mxu0 0.0
    %1036 = vmatpush2.msra.mxu0 0.0
    %1037 = vmatprep.subr.mxu0 0.0
    %1038 = vmatpush2.msra.mxu0 0.0
    %1039 = vmatprep.subr.mxu0 0.0
    %1040 = vmatpush2.msra.mxu0 0.0
    %1041 = vmatprep.subr.mxu0 0.0
    %1042 = vmatpush2.msra.mxu0 0.0
    %1043 = vmatprep.subr.mxu0 0.0
    %1044 = vmatpush2.msra.mxu0 0.0
    %1045 = vmatprep.subr.mxu0 0.0
    %1046 = vmatpush2.msra.mxu0 0.0
    %1047 = vmatprep.subr.mxu0 0.0
    %1048 = vmatpush2.msra.mxu0 0.0
    %1049 = vmatprep.subr.mxu0 0.0
    %1050 = vmatpush2.msra.mxu0 0.0
    %1051 = vmatprep.subr.mxu0 0.0
    %1052 = vmatpush2.msra.mxu0 0.0
    %1053 = vmatprep.subr.mxu0 0.0
    %1054 = vmatpush2.msra.mxu0 0.0
    %1055 = vmatprep.subr.mxu0 0.0
    %1056 = vmatpush2.msra.mxu0 0.0
    %1057 = vmatprep.subr.mxu0 0.0
    %1058 = vmatpush2.msra.mxu0 0.0
    %1059 = vmatprep.subr.mxu0 0.0
    %1060 = vmatpush2.msra.mxu0 0.0
    %1061 = vmatprep.subr.mxu0 0.0
    %1062 = vmatpush2.msra.mxu0 0.0
    %1063 = vmatprep.subr.mxu0 0.0
    %1064 = vmatpush2.msra.mxu0 0.0
    %1065 = vmatprep.subr.mxu0 0.0
    %1066 = vmatpush2.msra.mxu0 0.0
    %1067 = vmatprep.mubr.f32.mxu0 0.0
    %1068 = vmatmul.mubr.f32.gmra.mxu0 %v995
    %v1069 = vpop.f32.mrf.mxu0
    %v1070 = vadd.f32 0.0, %v1069
    %v1071 = vpop.f32.mrf.mxu0
    %v1072 = vadd.f32 0.0, %v1071
    %1073 = vdwg.mxu0
    %1074 = vmatprep.subr.mxu0 %v466
    %1075 = vmatpush1.msra.mxu0 %v465
    %1076 = vmatprep.subr.mxu0 %v462
    %1077 = vmatpush1.msra.mxu0 %v461
    %1078 = vmatprep.subr.mxu0 %v458
    %1079 = vmatpush1.msra.mxu0 %v457
    %1080 = vmatprep.subr.mxu0 %v454
    %1081 = vmatpush1.msra.mxu0 %v453
    %1082 = vmatprep.subr.mxu0 %v450
    %1083 = vmatpush1.msra.mxu0 %v449
    %1084 = vmatprep.subr.mxu0 %v446
    %1085 = vmatpush1.msra.mxu0 %v445
    %1086 = vmatprep.subr.mxu0 %v442
    %1087 = vmatpush1.msra.mxu0 %v441
    %1088 = vmatprep.subr.mxu0 %v438
    %1089 = vmatpush1.msra.mxu0 %v437
    %1090 = vmatprep.subr.mxu0 %v434
    %1091 = vmatpush1.msra.mxu0 %v433
    %1092 = vmatprep.subr.mxu0 %v430
    %1093 = vmatpush1.msra.mxu0 %v429
    %1094 = vmatprep.subr.mxu0 %v426
    %1095 = vmatpush1.msra.mxu0 %v425
    %1096 = vmatprep.subr.mxu0 %v422
    %1097 = vmatpush1.msra.mxu0 %v421
    %1098 = vmatprep.subr.mxu0 %v418
    %1099 = vmatpush1.msra.mxu0 %v417
    %1100 = vmatprep.subr.mxu0 %v414
    %1101 = vmatpush1.msra.mxu0 %v413
    %1102 = vmatprep.subr.mxu0 %v410
    %1103 = vmatpush1.msra.mxu0 %v409
    %1104 = vmatprep.subr.mxu0 %v406
    %1105 = vmatpush1.msra.mxu0 %v405
    %1106 = vmatprep.subr.mxu0 0.0
    %1107 = vmatpush2.msra.mxu0 0.0
    %1108 = vmatprep.subr.mxu0 0.0
    %1109 = vmatpush2.msra.mxu0 0.0
    %1110 = vmatprep.subr.mxu0 0.0
    %1111 = vmatpush2.msra.mxu0 0.0
    %1112 = vmatprep.subr.mxu0 0.0
    %1113 = vmatpush2.msra.mxu0 0.0
    %1114 = vmatprep.subr.mxu0 0.0
    %1115 = vmatpush2.msra.mxu0 0.0
    %1116 = vmatprep.subr.mxu0 0.0
    %1117 = vmatpush2.msra.mxu0 0.0
    %1118 = vmatprep.subr.mxu0 0.0
    %1119 = vmatpush2.msra.mxu0 0.0
    %1120 = vmatprep.subr.mxu0 0.0
    %1121 = vmatpush2.msra.mxu0 0.0
    %1122 = vmatprep.subr.mxu0 0.0
    %1123 = vmatpush2.msra.mxu0 0.0
    %1124 = vmatprep.subr.mxu0 0.0
    %1125 = vmatpush2.msra.mxu0 0.0
    %1126 = vmatprep.subr.mxu0 0.0
    %1127 = vmatpush2.msra.mxu0 0.0
    %1128 = vmatprep.subr.mxu0 0.0
    %1129 = vmatpush2.msra.mxu0 0.0
    %1130 = vmatprep.subr.mxu0 0.0
    %1131 = vmatpush2.msra.mxu0 0.0
    %1132 = vmatprep.subr.mxu0 0.0
    %1133 = vmatpush2.msra.mxu0 0.0
    %1134 = vmatprep.subr.mxu0 0.0
    %1135 = vmatpush2.msra.mxu0 0.0
    %1136 = vmatprep.subr.mxu0 0.0
    %1137 = vmatpush2.msra.mxu0 0.0
    %1138 = vmatprep.mubr.f32.mxu0 0.0
    %1139 = vmatmul.mubr.f32.gmra.mxu0 %v995
    %v1140 = vpop.f32.mrf.mxu0
    %v1141 = vadd.f32 0.0, %v1140
    %v1142 = vpop.f32.mrf.mxu0
    %v1143 = vadd.f32 0.0, %v1142
    %1144 = vdwg.mxu0
    %v1145 = vadd.f32 %v999, %v1070
    %v1146 = vadd.f32 %v1000, %v1072
    %v1147 = vadd.f32 %v1001, %v1141
    %v1148 = vadd.f32 %v1002, %v1143
    %v1149 = vxor.u32 %v1145, 2147483648
    %v1150 = vmul.f32 %v1149, 1.442695
    %v1151 = vpow.pop %v1150
    %v1152 = vadd.f32 %v1151, 1.0
    %v1153 = vrcp.pop %v1152
    %v1154 = vmul.f32 1.0, %v1153
    %v1155 = vxor.u32 %v1146, 2147483648
    %v1156 = vmul.f32 %v1155, 1.442695
    %v1157 = vpow.pop %v1156
    %v1158 = vadd.f32 %v1157, 1.0
    %v1159 = vrcp.pop %v1158
    %v1160 = vmul.f32 1.0, %v1159
    %v1161 = vtanh.pop %v1147
    %v1162 = vxor.u32 %v1148, 2147483648
    %v1163 = vmul.f32 %v1162, 1.442695
    %v1164 = vpow.pop %v1163
    %v1165 = vadd.f32 %v1164, 1.0
    %v1166 = vrcp.pop %v1165
    %v1167 = vmul.f32 1.0, %v1166
    %v1168 = vmul.f32 %v1160, %v993
    %v1169 = vmul.f32 %v1154, %v1161
    %v1170 = vadd.f32 %v1168, %v1169
    %v1171 = vtanh.pop %v1170
    %v1172 = vmul.f32 %v1167, %v1171
    %s1173 = scalar_lea.vmem %s4, 24
    %1174 = vst [vmem:[%s1173] sm:$0xff] %v1172
    %s1175 = scalar_lea.vmem [#allocation4], 128
    %v1176 = vld [vmem:[%s1175] sm:$0xff]
    %v1177 = vld [vmem:[%s1175 + $0x8] sm:$0xff]
    %v1178 = vld [vmem:[%s1175 + $0x10] sm:$0xff]
    %v1179 = vld [vmem:[%s1175 + $0x18] sm:$0xff]
    %1180 = vmatprep.subr.mxu0 %v464
    %1181 = vmatpush1.msra.mxu0 %v463
    %1182 = vmatprep.subr.mxu0 %v460
    %1183 = vmatpush1.msra.mxu0 %v459
    %1184 = vmatprep.subr.mxu0 %v456
    %1185 = vmatpush1.msra.mxu0 %v455
    %1186 = vmatprep.subr.mxu0 %v452
    %1187 = vmatpush1.msra.mxu0 %v451
    %1188 = vmatprep.subr.mxu0 %v448
    %1189 = vmatpush1.msra.mxu0 %v447
    %1190 = vmatprep.subr.mxu0 %v444
    %1191 = vmatpush1.msra.mxu0 %v443
    %1192 = vmatprep.subr.mxu0 %v440
    %1193 = vmatpush1.msra.mxu0 %v439
    %1194 = vmatprep.subr.mxu0 %v436
    %1195 = vmatpush1.msra.mxu0 %v435
    %1196 = vmatprep.subr.mxu0 %v432
    %1197 = vmatpush1.msra.mxu0 %v431
    %1198 = vmatprep.subr.mxu0 %v428
    %1199 = vmatpush1.msra.mxu0 %v427
    %1200 = vmatprep.subr.mxu0 %v424
    %1201 = vmatpush1.msra.mxu0 %v423
    %1202 = vmatprep.subr.mxu0 %v420
    %1203 = vmatpush1.msra.mxu0 %v419
    %1204 = vmatprep.subr.mxu0 %v416
    %1205 = vmatpush1.msra.mxu0 %v415
    %1206 = vmatprep.subr.mxu0 %v412
    %1207 = vmatpush1.msra.mxu0 %v411
    %1208 = vmatprep.subr.mxu0 %v408
    %1209 = vmatpush1.msra.mxu0 %v407
    %1210 = vmatprep.subr.mxu0 %v404
    %1211 = vmatpush1.msra.mxu0 %v403
    %1212 = vmatprep.subr.mxu0 0.0
    %1213 = vmatpush2.msra.mxu0 0.0
    %1214 = vmatprep.subr.mxu0 0.0
    %1215 = vmatpush2.msra.mxu0 0.0
    %1216 = vmatprep.subr.mxu0 0.0
    %1217 = vmatpush2.msra.mxu0 0.0
    %1218 = vmatprep.subr.mxu0 0.0
    %1219 = vmatpush2.msra.mxu0 0.0
    %1220 = vmatprep.subr.mxu0 0.0
    %1221 = vmatpush2.msra.mxu0 0.0
    %1222 = vmatprep.subr.mxu0 0.0
    %1223 = vmatpush2.msra.mxu0 0.0
    %1224 = vmatprep.subr.mxu0 0.0
    %1225 = vmatpush2.msra.mxu0 0.0
    %1226 = vmatprep.subr.mxu0 0.0
    %1227 = vmatpush2.msra.mxu0 0.0
    %1228 = vmatprep.subr.mxu0 0.0
    %1229 = vmatpush2.msra.mxu0 0.0
    %1230 = vmatprep.subr.mxu0 0.0
    %1231 = vmatpush2.msra.mxu0 0.0
    %1232 = vmatprep.subr.mxu0 0.0
    %1233 = vmatpush2.msra.mxu0 0.0
    %1234 = vmatprep.subr.mxu0 0.0
    %1235 = vmatpush2.msra.mxu0 0.0
    %1236 = vmatprep.subr.mxu0 0.0
    %1237 = vmatpush2.msra.mxu0 0.0
    %1238 = vmatprep.subr.mxu0 0.0
    %1239 = vmatpush2.msra.mxu0 0.0
    %1240 = vmatprep.subr.mxu0 0.0
    %1241 = vmatpush2.msra.mxu0 0.0
    %1242 = vmatprep.subr.mxu0 0.0
    %1243 = vmatpush2.msra.mxu0 0.0
    %1244 = vmatprep.mubr.f32.mxu0 0.0
    %1245 = vmatmul.mubr.f32.gmra.mxu0 %v1172
    %v1246 = vpop.f32.mrf.mxu0
    %v1247 = vadd.f32 0.0, %v1246
    %v1248 = vpop.f32.mrf.mxu0
    %v1249 = vadd.f32 0.0, %v1248
    %1250 = vdwg.mxu0
    %1251 = vmatprep.subr.mxu0 %v466
    %1252 = vmatpush1.msra.mxu0 %v465
    %1253 = vmatprep.subr.mxu0 %v462
    %1254 = vmatpush1.msra.mxu0 %v461
    %1255 = vmatprep.subr.mxu0 %v458
    %1256 = vmatpush1.msra.mxu0 %v457
    %1257 = vmatprep.subr.mxu0 %v454
    %1258 = vmatpush1.msra.mxu0 %v453
    %1259 = vmatprep.subr.mxu0 %v450
    %1260 = vmatpush1.msra.mxu0 %v449
    %1261 = vmatprep.subr.mxu0 %v446
    %1262 = vmatpush1.msra.mxu0 %v445
    %1263 = vmatprep.subr.mxu0 %v442
    %1264 = vmatpush1.msra.mxu0 %v441
    %1265 = vmatprep.subr.mxu0 %v438
    %1266 = vmatpush1.msra.mxu0 %v437
    %1267 = vmatprep.subr.mxu0 %v434
    %1268 = vmatpush1.msra.mxu0 %v433
    %1269 = vmatprep.subr.mxu0 %v430
    %1270 = vmatpush1.msra.mxu0 %v429
    %1271 = vmatprep.subr.mxu0 %v426
    %1272 = vmatpush1.msra.mxu0 %v425
    %1273 = vmatprep.subr.mxu0 %v422
    %1274 = vmatpush1.msra.mxu0 %v421
    %1275 = vmatprep.subr.mxu0 %v418
    %1276 = vmatpush1.msra.mxu0 %v417
    %1277 = vmatprep.subr.mxu0 %v414
    %1278 = vmatpush1.msra.mxu0 %v413
    %1279 = vmatprep.subr.mxu0 %v410
    %1280 = vmatpush1.msra.mxu0 %v409
    %1281 = vmatprep.subr.mxu0 %v406
    %1282 = vmatpush1.msra.mxu0 %v405
    %1283 = vmatprep.subr.mxu0 0.0
    %1284 = vmatpush2.msra.mxu0 0.0
    %1285 = vmatprep.subr.mxu0 0.0
    %1286 = vmatpush2.msra.mxu0 0.0
    %1287 = vmatprep.subr.mxu0 0.0
    %1288 = vmatpush2.msra.mxu0 0.0
    %1289 = vmatprep.subr.mxu0 0.0
    %1290 = vmatpush2.msra.mxu0 0.0
    %1291 = vmatprep.subr.mxu0 0.0
    %1292 = vmatpush2.msra.mxu0 0.0
    %1293 = vmatprep.subr.mxu0 0.0
    %1294 = vmatpush2.msra.mxu0 0.0
    %1295 = vmatprep.subr.mxu0 0.0
    %1296 = vmatpush2.msra.mxu0 0.0
    %1297 = vmatprep.subr.mxu0 0.0
    %1298 = vmatpush2.msra.mxu0 0.0
    %1299 = vmatprep.subr.mxu0 0.0
    %1300 = vmatpush2.msra.mxu0 0.0
    %1301 = vmatprep.subr.mxu0 0.0
    %1302 = vmatpush2.msra.mxu0 0.0
    %1303 = vmatprep.subr.mxu0 0.0
    %1304 = vmatpush2.msra.mxu0 0.0
    %1305 = vmatprep.subr.mxu0 0.0
    %1306 = vmatpush2.msra.mxu0 0.0
    %1307 = vmatprep.subr.mxu0 0.0
    %1308 = vmatpush2.msra.mxu0 0.0
    %1309 = vmatprep.subr.mxu0 0.0
    %1310 = vmatpush2.msra.mxu0 0.0
    %1311 = vmatprep.subr.mxu0 0.0
    %1312 = vmatpush2.msra.mxu0 0.0
    %1313 = vmatprep.subr.mxu0 0.0
    %1314 = vmatpush2.msra.mxu0 0.0
    %1315 = vmatprep.mubr.f32.mxu0 0.0
    %1316 = vmatmul.mubr.f32.gmra.mxu0 %v1172
    %v1317 = vpop.f32.mrf.mxu0
    %v1318 = vadd.f32 0.0, %v1317
    %v1319 = vpop.f32.mrf.mxu0
    %v1320 = vadd.f32 0.0, %v1319
    %1321 = vdwg.mxu0
    %v1322 = vadd.f32 %v1176, %v1247
    %v1323 = vadd.f32 %v1177, %v1249
    %v1324 = vadd.f32 %v1178, %v1318
    %v1325 = vadd.f32 %v1179, %v1320
    %v1326 = vxor.u32 %v1322, 2147483648
    %v1327 = vmul.f32 %v1326, 1.442695
    %v1328 = vpow.pop %v1327
    %v1329 = vadd.f32 %v1328, 1.0
    %v1330 = vrcp.pop %v1329
    %v1331 = vmul.f32 1.0, %v1330
    %v1332 = vxor.u32 %v1323, 2147483648
    %v1333 = vmul.f32 %v1332, 1.442695
    %v1334 = vpow.pop %v1333
    %v1335 = vadd.f32 %v1334, 1.0
    %v1336 = vrcp.pop %v1335
    %v1337 = vmul.f32 1.0, %v1336
    %v1338 = vtanh.pop %v1324
    %v1339 = vxor.u32 %v1325, 2147483648
    %v1340 = vmul.f32 %v1339, 1.442695
    %v1341 = vpow.pop %v1340
    %v1342 = vadd.f32 %v1341, 1.0
    %v1343 = vrcp.pop %v1342
    %v1344 = vmul.f32 1.0, %v1343
    %v1345 = vmul.f32 %v1337, %v1170
    %v1346 = vmul.f32 %v1331, %v1338
    %v1347 = vadd.f32 %v1345, %v1346
    %v1348 = vtanh.pop %v1347
    %v1349 = vmul.f32 %v1344, %v1348
    %s1350 = scalar_lea.vmem %s4, 32
    %1351 = vst [vmem:[%s1350] sm:$0xff] %v1349
    %s1352 = scalar_lea.vmem [#allocation4], 160
    %v1353 = vld [vmem:[%s1352] sm:$0xff]
    %v1354 = vld [vmem:[%s1352 + $0x8] sm:$0xff]
    %v1355 = vld [vmem:[%s1352 + $0x10] sm:$0xff]
    %v1356 = vld [vmem:[%s1352 + $0x18] sm:$0xff]
    %1357 = vmatprep.subr.mxu0 %v464
    %1358 = vmatpush1.msra.mxu0 %v463
    %1359 = vmatprep.subr.mxu0 %v460
    %1360 = vmatpush1.msra.mxu0 %v459
    %1361 = vmatprep.subr.mxu0 %v456
    %1362 = vmatpush1.msra.mxu0 %v455
    %1363 = vmatprep.subr.mxu0 %v452
    %1364 = vmatpush1.msra.mxu0 %v451
    %1365 = vmatprep.subr.mxu0 %v448
    %1366 = vmatpush1.msra.mxu0 %v447
    %1367 = vmatprep.subr.mxu0 %v444
    %1368 = vmatpush1.msra.mxu0 %v443
    %1369 = vmatprep.subr.mxu0 %v440
    %1370 = vmatpush1.msra.mxu0 %v439
    %1371 = vmatprep.subr.mxu0 %v436
    %1372 = vmatpush1.msra.mxu0 %v435
    %1373 = vmatprep.subr.mxu0 %v432
    %1374 = vmatpush1.msra.mxu0 %v431
    %1375 = vmatprep.subr.mxu0 %v428
    %1376 = vmatpush1.msra.mxu0 %v427
    %1377 = vmatprep.subr.mxu0 %v424
    %1378 = vmatpush1.msra.mxu0 %v423
    %1379 = vmatprep.subr.mxu0 %v420
    %1380 = vmatpush1.msra.mxu0 %v419
    %1381 = vmatprep.subr.mxu0 %v416
    %1382 = vmatpush1.msra.mxu0 %v415
    %1383 = vmatprep.subr.mxu0 %v412
    %1384 = vmatpush1.msra.mxu0 %v411
    %1385 = vmatprep.subr.mxu0 %v408
    %1386 = vmatpush1.msra.mxu0 %v407
    %1387 = vmatprep.subr.mxu0 %v404
    %1388 = vmatpush1.msra.mxu0 %v403
    %1389 = vmatprep.subr.mxu0 0.0
    %1390 = vmatpush2.msra.mxu0 0.0
    %1391 = vmatprep.subr.mxu0 0.0
    %1392 = vmatpush2.msra.mxu0 0.0
    %1393 = vmatprep.subr.mxu0 0.0
    %1394 = vmatpush2.msra.mxu0 0.0
    %1395 = vmatprep.subr.mxu0 0.0
    %1396 = vmatpush2.msra.mxu0 0.0
    %1397 = vmatprep.subr.mxu0 0.0
    %1398 = vmatpush2.msra.mxu0 0.0
    %1399 = vmatprep.subr.mxu0 0.0
    %1400 = vmatpush2.msra.mxu0 0.0
    %1401 = vmatprep.subr.mxu0 0.0
    %1402 = vmatpush2.msra.mxu0 0.0
    %1403 = vmatprep.subr.mxu0 0.0
    %1404 = vmatpush2.msra.mxu0 0.0
    %1405 = vmatprep.subr.mxu0 0.0
    %1406 = vmatpush2.msra.mxu0 0.0
    %1407 = vmatprep.subr.mxu0 0.0
    %1408 = vmatpush2.msra.mxu0 0.0
    %1409 = vmatprep.subr.mxu0 0.0
    %1410 = vmatpush2.msra.mxu0 0.0
    %1411 = vmatprep.subr.mxu0 0.0
    %1412 = vmatpush2.msra.mxu0 0.0
    %1413 = vmatprep.subr.mxu0 0.0
    %1414 = vmatpush2.msra.mxu0 0.0
    %1415 = vmatprep.subr.mxu0 0.0
    %1416 = vmatpush2.msra.mxu0 0.0
    %1417 = vmatprep.subr.mxu0 0.0
    %1418 = vmatpush2.msra.mxu0 0.0
    %1419 = vmatprep.subr.mxu0 0.0
    %1420 = vmatpush2.msra.mxu0 0.0
    %1421 = vmatprep.mubr.f32.mxu0 0.0
    %1422 = vmatmul.mubr.f32.gmra.mxu0 %v1349
    %v1423 = vpop.f32.mrf.mxu0
    %v1424 = vadd.f32 0.0, %v1423
    %v1425 = vpop.f32.mrf.mxu0
    %v1426 = vadd.f32 0.0, %v1425
    %1427 = vdwg.mxu0
    %1428 = vmatprep.subr.mxu0 %v466
    %1429 = vmatpush1.msra.mxu0 %v465
    %1430 = vmatprep.subr.mxu0 %v462
    %1431 = vmatpush1.msra.mxu0 %v461
    %1432 = vmatprep.subr.mxu0 %v458
    %1433 = vmatpush1.msra.mxu0 %v457
    %1434 = vmatprep.subr.mxu0 %v454
    %1435 = vmatpush1.msra.mxu0 %v453
    %1436 = vmatprep.subr.mxu0 %v450
    %1437 = vmatpush1.msra.mxu0 %v449
    %1438 = vmatprep.subr.mxu0 %v446
    %1439 = vmatpush1.msra.mxu0 %v445
    %1440 = vmatprep.subr.mxu0 %v442
    %1441 = vmatpush1.msra.mxu0 %v441
    %1442 = vmatprep.subr.mxu0 %v438
    %1443 = vmatpush1.msra.mxu0 %v437
    %1444 = vmatprep.subr.mxu0 %v434
    %1445 = vmatpush1.msra.mxu0 %v433
    %1446 = vmatprep.subr.mxu0 %v430
    %1447 = vmatpush1.msra.mxu0 %v429
    %1448 = vmatprep.subr.mxu0 %v426
    %1449 = vmatpush1.msra.mxu0 %v425
    %1450 = vmatprep.subr.mxu0 %v422
    %1451 = vmatpush1.msra.mxu0 %v421
    %1452 = vmatprep.subr.mxu0 %v418
    %1453 = vmatpush1.msra.mxu0 %v417
    %1454 = vmatprep.subr.mxu0 %v414
    %1455 = vmatpush1.msra.mxu0 %v413
    %1456 = vmatprep.subr.mxu0 %v410
    %1457 = vmatpush1.msra.mxu0 %v409
    %1458 = vmatprep.subr.mxu0 %v406
    %1459 = vmatpush1.msra.mxu0 %v405
    %1460 = vmatprep.subr.mxu0 0.0
    %1461 = vmatpush2.msra.mxu0 0.0
    %1462 = vmatprep.subr.mxu0 0.0
    %1463 = vmatpush2.msra.mxu0 0.0
    %1464 = vmatprep.subr.mxu0 0.0
    %1465 = vmatpush2.msra.mxu0 0.0
    %1466 = vmatprep.subr.mxu0 0.0
    %1467 = vmatpush2.msra.mxu0 0.0
    %1468 = vmatprep.subr.mxu0 0.0
    %1469 = vmatpush2.msra.mxu0 0.0
    %1470 = vmatprep.subr.mxu0 0.0
    %1471 = vmatpush2.msra.mxu0 0.0
    %1472 = vmatprep.subr.mxu0 0.0
    %1473 = vmatpush2.msra.mxu0 0.0
    %1474 = vmatprep.subr.mxu0 0.0
    %1475 = vmatpush2.msra.mxu0 0.0
    %1476 = vmatprep.subr.mxu0 0.0
    %1477 = vmatpush2.msra.mxu0 0.0
    %1478 = vmatprep.subr.mxu0 0.0
    %1479 = vmatpush2.msra.mxu0 0.0
    %1480 = vmatprep.subr.mxu0 0.0
    %1481 = vmatpush2.msra.mxu0 0.0
    %1482 = vmatprep.subr.mxu0 0.0
    %1483 = vmatpush2.msra.mxu0 0.0
    %1484 = vmatprep.subr.mxu0 0.0
    %1485 = vmatpush2.msra.mxu0 0.0
    %1486 = vmatprep.subr.mxu0 0.0
    %1487 = vmatpush2.msra.mxu0 0.0
    %1488 = vmatprep.subr.mxu0 0.0
    %1489 = vmatpush2.msra.mxu0 0.0
    %1490 = vmatprep.subr.mxu0 0.0
    %1491 = vmatpush2.msra.mxu0 0.0
    %1492 = vmatprep.mubr.f32.mxu0 0.0
    %1493 = vmatmul.mubr.f32.gmra.mxu0 %v1349
    %v1494 = vpop.f32.mrf.mxu0
    %v1495 = vadd.f32 0.0, %v1494
    %v1496 = vpop.f32.mrf.mxu0
    %v1497 = vadd.f32 0.0, %v1496
    %1498 = vdwg.mxu0
    %v1499 = vadd.f32 %v1353, %v1424
    %v1500 = vadd.f32 %v1354, %v1426
    %v1501 = vadd.f32 %v1355, %v1495
    %v1502 = vadd.f32 %v1356, %v1497
    %v1503 = vxor.u32 %v1499, 2147483648
    %v1504 = vmul.f32 %v1503, 1.442695
    %v1505 = vpow.pop %v1504
    %v1506 = vadd.f32 %v1505, 1.0
    %v1507 = vrcp.pop %v1506
    %v1508 = vmul.f32 1.0, %v1507
    %v1509 = vxor.u32 %v1500, 2147483648
    %v1510 = vmul.f32 %v1509, 1.442695
    %v1511 = vpow.pop %v1510
    %v1512 = vadd.f32 %v1511, 1.0
    %v1513 = vrcp.pop %v1512
    %v1514 = vmul.f32 1.0, %v1513
    %v1515 = vtanh.pop %v1501
    %v1516 = vxor.u32 %v1502, 2147483648
    %v1517 = vmul.f32 %v1516, 1.442695
    %v1518 = vpow.pop %v1517
    %v1519 = vadd.f32 %v1518, 1.0
    %v1520 = vrcp.pop %v1519
    %v1521 = vmul.f32 1.0, %v1520
    %v1522 = vmul.f32 %v1514, %v1347
    %v1523 = vmul.f32 %v1508, %v1515
    %v1524 = vadd.f32 %v1522, %v1523
    %v1525 = vtanh.pop %v1524
    %v1526 = vmul.f32 %v1521, %v1525
    %s1527 = scalar_lea.vmem %s4, 40
    %1528 = vst [vmem:[%s1527] sm:$0xff] %v1526
    %s1529 = scalar_lea.vmem [#allocation4], 192
    %v1530 = vld [vmem:[%s1529] sm:$0xff]
    %v1531 = vld [vmem:[%s1529 + $0x8] sm:$0xff]
    %v1532 = vld [vmem:[%s1529 + $0x10] sm:$0xff]
    %v1533 = vld [vmem:[%s1529 + $0x18] sm:$0xff]
    %1534 = vmatprep.subr.mxu0 %v464
    %1535 = vmatpush1.msra.mxu0 %v463
    %1536 = vmatprep.subr.mxu0 %v460
    %1537 = vmatpush1.msra.mxu0 %v459
    %1538 = vmatprep.subr.mxu0 %v456
    %1539 = vmatpush1.msra.mxu0 %v455
    %1540 = vmatprep.subr.mxu0 %v452
    %1541 = vmatpush1.msra.mxu0 %v451
    %1542 = vmatprep.subr.mxu0 %v448
    %1543 = vmatpush1.msra.mxu0 %v447
    %1544 = vmatprep.subr.mxu0 %v444
    %1545 = vmatpush1.msra.mxu0 %v443
    %1546 = vmatprep.subr.mxu0 %v440
    %1547 = vmatpush1.msra.mxu0 %v439
    %1548 = vmatprep.subr.mxu0 %v436
    %1549 = vmatpush1.msra.mxu0 %v435
    %1550 = vmatprep.subr.mxu0 %v432
    %1551 = vmatpush1.msra.mxu0 %v431
    %1552 = vmatprep.subr.mxu0 %v428
    %1553 = vmatpush1.msra.mxu0 %v427
    %1554 = vmatprep.subr.mxu0 %v424
    %1555 = vmatpush1.msra.mxu0 %v423
    %1556 = vmatprep.subr.mxu0 %v420
    %1557 = vmatpush1.msra.mxu0 %v419
    %1558 = vmatprep.subr.mxu0 %v416
    %1559 = vmatpush1.msra.mxu0 %v415
    %1560 = vmatprep.subr.mxu0 %v412
    %1561 = vmatpush1.msra.mxu0 %v411
    %1562 = vmatprep.subr.mxu0 %v408
    %1563 = vmatpush1.msra.mxu0 %v407
    %1564 = vmatprep.subr.mxu0 %v404
    %1565 = vmatpush1.msra.mxu0 %v403
    %1566 = vmatprep.subr.mxu0 0.0
    %1567 = vmatpush2.msra.mxu0 0.0
    %1568 = vmatprep.subr.mxu0 0.0
    %1569 = vmatpush2.msra.mxu0 0.0
    %1570 = vmatprep.subr.mxu0 0.0
    %1571 = vmatpush2.msra.mxu0 0.0
    %1572 = vmatprep.subr.mxu0 0.0
    %1573 = vmatpush2.msra.mxu0 0.0
    %1574 = vmatprep.subr.mxu0 0.0
    %1575 = vmatpush2.msra.mxu0 0.0
    %1576 = vmatprep.subr.mxu0 0.0
    %1577 = vmatpush2.msra.mxu0 0.0
    %1578 = vmatprep.subr.mxu0 0.0
    %1579 = vmatpush2.msra.mxu0 0.0
    %1580 = vmatprep.subr.mxu0 0.0
    %1581 = vmatpush2.msra.mxu0 0.0
    %1582 = vmatprep.subr.mxu0 0.0
    %1583 = vmatpush2.msra.mxu0 0.0
    %1584 = vmatprep.subr.mxu0 0.0
    %1585 = vmatpush2.msra.mxu0 0.0
    %1586 = vmatprep.subr.mxu0 0.0
    %1587 = vmatpush2.msra.mxu0 0.0
    %1588 = vmatprep.subr.mxu0 0.0
    %1589 = vmatpush2.msra.mxu0 0.0
    %1590 = vmatprep.subr.mxu0 0.0
    %1591 = vmatpush2.msra.mxu0 0.0
    %1592 = vmatprep.subr.mxu0 0.0
    %1593 = vmatpush2.msra.mxu0 0.0
    %1594 = vmatprep.subr.mxu0 0.0
    %1595 = vmatpush2.msra.mxu0 0.0
    %1596 = vmatprep.subr.mxu0 0.0
    %1597 = vmatpush2.msra.mxu0 0.0
    %1598 = vmatprep.mubr.f32.mxu0 0.0
    %1599 = vmatmul.mubr.f32.gmra.mxu0 %v1526
    %v1600 = vpop.f32.mrf.mxu0
    %v1601 = vadd.f32 0.0, %v1600
    %v1602 = vpop.f32.mrf.mxu0
    %v1603 = vadd.f32 0.0, %v1602
    %1604 = vdwg.mxu0
    %1605 = vmatprep.subr.mxu0 %v466
    %1606 = vmatpush1.msra.mxu0 %v465
    %1607 = vmatprep.subr.mxu0 %v462
    %1608 = vmatpush1.msra.mxu0 %v461
    %1609 = vmatprep.subr.mxu0 %v458
    %1610 = vmatpush1.msra.mxu0 %v457
    %1611 = vmatprep.subr.mxu0 %v454
    %1612 = vmatpush1.msra.mxu0 %v453
    %1613 = vmatprep.subr.mxu0 %v450
    %1614 = vmatpush1.msra.mxu0 %v449
    %1615 = vmatprep.subr.mxu0 %v446
    %1616 = vmatpush1.msra.mxu0 %v445
    %1617 = vmatprep.subr.mxu0 %v442
    %1618 = vmatpush1.msra.mxu0 %v441
    %1619 = vmatprep.subr.mxu0 %v438
    %1620 = vmatpush1.msra.mxu0 %v437
    %1621 = vmatprep.subr.mxu0 %v434
    %1622 = vmatpush1.msra.mxu0 %v433
    %1623 = vmatprep.subr.mxu0 %v430
    %1624 = vmatpush1.msra.mxu0 %v429
    %1625 = vmatprep.subr.mxu0 %v426
    %1626 = vmatpush1.msra.mxu0 %v425
    %1627 = vmatprep.subr.mxu0 %v422
    %1628 = vmatpush1.msra.mxu0 %v421
    %1629 = vmatprep.subr.mxu0 %v418
    %1630 = vmatpush1.msra.mxu0 %v417
    %1631 = vmatprep.subr.mxu0 %v414
    %1632 = vmatpush1.msra.mxu0 %v413
    %1633 = vmatprep.subr.mxu0 %v410
    %1634 = vmatpush1.msra.mxu0 %v409
    %1635 = vmatprep.subr.mxu0 %v406
    %1636 = vmatpush1.msra.mxu0 %v405
    %1637 = vmatprep.subr.mxu0 0.0
    %1638 = vmatpush2.msra.mxu0 0.0
    %1639 = vmatprep.subr.mxu0 0.0
    %1640 = vmatpush2.msra.mxu0 0.0
    %1641 = vmatprep.subr.mxu0 0.0
    %1642 = vmatpush2.msra.mxu0 0.0
    %1643 = vmatprep.subr.mxu0 0.0
    %1644 = vmatpush2.msra.mxu0 0.0
    %1645 = vmatprep.subr.mxu0 0.0
    %1646 = vmatpush2.msra.mxu0 0.0
    %1647 = vmatprep.subr.mxu0 0.0
    %1648 = vmatpush2.msra.mxu0 0.0
    %1649 = vmatprep.subr.mxu0 0.0
    %1650 = vmatpush2.msra.mxu0 0.0
    %1651 = vmatprep.subr.mxu0 0.0
    %1652 = vmatpush2.msra.mxu0 0.0
    %1653 = vmatprep.subr.mxu0 0.0
    %1654 = vmatpush2.msra.mxu0 0.0
    %1655 = vmatprep.subr.mxu0 0.0
    %1656 = vmatpush2.msra.mxu0 0.0
    %1657 = vmatprep.subr.mxu0 0.0
    %1658 = vmatpush2.msra.mxu0 0.0
    %1659 = vmatprep.subr.mxu0 0.0
    %1660 = vmatpush2.msra.mxu0 0.0
    %1661 = vmatprep.subr.mxu0 0.0
    %1662 = vmatpush2.msra.mxu0 0.0
    %1663 = vmatprep.subr.mxu0 0.0
    %1664 = vmatpush2.msra.mxu0 0.0
    %1665 = vmatprep.subr.mxu0 0.0
    %1666 = vmatpush2.msra.mxu0 0.0
    %1667 = vmatprep.subr.mxu0 0.0
    %1668 = vmatpush2.msra.mxu0 0.0
    %1669 = vmatprep.mubr.f32.mxu0 0.0
    %1670 = vmatmul.mubr.f32.gmra.mxu0 %v1526
    %v1671 = vpop.f32.mrf.mxu0
    %v1672 = vadd.f32 0.0, %v1671
    %v1673 = vpop.f32.mrf.mxu0
    %v1674 = vadd.f32 0.0, %v1673
    %1675 = vdwg.mxu0
    %v1676 = vadd.f32 %v1530, %v1601
    %v1677 = vadd.f32 %v1531, %v1603
    %v1678 = vadd.f32 %v1532, %v1672
    %v1679 = vadd.f32 %v1533, %v1674
    %v1680 = vxor.u32 %v1676, 2147483648
    %v1681 = vmul.f32 %v1680, 1.442695
    %v1682 = vpow.pop %v1681
    %v1683 = vadd.f32 %v1682, 1.0
    %v1684 = vrcp.pop %v1683
    %v1685 = vmul.f32 1.0, %v1684
    %v1686 = vxor.u32 %v1677, 2147483648
    %v1687 = vmul.f32 %v1686, 1.442695
    %v1688 = vpow.pop %v1687
    %v1689 = vadd.f32 %v1688, 1.0
    %v1690 = vrcp.pop %v1689
    %v1691 = vmul.f32 1.0, %v1690
    %v1692 = vtanh.pop %v1678
    %v1693 = vxor.u32 %v1679, 2147483648
    %v1694 = vmul.f32 %v1693, 1.442695
    %v1695 = vpow.pop %v1694
    %v1696 = vadd.f32 %v1695, 1.0
    %v1697 = vrcp.pop %v1696
    %v1698 = vmul.f32 1.0, %v1697
    %v1699 = vmul.f32 %v1691, %v1524
    %v1700 = vmul.f32 %v1685, %v1692
    %v1701 = vadd.f32 %v1699, %v1700
    %v1702 = vtanh.pop %v1701
    %v1703 = vmul.f32 %v1698, %v1702
    %s1704 = scalar_lea.vmem %s4, 48
    %1705 = vst [vmem:[%s1704] sm:$0xff] %v1703
    %s1706 = scalar_lea.vmem [#allocation4], 224
    %v1707 = vld [vmem:[%s1706] sm:$0xff]
    %v1708 = vld [vmem:[%s1706 + $0x8] sm:$0xff]
    %v1709 = vld [vmem:[%s1706 + $0x10] sm:$0xff]
    %v1710 = vld [vmem:[%s1706 + $0x18] sm:$0xff]
    %1711 = vmatprep.subr.mxu0 %v464
    %1712 = vmatpush1.msra.mxu0 %v463
    %1713 = vmatprep.subr.mxu0 %v460
    %1714 = vmatpush1.msra.mxu0 %v459
    %1715 = vmatprep.subr.mxu0 %v456
    %1716 = vmatpush1.msra.mxu0 %v455
    %1717 = vmatprep.subr.mxu0 %v452
    %1718 = vmatpush1.msra.mxu0 %v451
    %1719 = vmatprep.subr.mxu0 %v448
    %1720 = vmatpush1.msra.mxu0 %v447
    %1721 = vmatprep.subr.mxu0 %v444
    %1722 = vmatpush1.msra.mxu0 %v443
    %1723 = vmatprep.subr.mxu0 %v440
    %1724 = vmatpush1.msra.mxu0 %v439
    %1725 = vmatprep.subr.mxu0 %v436
    %1726 = vmatpush1.msra.mxu0 %v435
    %1727 = vmatprep.subr.mxu0 %v432
    %1728 = vmatpush1.msra.mxu0 %v431
    %1729 = vmatprep.subr.mxu0 %v428
    %1730 = vmatpush1.msra.mxu0 %v427
    %1731 = vmatprep.subr.mxu0 %v424
    %1732 = vmatpush1.msra.mxu0 %v423
    %1733 = vmatprep.subr.mxu0 %v420
    %1734 = vmatpush1.msra.mxu0 %v419
    %1735 = vmatprep.subr.mxu0 %v416
    %1736 = vmatpush1.msra.mxu0 %v415
    %1737 = vmatprep.subr.mxu0 %v412
    %1738 = vmatpush1.msra.mxu0 %v411
    %1739 = vmatprep.subr.mxu0 %v408
    %1740 = vmatpush1.msra.mxu0 %v407
    %1741 = vmatprep.subr.mxu0 %v404
    %1742 = vmatpush1.msra.mxu0 %v403
    %1743 = vmatprep.subr.mxu0 0.0
    %1744 = vmatpush2.msra.mxu0 0.0
    %1745 = vmatprep.subr.mxu0 0.0
    %1746 = vmatpush2.msra.mxu0 0.0
    %1747 = vmatprep.subr.mxu0 0.0
    %1748 = vmatpush2.msra.mxu0 0.0
    %1749 = vmatprep.subr.mxu0 0.0
    %1750 = vmatpush2.msra.mxu0 0.0
    %1751 = vmatprep.subr.mxu0 0.0
    %1752 = vmatpush2.msra.mxu0 0.0
    %1753 = vmatprep.subr.mxu0 0.0
    %1754 = vmatpush2.msra.mxu0 0.0
    %1755 = vmatprep.subr.mxu0 0.0
    %1756 = vmatpush2.msra.mxu0 0.0
    %1757 = vmatprep.subr.mxu0 0.0
    %1758 = vmatpush2.msra.mxu0 0.0
    %1759 = vmatprep.subr.mxu0 0.0
    %1760 = vmatpush2.msra.mxu0 0.0
    %1761 = vmatprep.subr.mxu0 0.0
    %1762 = vmatpush2.msra.mxu0 0.0
    %1763 = vmatprep.subr.mxu0 0.0
    %1764 = vmatpush2.msra.mxu0 0.0
    %1765 = vmatprep.subr.mxu0 0.0
    %1766 = vmatpush2.msra.mxu0 0.0
    %1767 = vmatprep.subr.mxu0 0.0
    %1768 = vmatpush2.msra.mxu0 0.0
    %1769 = vmatprep.subr.mxu0 0.0
    %1770 = vmatpush2.msra.mxu0 0.0
    %1771 = vmatprep.subr.mxu0 0.0
    %1772 = vmatpush2.msra.mxu0 0.0
    %1773 = vmatprep.subr.mxu0 0.0
    %1774 = vmatpush2.msra.mxu0 0.0
    %1775 = vmatprep.mubr.f32.mxu0 0.0
    %1776 = vmatmul.mubr.f32.gmra.mxu0 %v1703
    %v1777 = vpop.f32.mrf.mxu0
    %v1778 = vadd.f32 0.0, %v1777
    %v1779 = vpop.f32.mrf.mxu0
    %v1780 = vadd.f32 0.0, %v1779
    %1781 = vdwg.mxu0
    %1782 = vmatprep.subr.mxu0 %v466
    %1783 = vmatpush1.msra.mxu0 %v465
    %1784 = vmatprep.subr.mxu0 %v462
    %1785 = vmatpush1.msra.mxu0 %v461
    %1786 = vmatprep.subr.mxu0 %v458
    %1787 = vmatpush1.msra.mxu0 %v457
    %1788 = vmatprep.subr.mxu0 %v454
    %1789 = vmatpush1.msra.mxu0 %v453
    %1790 = vmatprep.subr.mxu0 %v450
    %1791 = vmatpush1.msra.mxu0 %v449
    %1792 = vmatprep.subr.mxu0 %v446
    %1793 = vmatpush1.msra.mxu0 %v445
    %1794 = vmatprep.subr.mxu0 %v442
    %1795 = vmatpush1.msra.mxu0 %v441
    %1796 = vmatprep.subr.mxu0 %v438
    %1797 = vmatpush1.msra.mxu0 %v437
    %1798 = vmatprep.subr.mxu0 %v434
    %1799 = vmatpush1.msra.mxu0 %v433
    %1800 = vmatprep.subr.mxu0 %v430
    %1801 = vmatpush1.msra.mxu0 %v429
    %1802 = vmatprep.subr.mxu0 %v426
    %1803 = vmatpush1.msra.mxu0 %v425
    %1804 = vmatprep.subr.mxu0 %v422
    %1805 = vmatpush1.msra.mxu0 %v421
    %1806 = vmatprep.subr.mxu0 %v418
    %1807 = vmatpush1.msra.mxu0 %v417
    %1808 = vmatprep.subr.mxu0 %v414
    %1809 = vmatpush1.msra.mxu0 %v413
    %1810 = vmatprep.subr.mxu0 %v410
    %1811 = vmatpush1.msra.mxu0 %v409
    %1812 = vmatprep.subr.mxu0 %v406
    %1813 = vmatpush1.msra.mxu0 %v405
    %1814 = vmatprep.subr.mxu0 0.0
    %1815 = vmatpush2.msra.mxu0 0.0
    %1816 = vmatprep.subr.mxu0 0.0
    %1817 = vmatpush2.msra.mxu0 0.0
    %1818 = vmatprep.subr.mxu0 0.0
    %1819 = vmatpush2.msra.mxu0 0.0
    %1820 = vmatprep.subr.mxu0 0.0
    %1821 = vmatpush2.msra.mxu0 0.0
    %1822 = vmatprep.subr.mxu0 0.0
    %1823 = vmatpush2.msra.mxu0 0.0
    %1824 = vmatprep.subr.mxu0 0.0
    %1825 = vmatpush2.msra.mxu0 0.0
    %1826 = vmatprep.subr.mxu0 0.0
    %1827 = vmatpush2.msra.mxu0 0.0
    %1828 = vmatprep.subr.mxu0 0.0
    %1829 = vmatpush2.msra.mxu0 0.0
    %1830 = vmatprep.subr.mxu0 0.0
    %1831 = vmatpush2.msra.mxu0 0.0
    %1832 = vmatprep.subr.mxu0 0.0
    %1833 = vmatpush2.msra.mxu0 0.0
    %1834 = vmatprep.subr.mxu0 0.0
    %1835 = vmatpush2.msra.mxu0 0.0
    %1836 = vmatprep.subr.mxu0 0.0
    %1837 = vmatpush2.msra.mxu0 0.0
    %1838 = vmatprep.subr.mxu0 0.0
    %1839 = vmatpush2.msra.mxu0 0.0
    %1840 = vmatprep.subr.mxu0 0.0
    %1841 = vmatpush2.msra.mxu0 0.0
    %1842 = vmatprep.subr.mxu0 0.0
    %1843 = vmatpush2.msra.mxu0 0.0
    %1844 = vmatprep.subr.mxu0 0.0
    %1845 = vmatpush2.msra.mxu0 0.0
    %1846 = vmatprep.mubr.f32.mxu0 0.0
    %1847 = vmatmul.mubr.f32.gmra.mxu0 %v1703
    %v1848 = vpop.f32.mrf.mxu0
    %v1849 = vadd.f32 0.0, %v1848
    %v1850 = vpop.f32.mrf.mxu0
    %v1851 = vadd.f32 0.0, %v1850
    %1852 = vdwg.mxu0
    %v1853 = vadd.f32 %v1707, %v1778
    %v1854 = vadd.f32 %v1708, %v1780
    %v1855 = vadd.f32 %v1709, %v1849
    %v1856 = vadd.f32 %v1710, %v1851
    %v1857 = vxor.u32 %v1853, 2147483648
    %v1858 = vmul.f32 %v1857, 1.442695
    %v1859 = vpow.pop %v1858
    %v1860 = vadd.f32 %v1859, 1.0
    %v1861 = vrcp.pop %v1860
    %v1862 = vmul.f32 1.0, %v1861
    %v1863 = vxor.u32 %v1854, 2147483648
    %v1864 = vmul.f32 %v1863, 1.442695
    %v1865 = vpow.pop %v1864
    %v1866 = vadd.f32 %v1865, 1.0
    %v1867 = vrcp.pop %v1866
    %v1868 = vmul.f32 1.0, %v1867
    %v1869 = vtanh.pop %v1855
    %v1870 = vxor.u32 %v1856, 2147483648
    %v1871 = vmul.f32 %v1870, 1.442695
    %v1872 = vpow.pop %v1871
    %v1873 = vadd.f32 %v1872, 1.0
    %v1874 = vrcp.pop %v1873
    %v1875 = vmul.f32 1.0, %v1874
    %v1876 = vmul.f32 %v1868, %v1701
    %v1877 = vmul.f32 %v1862, %v1869
    %v1878 = vadd.f32 %v1876, %v1877
    %v1879 = vtanh.pop %v1878
    %v1880 = vmul.f32 %v1875, %v1879
    %s1881 = scalar_lea.vmem %s4, 56
    %1882 = vst [vmem:[%s1881] sm:$0xff] %v1880
    %1883 = vst [vmem:[#allocation2] sm:$0xff] %v1880
    %1884 = vst [vmem:[#allocation3] sm:$0xff] %v1878
    // Predicated region
    $region30: #{baseline_lstm_forward.2} parent=1 // pred_check
      _
    $region31: #{baseline_lstm_forward.2} parent=1 // pred_check_branch
      %1886 = sbr.rel (0) target = $region33
    $region32: #{baseline_lstm_forward.2} parent=1 // pred_region
      _
    $region33: #{baseline_lstm_forward.2} parent=1 // pred_fallthru
      _
    // Predicated region
    $region34: #{baseline_lstm_forward.2} parent=1 // pred_check
      _
    $region35: #{baseline_lstm_forward.2} parent=1 // pred_check_branch
      %1888 = sbr.rel (0) target = $region37
    $region36: #{baseline_lstm_forward.2} parent=1 // pred_region
      _
    $region37: #{baseline_lstm_forward.2} parent=1 // pred_fallthru
      _
    %1889 = vsyncpa [#allocation6], 1
    %1890 = vsyncpa [#allocation8], 1

</llo_original>
